<compile_context>
chip_gen: v7x
topology: tpu7x:2x2x1
jax: 0.10.0
libtpu: 0.0.40
codegen_flags: <defaults>
</compile_context>

<pallas_src>
import numpy as np
import jax
import jax.numpy as jnp
from jax.experimental import pallas as pl
from jax.experimental.pallas import tpu as pltpu

_VMEM = pl.BlockSpec(memory_space=pltpu.MemorySpace.VMEM)
_BN_EPS = 1e-5


# ----------------------------------------------------------------------------
# Kernel builder: the kernel is a closure over static per-layer metadata
#   layer_meta: tuple of (S, C, has_bias, has_pool) per conv layer
# ----------------------------------------------------------------------------
def _build_fused_kernel(layer_meta):
    def kernel(*refs):
        idx = 0
        x_ref = refs[idx]; idx += 1
        x = x_ref[...]                                 # (N, H*W*Cin) f32, lane-dense
        n = x.shape[0]

        last_p_ref, last_s = None, 1
        for (s, c, has_bias, has_pool) in layer_meta:
            m_ref = refs[idx]; idx += 1
            b_ref = None
            if has_bias:
                b_ref = refs[idx]; idx += 1
            g_ref = refs[idx]; idx += 1
            bt_ref = refs[idx]; idx += 1
            p_ref = pt_ref = None
            if has_pool:
                p_ref = refs[idx]; idx += 1
                pt_ref = refs[idx]; idx += 1

            # Conv as one dense bf16 matmul (f32 accumulate); output stays
            # flattened channel-fastest: (N, S*C).
            y = jnp.dot(x.astype(jnp.bfloat16), m_ref[...],
                        preferred_element_type=jnp.float32)
            if has_bias:
                y = y + b_ref[...]                     # only conv2 has a live bias
            y = jnp.maximum(y, 0.0)                    # ReLU precedes BN in the module

            # Training-mode BatchNorm2d (batch statistics, biased variance).
            inv_cnt = 1.0 / float(n * s)
            row_sum = jnp.sum(y, axis=0, keepdims=True)        # (1, S*C)
            row_sumsq = jnp.sum(y * y, axis=0, keepdims=True)  # (1, S*C)
            if has_pool:
                # Fused stats dot: one (2, S*C) @ (S*C, C) instead of two.
                stats = jnp.dot(
                    jnp.concatenate([row_sum, row_sumsq], axis=0),
                    p_ref[...].astype(jnp.float32),
                    preferred_element_type=jnp.float32)        # (2, C)
                mean = stats[0:1, :] * inv_cnt
                ex2 = stats[1:2, :] * inv_cnt
            else:
                # S == 1: flat layout already per-channel; pool is identity (elided).
                mean = row_sum * inv_cnt
                ex2 = row_sumsq * inv_cnt
            var = jnp.maximum(ex2 - mean * mean, 0.0)          # biased variance
            scale = g_ref[...] * jax.lax.rsqrt(var + _BN_EPS)  # (1, C)   (EUP slot)
            shift = bt_ref[...] - mean * scale                 # (1, C)
            if has_pool:
                # Fused broadcast dot: one (2, C) @ (C, S*C) instead of two.
                ssf = jnp.dot(jnp.concatenate([scale, shift], axis=0),
                              pt_ref[...].astype(jnp.float32),
                              preferred_element_type=jnp.float32)  # (2, S*C)
                x = y * ssf[0:1, :] + ssf[1:2, :]
            else:
                x = y * scale + shift                          # (N, 64) directly
            last_p_ref, last_s = p_ref, s

        lw_ref = refs[idx]; idx += 1
        lb_ref = refs[idx]; idx += 1
        o_ref = refs[idx]

        # AdaptiveAvgPool2d(1) + Flatten: identity when the final spatial is 1x1
        # (the 16x16-input case) — the dead identity matmul is elided.
        if last_s > 1:
            x = jnp.dot(x, last_p_ref[...].astype(jnp.float32),
                        preferred_element_type=jnp.float32) * (1.0 / float(last_s))
        logits = jnp.dot(x, lw_ref[...],
                         preferred_element_type=jnp.float32) + lb_ref[...]
        o_ref[...] = logits.astype(o_ref.dtype)

    return kernel


# ----------------------------------------------------------------------------
# Host-side (init-time only) weight preprocessing — no per-forward glue
# ----------------------------------------------------------------------------
def _conv_unroll_matrix(w, H, W, stride, pad, channel_major_input):
    """Dense matrix M such that  y_flat = x_flat @ M  equals Conv2d(..., bias=False).

    w: (Cout, Cin, KH, KW)  (PyTorch layout)
    Input flat order : (c, h, w) if channel_major_input (matches NCHW .reshape),
                       (h, w, c) otherwise (matches the previous layer's output).
    Output flat order: (h, w, c) channel-fastest.
    """
    Cout, Cin, KH, KW = w.shape
    Ho = (H + 2 * pad - KH) // stride + 1
    Wo = (W + 2 * pad - KW) // stride + 1
    M = np.zeros((H * W * Cin, Ho * Wo * Cout), np.float32)
    ci = np.arange(Cin)
    for ho in range(Ho):
        for wo in range(Wo):
            col0 = (ho * Wo + wo) * Cout
            for i in range(KH):
                hi = ho * stride - pad + i
                if hi < 0 or hi >= H:
                    continue
                for j in range(KW):
                    wi = wo * stride - pad + j
                    if wi < 0 or wi >= W:
                        continue
                    if channel_major_input:
                        rows = ci * (H * W) + hi * W + wi
                    else:
                        rows = (hi * W + wi) * Cin + ci
                    M[rows, col0:col0 + Cout] = w[:, :, i, j].T
    return M, Ho, Wo


def _channel_pool_matrix(S, C):
    """0/1 matrix (S*C, C): sums over flat (h,w,c)-index -> per-channel sums."""
    P = np.zeros((S * C, C), np.float32)
    cc = np.arange(C)
    for s in range(S):
        P[s * C + cc, cc] = 1.0
    return P


# ----------------------------------------------------------------------------
# Parameter initialization (mirrors the module's __init__)
# ----------------------------------------------------------------------------
def init_params(key, n_channel, height=16, width=16):
    cfg = [  # (cin, cout, k, stride, pad, bias_zeroed)
        (n_channel, 8, 5, 2, 2, True),
        (8, 16, 3, 2, 1, False),   # conv2.bias NOT zeroed (the module zeroes conv1 twice)
        (16, 32, 3, 2, 1, True),
        (32, 64, 3, 2, 1, True),
    ]
    keys = jax.random.split(key, 2 * len(cfg) + 2)
    convs = []
    h, w = height, width
    for li, (cin, cout, k, s, p, zero_bias) in enumerate(cfg):
        wkey, bkey = keys[2 * li], keys[2 * li + 1]
        fan_in = cin * k * k
        std = (2.0 / (1.0 + 0.1 ** 2)) ** 0.5 / fan_in ** 0.5   # kaiming_normal_(a=0.1)
        w4 = std * jax.random.normal(wkey, (cout, cin, k, k), dtype=jnp.float32)
        M, ho, wo = _conv_unroll_matrix(np.asarray(w4), h, w, s, p,
                                        channel_major_input=(li == 0))
        S = ho * wo
        layer = dict(
            m=jnp.asarray(M, jnp.bfloat16),                     # bf16 for the MXU
            gamma=jnp.ones((1, cout), jnp.float32),             # BN affine defaults
            beta=jnp.zeros((1, cout), jnp.float32),
        )
        if not zero_bias:                                       # ship only live biases
            bound = 1.0 / fan_in ** 0.5
            b = np.asarray(jax.random.uniform(bkey, (cout,), jnp.float32, -bound, bound))
            layer["bias_flat"] = jnp.asarray(np.tile(b, S)[None, :], jnp.float32)
        if S > 1:                                               # identity pools elided
            P = _channel_pool_matrix(S, cout)
            layer["pool"] = jnp.asarray(P, jnp.bfloat16)        # 0/1 -> exact in bf16
            layer["pool_t"] = jnp.asarray(np.ascontiguousarray(P.T), jnp.bfloat16)
        convs.append(layer)
        h, w = ho, wo
    lbound = 1.0 / 64 ** 0.5
    lw = jax.random.uniform(keys[-2], (64, 5), jnp.float32, -lbound, lbound)
    lb = jax.random.uniform(keys[-1], (1, 5), jnp.float32, -lbound, lbound)
    return dict(convs=convs, lw=lw, lb=lb)


# ----------------------------------------------------------------------------
# Forward pass: one reshape + ONE pallas_call
# ----------------------------------------------------------------------------
@jax.jit
def classifier_forward(x_nchw, params):
    n = x_nchw.shape[0]
    # NCHW flatten (no transpose needed: conv1's unrolled matrix expects (c,h,w) order).
    x_flat = x_nchw.astype(jnp.float32).reshape(n, -1)

    meta = []
    args = [x_flat]
    flops = 0
    for layer in params["convs"]:
        c = layer["gamma"].shape[1]
        has_pool = "pool" in layer
        has_bias = "bias_flat" in layer
        s = (layer["pool"].shape[0] // c) if has_pool else 1
        meta.append((s, c, has_bias, has_pool))

        args.append(layer["m"])
        if has_bias:
            args.append(layer["bias_flat"])
        args += [layer["gamma"], layer["beta"]]
        if has_pool:
            args += [layer["pool"], layer["pool_t"]]

        kin, kout = layer["m"].shape
        flops += 2 * n * kin * kout                      # conv matmul
        if has_pool:
            flops += 2 * 2 * (s * c) * c * 2             # fused BN stats + broadcast dots
    args += [params["lw"], params["lb"]]
    flops += 2 * n * 64 * 5                              # linear head

    transcendentals = int(sum(m[1] for m in meta))       # one rsqrt per channel
    bytes_accessed = int(sum(int(np.prod(a.shape)) * a.dtype.itemsize for a in args)
                         + n * 5 * 4)

    kernel = _build_fused_kernel(tuple(meta))
    return pl.pallas_call(
        kernel,
        out_shape=jax.ShapeDtypeStruct((n, 5), jnp.float32),
        in_specs=[_VMEM] * len(args),
        out_specs=_VMEM,
        cost_estimate=pl.CostEstimate(flops=int(flops),
                                      transcendentals=transcendentals,
                                      bytes_accessed=bytes_accessed),
    )(*args)


if __name__ == "__main__":
    key = jax.random.PRNGKey(0)
    pkey, xkey = jax.random.split(key)

    n_channel = 4
    x = jax.random.normal(xkey, (2, n_channel, 16, 16), dtype=jnp.float32)  # NCHW, like PyTorch

    params = init_params(pkey, n_channel)
    logits = classifier_forward(x, params)
    jax.block_until_ready(logits)

    assert logits.shape == (2, 5), logits.shape
    assert bool(jnp.all(jnp.isfinite(logits)))
    print("KERNEL_OK")
</pallas_src>

<mosaic_0001>
module attributes {stable_mosaic.version = 11 : i64} {
  func.func @kernel(%arg0: memref<2x1024xf32, #tpu.memory_space<vmem>>, %arg1: memref<1024x512xbf16, #tpu.memory_space<vmem>>, %arg2: memref<1x8xf32, #tpu.memory_space<vmem>>, %arg3: memref<1x8xf32, #tpu.memory_space<vmem>>, %arg4: memref<512x8xbf16, #tpu.memory_space<vmem>>, %arg5: memref<8x512xbf16, #tpu.memory_space<vmem>>, %arg6: memref<512x256xbf16, #tpu.memory_space<vmem>>, %arg7: memref<1x256xf32, #tpu.memory_space<vmem>>, %arg8: memref<1x16xf32, #tpu.memory_space<vmem>>, %arg9: memref<1x16xf32, #tpu.memory_space<vmem>>, %arg10: memref<256x16xbf16, #tpu.memory_space<vmem>>, %arg11: memref<16x256xbf16, #tpu.memory_space<vmem>>, %arg12: memref<256x128xbf16, #tpu.memory_space<vmem>>, %arg13: memref<1x32xf32, #tpu.memory_space<vmem>>, %arg14: memref<1x32xf32, #tpu.memory_space<vmem>>, %arg15: memref<128x32xbf16, #tpu.memory_space<vmem>>, %arg16: memref<32x128xbf16, #tpu.memory_space<vmem>>, %arg17: memref<128x64xbf16, #tpu.memory_space<vmem>>, %arg18: memref<1x64xf32, #tpu.memory_space<vmem>>, %arg19: memref<1x64xf32, #tpu.memory_space<vmem>>, %arg20: memref<64x5xf32, #tpu.memory_space<vmem>>, %arg21: memref<1x5xf32, #tpu.memory_space<vmem>>, %arg22: memref<2x5xf32, #tpu.memory_space<vmem>>) attributes {dimension_semantics = [], scalar_prefetch = 0 : i64, scratch_operands = 0 : i64, tpu.core_type = #tpu.core_type<tc>} {
    %c0 = arith.constant 0 : index
    %c0_0 = arith.constant 0 : index
    %0 = vector.load %arg0[%c0, %c0_0] : memref<2x1024xf32, #tpu.memory_space<vmem>>, vector<2x1024xf32>
    %1 = arith.truncf %0 : vector<2x1024xf32> to vector<2x1024xbf16>
    %c0_1 = arith.constant 0 : index
    %c0_2 = arith.constant 0 : index
    %2 = vector.load %arg1[%c0_1, %c0_2] : memref<1024x512xbf16, #tpu.memory_space<vmem>>, vector<1024x512xbf16>
    %cst = arith.constant dense<0.000000e+00> : vector<2x512xf32>
    %3 = tpu.matmul %1, %2, %cst {dimension_numbers = #tpu.dot_dimension_numbers<[1], [0], [0], [1], [0, 0, 1, 1], [], []>} : vector<2x1024xbf16>, vector<1024x512xbf16>, vector<2x512xf32> -> vector<2x512xf32>
    %cst_3 = arith.constant 0.000000e+00 : f32
    %4 = vector.broadcast %cst_3 : f32 to vector<2x512xf32>
    %5 = arith.maximumf %3, %4 : vector<2x512xf32>
    %cst_4 = arith.constant dense<0.000000e+00> : vector<512xf32>
    %6 = vector.multi_reduction <add>, %5, %cst_4 [0] : vector<2x512xf32> to vector<512xf32>
    %7 = vector.shape_cast %6 : vector<512xf32> to vector<1x512xf32>
    %8 = arith.mulf %5, %5 : vector<2x512xf32>
    %cst_5 = arith.constant dense<0.000000e+00> : vector<512xf32>
    %9 = vector.multi_reduction <add>, %8, %cst_5 [0] : vector<2x512xf32> to vector<512xf32>
    %10 = vector.shape_cast %9 : vector<512xf32> to vector<1x512xf32>
    %11 = tpu.concatenate %7, %10 in 0 : vector<1x512xf32>, vector<1x512xf32> -> vector<2x512xf32>
    %c0_6 = arith.constant 0 : index
    %c0_7 = arith.constant 0 : index
    %12 = vector.load %arg4[%c0_6, %c0_7] : memref<512x8xbf16, #tpu.memory_space<vmem>>, vector<512x8xbf16>
    %13 = arith.extf %12 : vector<512x8xbf16> to vector<512x8xf32>
    %cst_8 = arith.constant dense<0.000000e+00> : vector<2x8xf32>
    %14 = tpu.matmul %11, %13, %cst_8 {dimension_numbers = #tpu.dot_dimension_numbers<[1], [0], [0], [1], [0, 0, 1, 1], [], []>} : vector<2x512xf32>, vector<512x8xf32>, vector<2x8xf32> -> vector<2x8xf32>
    %15 = vector.extract_strided_slice %14 {offsets = [0, 0], sizes = [1, 8], strides = [1, 1]} : vector<2x8xf32> to vector<1x8xf32>
    %cst_9 = arith.constant 7.812500e-03 : f32
    %16 = vector.broadcast %cst_9 : f32 to vector<1x8xf32>
    %17 = arith.mulf %15, %16 : vector<1x8xf32>
    %18 = vector.extract_strided_slice %14 {offsets = [1, 0], sizes = [1, 8], strides = [1, 1]} : vector<2x8xf32> to vector<1x8xf32>
    %cst_10 = arith.constant 7.812500e-03 : f32
    %19 = vector.broadcast %cst_10 : f32 to vector<1x8xf32>
    %20 = arith.mulf %18, %19 : vector<1x8xf32>
    %21 = arith.mulf %17, %17 : vector<1x8xf32>
    %22 = arith.subf %20, %21 : vector<1x8xf32>
    %cst_11 = arith.constant 0.000000e+00 : f32
    %23 = vector.broadcast %cst_11 : f32 to vector<1x8xf32>
    %24 = arith.maximumf %22, %23 : vector<1x8xf32>
    %c0_12 = arith.constant 0 : index
    %c0_13 = arith.constant 0 : index
    %25 = vector.load %arg2[%c0_12, %c0_13] : memref<1x8xf32, #tpu.memory_space<vmem>>, vector<1x8xf32>
    %cst_14 = arith.constant 9.99999974E-6 : f32
    %26 = vector.broadcast %cst_14 : f32 to vector<1x8xf32>
    %27 = arith.addf %24, %26 : vector<1x8xf32>
    %28 = math.rsqrt %27 : vector<1x8xf32>
    %29 = arith.mulf %25, %28 : vector<1x8xf32>
    %c0_15 = arith.constant 0 : index
    %c0_16 = arith.constant 0 : index
    %30 = vector.load %arg3[%c0_15, %c0_16] : memref<1x8xf32, #tpu.memory_space<vmem>>, vector<1x8xf32>
    %31 = arith.mulf %17, %29 : vector<1x8xf32>
    %32 = arith.subf %30, %31 : vector<1x8xf32>
    %33 = tpu.concatenate %29, %32 in 0 : vector<1x8xf32>, vector<1x8xf32> -> vector<2x8xf32>
    %c0_17 = arith.constant 0 : index
    %c0_18 = arith.constant 0 : index
    %34 = vector.load %arg5[%c0_17, %c0_18] : memref<8x512xbf16, #tpu.memory_space<vmem>>, vector<8x512xbf16>
    %35 = arith.extf %34 : vector<8x512xbf16> to vector<8x512xf32>
    %cst_19 = arith.constant dense<0.000000e+00> : vector<2x512xf32>
    %36 = tpu.matmul %33, %35, %cst_19 {dimension_numbers = #tpu.dot_dimension_numbers<[1], [0], [0], [1], [0, 0, 1, 1], [], []>} : vector<2x8xf32>, vector<8x512xf32>, vector<2x512xf32> -> vector<2x512xf32>
    %37 = vector.extract_strided_slice %36 {offsets = [0, 0], sizes = [1, 512], strides = [1, 1]} : vector<2x512xf32> to vector<1x512xf32>
    %38 = vector.broadcast %37 : vector<1x512xf32> to vector<2x512xf32>
    %39 = arith.mulf %5, %38 : vector<2x512xf32>
    %40 = vector.extract_strided_slice %36 {offsets = [1, 0], sizes = [1, 512], strides = [1, 1]} : vector<2x512xf32> to vector<1x512xf32>
    %41 = vector.broadcast %40 : vector<1x512xf32> to vector<2x512xf32>
    %42 = arith.addf %39, %41 : vector<2x512xf32>
    %43 = arith.truncf %42 : vector<2x512xf32> to vector<2x512xbf16>
    %c0_20 = arith.constant 0 : index
    %c0_21 = arith.constant 0 : index
    %44 = vector.load %arg6[%c0_20, %c0_21] : memref<512x256xbf16, #tpu.memory_space<vmem>>, vector<512x256xbf16>
    %cst_22 = arith.constant dense<0.000000e+00> : vector<2x256xf32>
    %45 = tpu.matmul %43, %44, %cst_22 {dimension_numbers = #tpu.dot_dimension_numbers<[1], [0], [0], [1], [0, 0, 1, 1], [], []>} : vector<2x512xbf16>, vector<512x256xbf16>, vector<2x256xf32> -> vector<2x256xf32>
    %c0_23 = arith.constant 0 : index
    %c0_24 = arith.constant 0 : index
    %46 = vector.load %arg7[%c0_23, %c0_24] : memref<1x256xf32, #tpu.memory_space<vmem>>, vector<1x256xf32>
    %47 = vector.broadcast %46 : vector<1x256xf32> to vector<2x256xf32>
    %48 = arith.addf %45, %47 : vector<2x256xf32>
    %cst_25 = arith.constant 0.000000e+00 : f32
    %49 = vector.broadcast %cst_25 : f32 to vector<2x256xf32>
    %50 = arith.maximumf %48, %49 : vector<2x256xf32>
    %cst_26 = arith.constant dense<0.000000e+00> : vector<256xf32>
    %51 = vector.multi_reduction <add>, %50, %cst_26 [0] : vector<2x256xf32> to vector<256xf32>
    %52 = vector.shape_cast %51 : vector<256xf32> to vector<1x256xf32>
    %53 = arith.mulf %50, %50 : vector<2x256xf32>
    %cst_27 = arith.constant dense<0.000000e+00> : vector<256xf32>
    %54 = vector.multi_reduction <add>, %53, %cst_27 [0] : vector<2x256xf32> to vector<256xf32>
    %55 = vector.shape_cast %54 : vector<256xf32> to vector<1x256xf32>
    %56 = tpu.concatenate %52, %55 in 0 : vector<1x256xf32>, vector<1x256xf32> -> vector<2x256xf32>
    %c0_28 = arith.constant 0 : index
    %c0_29 = arith.constant 0 : index
    %57 = vector.load %arg10[%c0_28, %c0_29] : memref<256x16xbf16, #tpu.memory_space<vmem>>, vector<256x16xbf16>
    %58 = arith.extf %57 : vector<256x16xbf16> to vector<256x16xf32>
    %cst_30 = arith.constant dense<0.000000e+00> : vector<2x16xf32>
    %59 = tpu.matmul %56, %58, %cst_30 {dimension_numbers = #tpu.dot_dimension_numbers<[1], [0], [0], [1], [0, 0, 1, 1], [], []>} : vector<2x256xf32>, vector<256x16xf32>, vector<2x16xf32> -> vector<2x16xf32>
    %60 = vector.extract_strided_slice %59 {offsets = [0, 0], sizes = [1, 16], strides = [1, 1]} : vector<2x16xf32> to vector<1x16xf32>
    %cst_31 = arith.constant 3.125000e-02 : f32
    %61 = vector.broadcast %cst_31 : f32 to vector<1x16xf32>
    %62 = arith.mulf %60, %61 : vector<1x16xf32>
    %63 = vector.extract_strided_slice %59 {offsets = [1, 0], sizes = [1, 16], strides = [1, 1]} : vector<2x16xf32> to vector<1x16xf32>
    %cst_32 = arith.constant 3.125000e-02 : f32
    %64 = vector.broadcast %cst_32 : f32 to vector<1x16xf32>
    %65 = arith.mulf %63, %64 : vector<1x16xf32>
    %66 = arith.mulf %62, %62 : vector<1x16xf32>
    %67 = arith.subf %65, %66 : vector<1x16xf32>
    %cst_33 = arith.constant 0.000000e+00 : f32
    %68 = vector.broadcast %cst_33 : f32 to vector<1x16xf32>
    %69 = arith.maximumf %67, %68 : vector<1x16xf32>
    %c0_34 = arith.constant 0 : index
    %c0_35 = arith.constant 0 : index
    %70 = vector.load %arg8[%c0_34, %c0_35] : memref<1x16xf32, #tpu.memory_space<vmem>>, vector<1x16xf32>
    %cst_36 = arith.constant 9.99999974E-6 : f32
    %71 = vector.broadcast %cst_36 : f32 to vector<1x16xf32>
    %72 = arith.addf %69, %71 : vector<1x16xf32>
    %73 = math.rsqrt %72 : vector<1x16xf32>
    %74 = arith.mulf %70, %73 : vector<1x16xf32>
    %c0_37 = arith.constant 0 : index
    %c0_38 = arith.constant 0 : index
    %75 = vector.load %arg9[%c0_37, %c0_38] : memref<1x16xf32, #tpu.memory_space<vmem>>, vector<1x16xf32>
    %76 = arith.mulf %62, %74 : vector<1x16xf32>
    %77 = arith.subf %75, %76 : vector<1x16xf32>
    %78 = tpu.concatenate %74, %77 in 0 : vector<1x16xf32>, vector<1x16xf32> -> vector<2x16xf32>
    %c0_39 = arith.constant 0 : index
    %c0_40 = arith.constant 0 : index
    %79 = vector.load %arg11[%c0_39, %c0_40] : memref<16x256xbf16, #tpu.memory_space<vmem>>, vector<16x256xbf16>
    %80 = arith.extf %79 : vector<16x256xbf16> to vector<16x256xf32>
    %cst_41 = arith.constant dense<0.000000e+00> : vector<2x256xf32>
    %81 = tpu.matmul %78, %80, %cst_41 {dimension_numbers = #tpu.dot_dimension_numbers<[1], [0], [0], [1], [0, 0, 1, 1], [], []>} : vector<2x16xf32>, vector<16x256xf32>, vector<2x256xf32> -> vector<2x256xf32>
    %82 = vector.extract_strided_slice %81 {offsets = [0, 0], sizes = [1, 256], strides = [1, 1]} : vector<2x256xf32> to vector<1x256xf32>
    %83 = vector.broadcast %82 : vector<1x256xf32> to vector<2x256xf32>
    %84 = arith.mulf %50, %83 : vector<2x256xf32>
    %85 = vector.extract_strided_slice %81 {offsets = [1, 0], sizes = [1, 256], strides = [1, 1]} : vector<2x256xf32> to vector<1x256xf32>
    %86 = vector.broadcast %85 : vector<1x256xf32> to vector<2x256xf32>
    %87 = arith.addf %84, %86 : vector<2x256xf32>
    %88 = arith.truncf %87 : vector<2x256xf32> to vector<2x256xbf16>
    %c0_42 = arith.constant 0 : index
    %c0_43 = arith.constant 0 : index
    %89 = vector.load %arg12[%c0_42, %c0_43] : memref<256x128xbf16, #tpu.memory_space<vmem>>, vector<256x128xbf16>
    %cst_44 = arith.constant dense<0.000000e+00> : vector<2x128xf32>
    %90 = tpu.matmul %88, %89, %cst_44 {dimension_numbers = #tpu.dot_dimension_numbers<[1], [0], [0], [1], [0, 0, 1, 1], [], []>} : vector<2x256xbf16>, vector<256x128xbf16>, vector<2x128xf32> -> vector<2x128xf32>
    %cst_45 = arith.constant 0.000000e+00 : f32
    %91 = vector.broadcast %cst_45 : f32 to vector<2x128xf32>
    %92 = arith.maximumf %90, %91 : vector<2x128xf32>
    %cst_46 = arith.constant dense<0.000000e+00> : vector<128xf32>
    %93 = vector.multi_reduction <add>, %92, %cst_46 [0] : vector<2x128xf32> to vector<128xf32>
    %94 = vector.shape_cast %93 : vector<128xf32> to vector<1x128xf32>
    %95 = arith.mulf %92, %92 : vector<2x128xf32>
    %cst_47 = arith.constant dense<0.000000e+00> : vector<128xf32>
    %96 = vector.multi_reduction <add>, %95, %cst_47 [0] : vector<2x128xf32> to vector<128xf32>
    %97 = vector.shape_cast %96 : vector<128xf32> to vector<1x128xf32>
    %98 = tpu.concatenate %94, %97 in 0 : vector<1x128xf32>, vector<1x128xf32> -> vector<2x128xf32>
    %c0_48 = arith.constant 0 : index
    %c0_49 = arith.constant 0 : index
    %99 = vector.load %arg15[%c0_48, %c0_49] : memref<128x32xbf16, #tpu.memory_space<vmem>>, vector<128x32xbf16>
    %100 = arith.extf %99 : vector<128x32xbf16> to vector<128x32xf32>
    %cst_50 = arith.constant dense<0.000000e+00> : vector<2x32xf32>
    %101 = tpu.matmul %98, %100, %cst_50 {dimension_numbers = #tpu.dot_dimension_numbers<[1], [0], [0], [1], [0, 0, 1, 1], [], []>} : vector<2x128xf32>, vector<128x32xf32>, vector<2x32xf32> -> vector<2x32xf32>
    %102 = vector.extract_strided_slice %101 {offsets = [0, 0], sizes = [1, 32], strides = [1, 1]} : vector<2x32xf32> to vector<1x32xf32>
    %cst_51 = arith.constant 1.250000e-01 : f32
    %103 = vector.broadcast %cst_51 : f32 to vector<1x32xf32>
    %104 = arith.mulf %102, %103 : vector<1x32xf32>
    %105 = vector.extract_strided_slice %101 {offsets = [1, 0], sizes = [1, 32], strides = [1, 1]} : vector<2x32xf32> to vector<1x32xf32>
    %cst_52 = arith.constant 1.250000e-01 : f32
    %106 = vector.broadcast %cst_52 : f32 to vector<1x32xf32>
    %107 = arith.mulf %105, %106 : vector<1x32xf32>
    %108 = arith.mulf %104, %104 : vector<1x32xf32>
    %109 = arith.subf %107, %108 : vector<1x32xf32>
    %cst_53 = arith.constant 0.000000e+00 : f32
    %110 = vector.broadcast %cst_53 : f32 to vector<1x32xf32>
    %111 = arith.maximumf %109, %110 : vector<1x32xf32>
    %c0_54 = arith.constant 0 : index
    %c0_55 = arith.constant 0 : index
    %112 = vector.load %arg13[%c0_54, %c0_55] : memref<1x32xf32, #tpu.memory_space<vmem>>, vector<1x32xf32>
    %cst_56 = arith.constant 9.99999974E-6 : f32
    %113 = vector.broadcast %cst_56 : f32 to vector<1x32xf32>
    %114 = arith.addf %111, %113 : vector<1x32xf32>
    %115 = math.rsqrt %114 : vector<1x32xf32>
    %116 = arith.mulf %112, %115 : vector<1x32xf32>
    %c0_57 = arith.constant 0 : index
    %c0_58 = arith.constant 0 : index
    %117 = vector.load %arg14[%c0_57, %c0_58] : memref<1x32xf32, #tpu.memory_space<vmem>>, vector<1x32xf32>
    %118 = arith.mulf %104, %116 : vector<1x32xf32>
    %119 = arith.subf %117, %118 : vector<1x32xf32>
    %120 = tpu.concatenate %116, %119 in 0 : vector<1x32xf32>, vector<1x32xf32> -> vector<2x32xf32>
    %c0_59 = arith.constant 0 : index
    %c0_60 = arith.constant 0 : index
    %121 = vector.load %arg16[%c0_59, %c0_60] : memref<32x128xbf16, #tpu.memory_space<vmem>>, vector<32x128xbf16>
    %122 = arith.extf %121 : vector<32x128xbf16> to vector<32x128xf32>
    %cst_61 = arith.constant dense<0.000000e+00> : vector<2x128xf32>
    %123 = tpu.matmul %120, %122, %cst_61 {dimension_numbers = #tpu.dot_dimension_numbers<[1], [0], [0], [1], [0, 0, 1, 1], [], []>} : vector<2x32xf32>, vector<32x128xf32>, vector<2x128xf32> -> vector<2x128xf32>
    %124 = vector.extract_strided_slice %123 {offsets = [0, 0], sizes = [1, 128], strides = [1, 1]} : vector<2x128xf32> to vector<1x128xf32>
    %125 = vector.broadcast %124 : vector<1x128xf32> to vector<2x128xf32>
    %126 = arith.mulf %92, %125 : vector<2x128xf32>
    %127 = vector.extract_strided_slice %123 {offsets = [1, 0], sizes = [1, 128], strides = [1, 1]} : vector<2x128xf32> to vector<1x128xf32>
    %128 = vector.broadcast %127 : vector<1x128xf32> to vector<2x128xf32>
    %129 = arith.addf %126, %128 : vector<2x128xf32>
    %130 = arith.truncf %129 : vector<2x128xf32> to vector<2x128xbf16>
    %c0_62 = arith.constant 0 : index
    %c0_63 = arith.constant 0 : index
    %131 = vector.load %arg17[%c0_62, %c0_63] : memref<128x64xbf16, #tpu.memory_space<vmem>>, vector<128x64xbf16>
    %cst_64 = arith.constant dense<0.000000e+00> : vector<2x64xf32>
    %132 = tpu.matmul %130, %131, %cst_64 {dimension_numbers = #tpu.dot_dimension_numbers<[1], [0], [0], [1], [0, 0, 1, 1], [], []>} : vector<2x128xbf16>, vector<128x64xbf16>, vector<2x64xf32> -> vector<2x64xf32>
    %cst_65 = arith.constant 0.000000e+00 : f32
    %133 = vector.broadcast %cst_65 : f32 to vector<2x64xf32>
    %134 = arith.maximumf %132, %133 : vector<2x64xf32>
    %cst_66 = arith.constant dense<0.000000e+00> : vector<64xf32>
    %135 = vector.multi_reduction <add>, %134, %cst_66 [0] : vector<2x64xf32> to vector<64xf32>
    %136 = vector.shape_cast %135 : vector<64xf32> to vector<1x64xf32>
    %137 = arith.mulf %134, %134 : vector<2x64xf32>
    %cst_67 = arith.constant dense<0.000000e+00> : vector<64xf32>
    %138 = vector.multi_reduction <add>, %137, %cst_67 [0] : vector<2x64xf32> to vector<64xf32>
    %139 = vector.shape_cast %138 : vector<64xf32> to vector<1x64xf32>
    %cst_68 = arith.constant 5.000000e-01 : f32
    %140 = vector.broadcast %cst_68 : f32 to vector<1x64xf32>
    %141 = arith.mulf %136, %140 : vector<1x64xf32>
    %cst_69 = arith.constant 5.000000e-01 : f32
    %142 = vector.broadcast %cst_69 : f32 to vector<1x64xf32>
    %143 = arith.mulf %139, %142 : vector<1x64xf32>
    %144 = arith.mulf %141, %141 : vector<1x64xf32>
    %145 = arith.subf %143, %144 : vector<1x64xf32>
    %cst_70 = arith.constant 0.000000e+00 : f32
    %146 = vector.broadcast %cst_70 : f32 to vector<1x64xf32>
    %147 = arith.maximumf %145, %146 : vector<1x64xf32>
    %c0_71 = arith.constant 0 : index
    %c0_72 = arith.constant 0 : index
    %148 = vector.load %arg18[%c0_71, %c0_72] : memref<1x64xf32, #tpu.memory_space<vmem>>, vector<1x64xf32>
    %cst_73 = arith.constant 9.99999974E-6 : f32
    %149 = vector.broadcast %cst_73 : f32 to vector<1x64xf32>
    %150 = arith.addf %147, %149 : vector<1x64xf32>
    %151 = math.rsqrt %150 : vector<1x64xf32>
    %152 = arith.mulf %148, %151 : vector<1x64xf32>
    %c0_74 = arith.constant 0 : index
    %c0_75 = arith.constant 0 : index
    %153 = vector.load %arg19[%c0_74, %c0_75] : memref<1x64xf32, #tpu.memory_space<vmem>>, vector<1x64xf32>
    %154 = arith.mulf %141, %152 : vector<1x64xf32>
    %155 = arith.subf %153, %154 : vector<1x64xf32>
    %156 = vector.broadcast %152 : vector<1x64xf32> to vector<2x64xf32>
    %157 = arith.mulf %134, %156 : vector<2x64xf32>
    %158 = vector.broadcast %155 : vector<1x64xf32> to vector<2x64xf32>
    %159 = arith.addf %157, %158 : vector<2x64xf32>
    %c0_76 = arith.constant 0 : index
    %c0_77 = arith.constant 0 : index
    %160 = vector.load %arg20[%c0_76, %c0_77] : memref<64x5xf32, #tpu.memory_space<vmem>>, vector<64x5xf32>
    %cst_78 = arith.constant dense<0.000000e+00> : vector<2x5xf32>
    %161 = tpu.matmul %159, %160, %cst_78 {dimension_numbers = #tpu.dot_dimension_numbers<[1], [0], [0], [1], [0, 0, 1, 1], [], []>} : vector<2x64xf32>, vector<64x5xf32>, vector<2x5xf32> -> vector<2x5xf32>
    %c0_79 = arith.constant 0 : index
    %c0_80 = arith.constant 0 : index
    %162 = vector.load %arg21[%c0_79, %c0_80] : memref<1x5xf32, #tpu.memory_space<vmem>>, vector<1x5xf32>
    %163 = vector.broadcast %162 : vector<1x5xf32> to vector<2x5xf32>
    %164 = arith.addf %161, %163 : vector<2x5xf32>
    %c0_81 = arith.constant 0 : index
    %c0_82 = arith.constant 0 : index
    %165 = vector.load %arg22[%c0_81, %c0_82] : memref<2x5xf32, #tpu.memory_space<vmem>>, vector<2x5xf32>
    tpu.vector_store %arg22[%c0_81, %c0_82], %164 {strides = array<i32>} : memref<2x5xf32, #tpu.memory_space<vmem>>, vector<2x5xf32>,
    return
  }
}

</mosaic_0001>

<llo_original>
// kernel: classifier_forward.1
$region0: #{classifier_forward.1}
  #allocation0 [shape = 'u32[]', space=smem, size = 0x4, offset = 0x4, fixed_abs, tag = 'smem constant byte address 0x4 - core index']
  #allocation1 [shape = 'u32[144,128]{1,0:T(1,128)}', space=vmem, size = 0x12000, scoped, tag = 'internal scratch']
  %s0 = inlined_call_operand.vmem [shape: f32[2,1024], index: 0, kind: input, shape index: {}]
  %s1 = inlined_call_operand.hbm [shape: bf16[1024,512], index: 1, kind: input, shape index: {}]
  %s2 = inlined_call_operand.vmem [shape: f32[1,8], index: 2, kind: input, shape index: {}]
  %s3 = inlined_call_operand.vmem [shape: f32[1,8], index: 3, kind: input, shape index: {}]
  %s4 = inlined_call_operand.vmem [shape: bf16[512,8], index: 4, kind: input, shape index: {}]
  %s5 = inlined_call_operand.vmem [shape: bf16[8,512], index: 5, kind: input, shape index: {}]
  %s6 = inlined_call_operand.vmem [shape: bf16[512,256], index: 6, kind: input, shape index: {}]
  %s7 = inlined_call_operand.vmem [shape: f32[1,256], index: 7, kind: input, shape index: {}]
  %s8 = inlined_call_operand.vmem [shape: f32[1,16], index: 8, kind: input, shape index: {}]
  %s9 = inlined_call_operand.vmem [shape: f32[1,16], index: 9, kind: input, shape index: {}]
  %s10 = inlined_call_operand.vmem [shape: bf16[256,16], index: 10, kind: input, shape index: {}]
  %s11 = inlined_call_operand.vmem [shape: bf16[16,256], index: 11, kind: input, shape index: {}]
  %s12 = inlined_call_operand.vmem [shape: bf16[256,128], index: 12, kind: input, shape index: {}]
  %s13 = inlined_call_operand.vmem [shape: f32[1,32], index: 13, kind: input, shape index: {}]
  %s14 = inlined_call_operand.vmem [shape: f32[1,32], index: 14, kind: input, shape index: {}]
  %s15 = inlined_call_operand.vmem [shape: bf16[128,32], index: 15, kind: input, shape index: {}]
  %s16 = inlined_call_operand.vmem [shape: bf16[32,128], index: 16, kind: input, shape index: {}]
  %s17 = inlined_call_operand.vmem [shape: bf16[128,64], index: 17, kind: input, shape index: {}]
  %s18 = inlined_call_operand.vmem [shape: f32[1,64], index: 18, kind: input, shape index: {}]
  %s19 = inlined_call_operand.vmem [shape: f32[1,64], index: 19, kind: input, shape index: {}]
  %s20 = inlined_call_operand.vmem [shape: f32[64,5], index: 20, kind: input, shape index: {}]
  %s21 = inlined_call_operand.vmem [shape: f32[1,5], index: 21, kind: input, shape index: {}]
  %s22 = inlined_call_operand.hbm [shape: f32[2,5], index: 22, kind: output, shape index: {}]
  %s23 = sld [smem:[#allocation0]]
  $region102: #{classifier_forward.1} parent=0
    _
  %s25 = ssub.s32 1, %s23
  %s26 = scalar_select 0, %s25, %s23
  $region1: #{classifier_forward.1} parent=0
    #allocation2 [shape = 'u8[1048576]{0}', space=vmem, size = 0x100000, scoped, tag = 'input window, operand 1, single buffered']
    #allocation3 [shape = 's32[1]{0}', space=sflag, size = 0x4, scoped, tag = 'scoped memory for classifier_forward.1']
    #allocation4 [shape = 's32[1]{0}', space=sflag, size = 0x4, scoped, tag = 'scoped memory for classifier_forward.1']
    #allocation5 [shape = 'u8[1024]{0}', space=vmem, size = 0x400, scoped, tag = 'output window, operand 0, single buffered']
    %27 = vsyncpa [#allocation3], 0
    %28 = vsyncpa [#allocation4], 0
    // Predicated region
    $region2: #{classifier_forward.1} parent=1 // pred_check
      _
    $region3: #{classifier_forward.1} parent=1 // pred_check_branch
      %30 = sbr.rel (0) target = $region5
    $region4: #{classifier_forward.1} parent=1 // pred_region
      _
    $region5: #{classifier_forward.1} parent=1 // pred_fallthru
      _
    // Predicated region
    $region6: #{classifier_forward.1} parent=1 // pred_check
      _
    $region7: #{classifier_forward.1} parent=1 // pred_check_branch
      %32 = sbr.rel (0) target = $region9
    $region8: #{classifier_forward.1} parent=1 // pred_region
      %s34 = ssub.s32 32768, 32768
      %35 = vsyncadd [#allocation3], %s34
      %s36 = sshll.u32 [#allocation2], 4
      %s37 = int_to_ptr.vmem [resolvable:$true] %s36
      %42 = dma.hbm_to_vmem [thread:$0]  %s1, 32768, %s37, [#allocation3], 256, 256, 16
    $region9: #{classifier_forward.1} parent=1 // pred_fallthru
      _
    // Predicated region
    $region10: #{classifier_forward.1} parent=1 // pred_check
      _
    $region11: #{classifier_forward.1} parent=1 // pred_check_branch
      %44 = sbr.rel (0) target = $region13
    $region12: #{classifier_forward.1} parent=1 // pred_region
      _
    $region13: #{classifier_forward.1} parent=1 // pred_fallthru
      _
    // Predicated region
    $region14: #{classifier_forward.1} parent=1 // pred_check
      _
    $region15: #{classifier_forward.1} parent=1 // pred_check_branch
      %46 = sbr.rel (0) target = $region17
    $region16: #{classifier_forward.1} parent=1 // pred_region
      _
    $region17: #{classifier_forward.1} parent=1 // pred_fallthru
      _
    // Predicated region
    $region18: #{classifier_forward.1} parent=1 // pred_check
      _
    $region19: #{classifier_forward.1} parent=1 // pred_check_branch
      %48 = sbr.rel (0) target = $region21
    $region20: #{classifier_forward.1} parent=1 // pred_region
      _
    $region21: #{classifier_forward.1} parent=1 // pred_fallthru
      _
    // Predicated region
    $region22: #{classifier_forward.1} parent=1 // pred_check
      _
    $region23: #{classifier_forward.1} parent=1 // pred_check_branch
      %50 = sbr.rel (0) target = $region25
    $region24: #{classifier_forward.1} parent=1 // pred_region
      _
    $region25: #{classifier_forward.1} parent=1 // pred_fallthru
      _
    // Predicated region
    $region26: #{classifier_forward.1} parent=1 // pred_check
      _
    $region27: #{classifier_forward.1} parent=1 // pred_check_branch
      %52 = sbr.rel (0) target = $region29
    $region28: #{classifier_forward.1} parent=1 // pred_region
      _
    $region29: #{classifier_forward.1} parent=1 // pred_fallthru
      _
    // Predicated region
    $region30: #{classifier_forward.1} parent=1 // pred_check
      _
    $region31: #{classifier_forward.1} parent=1 // pred_check_branch
      %54 = sbr.rel (0) target = $region33
    $region32: #{classifier_forward.1} parent=1 // pred_region
      _
    $region33: #{classifier_forward.1} parent=1 // pred_fallthru
      _
    // Predicated region
    $region34: #{classifier_forward.1} parent=1 // pred_check
      _
    $region35: #{classifier_forward.1} parent=1 // pred_check_branch
      %56 = sbr.rel (0) target = $region37
    $region36: #{classifier_forward.1} parent=1 // pred_region
      _
    $region37: #{classifier_forward.1} parent=1 // pred_fallthru
      _
    // Predicated region
    $region38: #{classifier_forward.1} parent=1 // pred_check
      _
    $region39: #{classifier_forward.1} parent=1 // pred_check_branch
      %58 = sbr.rel (0) target = $region41
    $region40: #{classifier_forward.1} parent=1 // pred_region
      _
    $region41: #{classifier_forward.1} parent=1 // pred_fallthru
      _
    // Predicated region
    $region42: #{classifier_forward.1} parent=1 // pred_check
      _
    $region43: #{classifier_forward.1} parent=1 // pred_check_branch
      %60 = sbr.rel (0) target = $region45
    $region44: #{classifier_forward.1} parent=1 // pred_region
      _
    $region45: #{classifier_forward.1} parent=1 // pred_fallthru
      _
    // Predicated region
    $region46: #{classifier_forward.1} parent=1 // pred_check
      _
    $region47: #{classifier_forward.1} parent=1 // pred_check_branch
      %62 = sbr.rel (0) target = $region49
    $region48: #{classifier_forward.1} parent=1 // pred_region
      _
    $region49: #{classifier_forward.1} parent=1 // pred_fallthru
      _
    // Predicated region
    $region50: #{classifier_forward.1} parent=1 // pred_check
      _
    $region51: #{classifier_forward.1} parent=1 // pred_check_branch
      %64 = sbr.rel (0) target = $region53
    $region52: #{classifier_forward.1} parent=1 // pred_region
      _
    $region53: #{classifier_forward.1} parent=1 // pred_fallthru
      _
    // Predicated region
    $region54: #{classifier_forward.1} parent=1 // pred_check
      _
    $region55: #{classifier_forward.1} parent=1 // pred_check_branch
      %66 = sbr.rel (0) target = $region57
    $region56: #{classifier_forward.1} parent=1 // pred_region
      _
    $region57: #{classifier_forward.1} parent=1 // pred_fallthru
      _
    // Predicated region
    $region58: #{classifier_forward.1} parent=1 // pred_check
      _
    $region59: #{classifier_forward.1} parent=1 // pred_check_branch
      %68 = sbr.rel (0) target = $region61
    $region60: #{classifier_forward.1} parent=1 // pred_region
      _
    $region61: #{classifier_forward.1} parent=1 // pred_fallthru
      _
    // Predicated region
    $region62: #{classifier_forward.1} parent=1 // pred_check
      _
    $region63: #{classifier_forward.1} parent=1 // pred_check_branch
      %70 = sbr.rel (0) target = $region65
    $region64: #{classifier_forward.1} parent=1 // pred_region
      _
    $region65: #{classifier_forward.1} parent=1 // pred_fallthru
      _
    // Predicated region
    $region66: #{classifier_forward.1} parent=1 // pred_check
      _
    $region67: #{classifier_forward.1} parent=1 // pred_check_branch
      %72 = sbr.rel (0) target = $region69
    $region68: #{classifier_forward.1} parent=1 // pred_region
      _
    $region69: #{classifier_forward.1} parent=1 // pred_fallthru
      _
    // Predicated region
    $region70: #{classifier_forward.1} parent=1 // pred_check
      _
    $region71: #{classifier_forward.1} parent=1 // pred_check_branch
      %74 = sbr.rel (0) target = $region73
    $region72: #{classifier_forward.1} parent=1 // pred_region
      _
    $region73: #{classifier_forward.1} parent=1 // pred_fallthru
      _
    // Predicated region
    $region74: #{classifier_forward.1} parent=1 // pred_check
      _
    $region75: #{classifier_forward.1} parent=1 // pred_check_branch
      %76 = sbr.rel (0) target = $region77
    $region76: #{classifier_forward.1} parent=1 // pred_region
      _
    $region77: #{classifier_forward.1} parent=1 // pred_fallthru
      _
    // Predicated region
    $region78: #{classifier_forward.1} parent=1 // pred_check
      _
    $region79: #{classifier_forward.1} parent=1 // pred_check_branch
      %78 = sbr.rel (0) target = $region81
    $region80: #{classifier_forward.1} parent=1 // pred_region
      _
    $region81: #{classifier_forward.1} parent=1 // pred_fallthru
      _
    // Predicated region
    $region82: #{classifier_forward.1} parent=1 // pred_check
      _
    $region83: #{classifier_forward.1} parent=1 // pred_check_branch
      %80 = sbr.rel (0) target = $region85
    $region84: #{classifier_forward.1} parent=1 // pred_region
      _
    $region85: #{classifier_forward.1} parent=1 // pred_fallthru
      _
    // Predicated region
    $region86: #{classifier_forward.1} parent=1 // pred_check
      _
    $region87: #{classifier_forward.1} parent=1 // pred_check_branch
      %82 = sbr.rel (0) target = $region89
    $region88: #{classifier_forward.1} parent=1 // pred_region
      _
    $region89: #{classifier_forward.1} parent=1 // pred_fallthru
      _
    // Predicated region
    $region90: #{classifier_forward.1} parent=1 // pred_check
      _
    $region91: #{classifier_forward.1} parent=1 // pred_check_branch
      %84 = sbr.rel (0) target = $region93
    $region92: #{classifier_forward.1} parent=1 // pred_region
      %85 = dma.done [#allocation3], 32768
    $region93: #{classifier_forward.1} parent=1 // pred_fallthru
      _
    %v87 = vld [vmem:[%s0] sm:$0xff]
    %v88 = vld [vmem:[%s0 + $0x8] sm:$0xff]
    %v91 = vcombine.high %v87, %v87
    %v93 = vunpack.c.l.s4 1983009808
    %v94 = vunpack.c.0.s8 %v93
    %v95 = vlaneseq
    %v96 = vshrl.u32 %v95, 7
    %v97 = vsub.s32 %v94, %v96
    %v98 = vrot.slane %v87, %v97
    %v100 = vunpack.c.l.s4 1983009808
    %v101 = vunpack.c.0.s8 %v100
    %v102 = vlaneseq
    %v103 = vshrl.u32 %v102, 7
    %v104 = vsub.s32 %v101, %v103
    %v105 = vrot.slane %v91, %v104
    %v106 = vcombine.high %v98, %v98
    %v107 = vcombine.high %v105, %v105
    %v108 = vcombine.high %v88, %v88
    %v110 = vunpack.c.l.s4 1983009808
    %v111 = vunpack.c.0.s8 %v110
    %v112 = vlaneseq
    %v113 = vshrl.u32 %v112, 7
    %v114 = vsub.s32 %v111, %v113
    %v115 = vrot.slane %v88, %v114
    %v117 = vunpack.c.l.s4 1983009808
    %v118 = vunpack.c.0.s8 %v117
    %v119 = vlaneseq
    %v120 = vshrl.u32 %v119, 7
    %v121 = vsub.s32 %v118, %v120
    %v122 = vrot.slane %v108, %v121
    %v123 = vcombine.high %v115, %v115
    %v124 = vcombine.high %v122, %v122
    %v133 = vpack.c.bf16 %v98, %v98
    %v134 = vpack.c.bf16 %v106, %v106
    %v135 = vpack.c.bf16 %v105, %v105
    %v136 = vpack.c.bf16 %v107, %v107
    %v137 = vpack.c.bf16 %v115, %v115
    %v138 = vpack.c.bf16 %v123, %v123
    %v139 = vpack.c.bf16 %v122, %v122
    %v140 = vpack.c.bf16 %v124, %v124
    %v141 = vld [vmem:[#allocation2] sm:$0xff]
    %v142 = vld [vmem:[#allocation2 + $0x8] sm:$0xff]
    %v143 = vld [vmem:[#allocation2 + $0x10] sm:$0xff]
    %v144 = vld [vmem:[#allocation2 + $0x18] sm:$0xff]
    %v145 = vld [vmem:[#allocation2 + $0x20] sm:$0xff]
    %v146 = vld [vmem:[#allocation2 + $0x28] sm:$0xff]
    %v147 = vld [vmem:[#allocation2 + $0x30] sm:$0xff]
    %v148 = vld [vmem:[#allocation2 + $0x38] sm:$0xff]
    %v149 = vld [vmem:[#allocation2 + $0x40] sm:$0xff]
    %v150 = vld [vmem:[#allocation2 + $0x48] sm:$0xff]
    %v151 = vld [vmem:[#allocation2 + $0x50] sm:$0xff]
    %v152 = vld [vmem:[#allocation2 + $0x58] sm:$0xff]
    %v153 = vld [vmem:[#allocation2 + $0x60] sm:$0xff]
    %v154 = vld [vmem:[#allocation2 + $0x68] sm:$0xff]
    %v155 = vld [vmem:[#allocation2 + $0x70] sm:$0xff]
    %v156 = vld [vmem:[#allocation2 + $0x78] sm:$0xff]
    %v157 = vld [vmem:[#allocation2 + $0x80] sm:$0xff]
    %v158 = vld [vmem:[#allocation2 + $0x88] sm:$0xff]
    %v159 = vld [vmem:[#allocation2 + $0x90] sm:$0xff]
    %v160 = vld [vmem:[#allocation2 + $0x98] sm:$0xff]
    %v161 = vld [vmem:[#allocation2 + $0xa0] sm:$0xff]
    %v162 = vld [vmem:[#allocation2 + $0xa8] sm:$0xff]
    %v163 = vld [vmem:[#allocation2 + $0xb0] sm:$0xff]
    %v164 = vld [vmem:[#allocation2 + $0xb8] sm:$0xff]
    %v165 = vld [vmem:[#allocation2 + $0xc0] sm:$0xff]
    %v166 = vld [vmem:[#allocation2 + $0xc8] sm:$0xff]
    %v167 = vld [vmem:[#allocation2 + $0xd0] sm:$0xff]
    %v168 = vld [vmem:[#allocation2 + $0xd8] sm:$0xff]
    %v169 = vld [vmem:[#allocation2 + $0xe0] sm:$0xff]
    %v170 = vld [vmem:[#allocation2 + $0xe8] sm:$0xff]
    %v171 = vld [vmem:[#allocation2 + $0xf0] sm:$0xff]
    %v172 = vld [vmem:[#allocation2 + $0xf8] sm:$0xff]
    %v173 = vld [vmem:[#allocation2 + $0x100] sm:$0xff]
    %v174 = vld [vmem:[#allocation2 + $0x108] sm:$0xff]
    %v175 = vld [vmem:[#allocation2 + $0x110] sm:$0xff]
    %v176 = vld [vmem:[#allocation2 + $0x118] sm:$0xff]
    %v177 = vld [vmem:[#allocation2 + $0x120] sm:$0xff]
    %v178 = vld [vmem:[#allocation2 + $0x128] sm:$0xff]
    %v179 = vld [vmem:[#allocation2 + $0x130] sm:$0xff]
    %v180 = vld [vmem:[#allocation2 + $0x138] sm:$0xff]
    %v181 = vld [vmem:[#allocation2 + $0x140] sm:$0xff]
    %v182 = vld [vmem:[#allocation2 + $0x148] sm:$0xff]
    %v183 = vld [vmem:[#allocation2 + $0x150] sm:$0xff]
    %v184 = vld [vmem:[#allocation2 + $0x158] sm:$0xff]
    %v185 = vld [vmem:[#allocation2 + $0x160] sm:$0xff]
    %v186 = vld [vmem:[#allocation2 + $0x168] sm:$0xff]
    %v187 = vld [vmem:[#allocation2 + $0x170] sm:$0xff]
    %v188 = vld [vmem:[#allocation2 + $0x178] sm:$0xff]
    %v189 = vld [vmem:[#allocation2 + $0x180] sm:$0xff]
    %v190 = vld [vmem:[#allocation2 + $0x188] sm:$0xff]
    %v191 = vld [vmem:[#allocation2 + $0x190] sm:$0xff]
    %v192 = vld [vmem:[#allocation2 + $0x198] sm:$0xff]
    %v193 = vld [vmem:[#allocation2 + $0x1a0] sm:$0xff]
    %v194 = vld [vmem:[#allocation2 + $0x1a8] sm:$0xff]
    %v195 = vld [vmem:[#allocation2 + $0x1b0] sm:$0xff]
    %v196 = vld [vmem:[#allocation2 + $0x1b8] sm:$0xff]
    %v197 = vld [vmem:[#allocation2 + $0x1c0] sm:$0xff]
    %v198 = vld [vmem:[#allocation2 + $0x1c8] sm:$0xff]
    %v199 = vld [vmem:[#allocation2 + $0x1d0] sm:$0xff]
    %v200 = vld [vmem:[#allocation2 + $0x1d8] sm:$0xff]
    %v201 = vld [vmem:[#allocation2 + $0x1e0] sm:$0xff]
    %v202 = vld [vmem:[#allocation2 + $0x1e8] sm:$0xff]
    %v203 = vld [vmem:[#allocation2 + $0x1f0] sm:$0xff]
    %v204 = vld [vmem:[#allocation2 + $0x1f8] sm:$0xff]
    %v205 = vld [vmem:[#allocation2 + $0x200] sm:$0xff]
    %v206 = vld [vmem:[#allocation2 + $0x208] sm:$0xff]
    %v207 = vld [vmem:[#allocation2 + $0x210] sm:$0xff]
    %v208 = vld [vmem:[#allocation2 + $0x218] sm:$0xff]
    %v209 = vld [vmem:[#allocation2 + $0x220] sm:$0xff]
    %v210 = vld [vmem:[#allocation2 + $0x228] sm:$0xff]
    %v211 = vld [vmem:[#allocation2 + $0x230] sm:$0xff]
    %v212 = vld [vmem:[#allocation2 + $0x238] sm:$0xff]
    %v213 = vld [vmem:[#allocation2 + $0x240] sm:$0xff]
    %v214 = vld [vmem:[#allocation2 + $0x248] sm:$0xff]
    %v215 = vld [vmem:[#allocation2 + $0x250] sm:$0xff]
    %v216 = vld [vmem:[#allocation2 + $0x258] sm:$0xff]
    %v217 = vld [vmem:[#allocation2 + $0x260] sm:$0xff]
    %v218 = vld [vmem:[#allocation2 + $0x268] sm:$0xff]
    %v219 = vld [vmem:[#allocation2 + $0x270] sm:$0xff]
    %v220 = vld [vmem:[#allocation2 + $0x278] sm:$0xff]
    %v221 = vld [vmem:[#allocation2 + $0x280] sm:$0xff]
    %v222 = vld [vmem:[#allocation2 + $0x288] sm:$0xff]
    %v223 = vld [vmem:[#allocation2 + $0x290] sm:$0xff]
    %v224 = vld [vmem:[#allocation2 + $0x298] sm:$0xff]
    %v225 = vld [vmem:[#allocation2 + $0x2a0] sm:$0xff]
    %v226 = vld [vmem:[#allocation2 + $0x2a8] sm:$0xff]
    %v227 = vld [vmem:[#allocation2 + $0x2b0] sm:$0xff]
    %v228 = vld [vmem:[#allocation2 + $0x2b8] sm:$0xff]
    %v229 = vld [vmem:[#allocation2 + $0x2c0] sm:$0xff]
    %v230 = vld [vmem:[#allocation2 + $0x2c8] sm:$0xff]
    %v231 = vld [vmem:[#allocation2 + $0x2d0] sm:$0xff]
    %v232 = vld [vmem:[#allocation2 + $0x2d8] sm:$0xff]
    %v233 = vld [vmem:[#allocation2 + $0x2e0] sm:$0xff]
    %v234 = vld [vmem:[#allocation2 + $0x2e8] sm:$0xff]
    %v235 = vld [vmem:[#allocation2 + $0x2f0] sm:$0xff]
    %v236 = vld [vmem:[#allocation2 + $0x2f8] sm:$0xff]
    %v237 = vld [vmem:[#allocation2 + $0x300] sm:$0xff]
    %v238 = vld [vmem:[#allocation2 + $0x308] sm:$0xff]
    %v239 = vld [vmem:[#allocation2 + $0x310] sm:$0xff]
    %v240 = vld [vmem:[#allocation2 + $0x318] sm:$0xff]
    %v241 = vld [vmem:[#allocation2 + $0x320] sm:$0xff]
    %v242 = vld [vmem:[#allocation2 + $0x328] sm:$0xff]
    %v243 = vld [vmem:[#allocation2 + $0x330] sm:$0xff]
    %v244 = vld [vmem:[#allocation2 + $0x338] sm:$0xff]
    %v245 = vld [vmem:[#allocation2 + $0x340] sm:$0xff]
    %v246 = vld [vmem:[#allocation2 + $0x348] sm:$0xff]
    %v247 = vld [vmem:[#allocation2 + $0x350] sm:$0xff]
    %v248 = vld [vmem:[#allocation2 + $0x358] sm:$0xff]
    %v249 = vld [vmem:[#allocation2 + $0x360] sm:$0xff]
    %v250 = vld [vmem:[#allocation2 + $0x368] sm:$0xff]
    %v251 = vld [vmem:[#allocation2 + $0x370] sm:$0xff]
    %v252 = vld [vmem:[#allocation2 + $0x378] sm:$0xff]
    %v253 = vld [vmem:[#allocation2 + $0x380] sm:$0xff]
    %v254 = vld [vmem:[#allocation2 + $0x388] sm:$0xff]
    %v255 = vld [vmem:[#allocation2 + $0x390] sm:$0xff]
    %v256 = vld [vmem:[#allocation2 + $0x398] sm:$0xff]
    %v257 = vld [vmem:[#allocation2 + $0x3a0] sm:$0xff]
    %v258 = vld [vmem:[#allocation2 + $0x3a8] sm:$0xff]
    %v259 = vld [vmem:[#allocation2 + $0x3b0] sm:$0xff]
    %v260 = vld [vmem:[#allocation2 + $0x3b8] sm:$0xff]
    %v261 = vld [vmem:[#allocation2 + $0x3c0] sm:$0xff]
    %v262 = vld [vmem:[#allocation2 + $0x3c8] sm:$0xff]
    %v263 = vld [vmem:[#allocation2 + $0x3d0] sm:$0xff]
    %v264 = vld [vmem:[#allocation2 + $0x3d8] sm:$0xff]
    %v265 = vld [vmem:[#allocation2 + $0x3e0] sm:$0xff]
    %v266 = vld [vmem:[#allocation2 + $0x3e8] sm:$0xff]
    %v267 = vld [vmem:[#allocation2 + $0x3f0] sm:$0xff]
    %v268 = vld [vmem:[#allocation2 + $0x3f8] sm:$0xff]
    %v269 = vld [vmem:[#allocation2 + $0x400] sm:$0xff]
    %v270 = vld [vmem:[#allocation2 + $0x408] sm:$0xff]
    %v271 = vld [vmem:[#allocation2 + $0x410] sm:$0xff]
    %v272 = vld [vmem:[#allocation2 + $0x418] sm:$0xff]
    %v273 = vld [vmem:[#allocation2 + $0x420] sm:$0xff]
    %v274 = vld [vmem:[#allocation2 + $0x428] sm:$0xff]
    %v275 = vld [vmem:[#allocation2 + $0x430] sm:$0xff]
    %v276 = vld [vmem:[#allocation2 + $0x438] sm:$0xff]
    %v277 = vld [vmem:[#allocation2 + $0x440] sm:$0xff]
    %v278 = vld [vmem:[#allocation2 + $0x448] sm:$0xff]
    %v279 = vld [vmem:[#allocation2 + $0x450] sm:$0xff]
    %v280 = vld [vmem:[#allocation2 + $0x458] sm:$0xff]
    %v281 = vld [vmem:[#allocation2 + $0x460] sm:$0xff]
    %v282 = vld [vmem:[#allocation2 + $0x468] sm:$0xff]
    %v283 = vld [vmem:[#allocation2 + $0x470] sm:$0xff]
    %v284 = vld [vmem:[#allocation2 + $0x478] sm:$0xff]
    %v285 = vld [vmem:[#allocation2 + $0x480] sm:$0xff]
    %v286 = vld [vmem:[#allocation2 + $0x488] sm:$0xff]
    %v287 = vld [vmem:[#allocation2 + $0x490] sm:$0xff]
    %v288 = vld [vmem:[#allocation2 + $0x498] sm:$0xff]
    %v289 = vld [vmem:[#allocation2 + $0x4a0] sm:$0xff]
    %v290 = vld [vmem:[#allocation2 + $0x4a8] sm:$0xff]
    %v291 = vld [vmem:[#allocation2 + $0x4b0] sm:$0xff]
    %v292 = vld [vmem:[#allocation2 + $0x4b8] sm:$0xff]
    %v293 = vld [vmem:[#allocation2 + $0x4c0] sm:$0xff]
    %v294 = vld [vmem:[#allocation2 + $0x4c8] sm:$0xff]
    %v295 = vld [vmem:[#allocation2 + $0x4d0] sm:$0xff]
    %v296 = vld [vmem:[#allocation2 + $0x4d8] sm:$0xff]
    %v297 = vld [vmem:[#allocation2 + $0x4e0] sm:$0xff]
    %v298 = vld [vmem:[#allocation2 + $0x4e8] sm:$0xff]
    %v299 = vld [vmem:[#allocation2 + $0x4f0] sm:$0xff]
    %v300 = vld [vmem:[#allocation2 + $0x4f8] sm:$0xff]
    %v301 = vld [vmem:[#allocation2 + $0x500] sm:$0xff]
    %v302 = vld [vmem:[#allocation2 + $0x508] sm:$0xff]
    %v303 = vld [vmem:[#allocation2 + $0x510] sm:$0xff]
    %v304 = vld [vmem:[#allocation2 + $0x518] sm:$0xff]
    %v305 = vld [vmem:[#allocation2 + $0x520] sm:$0xff]
    %v306 = vld [vmem:[#allocation2 + $0x528] sm:$0xff]
    %v307 = vld [vmem:[#allocation2 + $0x530] sm:$0xff]
    %v308 = vld [vmem:[#allocation2 + $0x538] sm:$0xff]
    %v309 = vld [vmem:[#allocation2 + $0x540] sm:$0xff]
    %v310 = vld [vmem:[#allocation2 + $0x548] sm:$0xff]
    %v311 = vld [vmem:[#allocation2 + $0x550] sm:$0xff]
    %v312 = vld [vmem:[#allocation2 + $0x558] sm:$0xff]
    %v313 = vld [vmem:[#allocation2 + $0x560] sm:$0xff]
    %v314 = vld [vmem:[#allocation2 + $0x568] sm:$0xff]
    %v315 = vld [vmem:[#allocation2 + $0x570] sm:$0xff]
    %v316 = vld [vmem:[#allocation2 + $0x578] sm:$0xff]
    %v317 = vld [vmem:[#allocation2 + $0x580] sm:$0xff]
    %v318 = vld [vmem:[#allocation2 + $0x588] sm:$0xff]
    %v319 = vld [vmem:[#allocation2 + $0x590] sm:$0xff]
    %v320 = vld [vmem:[#allocation2 + $0x598] sm:$0xff]
    %v321 = vld [vmem:[#allocation2 + $0x5a0] sm:$0xff]
    %v322 = vld [vmem:[#allocation2 + $0x5a8] sm:$0xff]
    %v323 = vld [vmem:[#allocation2 + $0x5b0] sm:$0xff]
    %v324 = vld [vmem:[#allocation2 + $0x5b8] sm:$0xff]
    %v325 = vld [vmem:[#allocation2 + $0x5c0] sm:$0xff]
    %v326 = vld [vmem:[#allocation2 + $0x5c8] sm:$0xff]
    %v327 = vld [vmem:[#allocation2 + $0x5d0] sm:$0xff]
    %v328 = vld [vmem:[#allocation2 + $0x5d8] sm:$0xff]
    %v329 = vld [vmem:[#allocation2 + $0x5e0] sm:$0xff]
    %v330 = vld [vmem:[#allocation2 + $0x5e8] sm:$0xff]
    %v331 = vld [vmem:[#allocation2 + $0x5f0] sm:$0xff]
    %v332 = vld [vmem:[#allocation2 + $0x5f8] sm:$0xff]
    %v333 = vld [vmem:[#allocation2 + $0x600] sm:$0xff]
    %v334 = vld [vmem:[#allocation2 + $0x608] sm:$0xff]
    %v335 = vld [vmem:[#allocation2 + $0x610] sm:$0xff]
    %v336 = vld [vmem:[#allocation2 + $0x618] sm:$0xff]
    %v337 = vld [vmem:[#allocation2 + $0x620] sm:$0xff]
    %v338 = vld [vmem:[#allocation2 + $0x628] sm:$0xff]
    %v339 = vld [vmem:[#allocation2 + $0x630] sm:$0xff]
    %v340 = vld [vmem:[#allocation2 + $0x638] sm:$0xff]
    %v341 = vld [vmem:[#allocation2 + $0x640] sm:$0xff]
    %v342 = vld [vmem:[#allocation2 + $0x648] sm:$0xff]
    %v343 = vld [vmem:[#allocation2 + $0x650] sm:$0xff]
    %v344 = vld [vmem:[#allocation2 + $0x658] sm:$0xff]
    %v345 = vld [vmem:[#allocation2 + $0x660] sm:$0xff]
    %v346 = vld [vmem:[#allocation2 + $0x668] sm:$0xff]
    %v347 = vld [vmem:[#allocation2 + $0x670] sm:$0xff]
    %v348 = vld [vmem:[#allocation2 + $0x678] sm:$0xff]
    %v349 = vld [vmem:[#allocation2 + $0x680] sm:$0xff]
    %v350 = vld [vmem:[#allocation2 + $0x688] sm:$0xff]
    %v351 = vld [vmem:[#allocation2 + $0x690] sm:$0xff]
    %v352 = vld [vmem:[#allocation2 + $0x698] sm:$0xff]
    %v353 = vld [vmem:[#allocation2 + $0x6a0] sm:$0xff]
    %v354 = vld [vmem:[#allocation2 + $0x6a8] sm:$0xff]
    %v355 = vld [vmem:[#allocation2 + $0x6b0] sm:$0xff]
    %v356 = vld [vmem:[#allocation2 + $0x6b8] sm:$0xff]
    %v357 = vld [vmem:[#allocation2 + $0x6c0] sm:$0xff]
    %v358 = vld [vmem:[#allocation2 + $0x6c8] sm:$0xff]
    %v359 = vld [vmem:[#allocation2 + $0x6d0] sm:$0xff]
    %v360 = vld [vmem:[#allocation2 + $0x6d8] sm:$0xff]
    %v361 = vld [vmem:[#allocation2 + $0x6e0] sm:$0xff]
    %v362 = vld [vmem:[#allocation2 + $0x6e8] sm:$0xff]
    %v363 = vld [vmem:[#allocation2 + $0x6f0] sm:$0xff]
    %v364 = vld [vmem:[#allocation2 + $0x6f8] sm:$0xff]
    %v365 = vld [vmem:[#allocation2 + $0x700] sm:$0xff]
    %v366 = vld [vmem:[#allocation2 + $0x708] sm:$0xff]
    %v367 = vld [vmem:[#allocation2 + $0x710] sm:$0xff]
    %v368 = vld [vmem:[#allocation2 + $0x718] sm:$0xff]
    %v369 = vld [vmem:[#allocation2 + $0x720] sm:$0xff]
    %v370 = vld [vmem:[#allocation2 + $0x728] sm:$0xff]
    %v371 = vld [vmem:[#allocation2 + $0x730] sm:$0xff]
    %v372 = vld [vmem:[#allocation2 + $0x738] sm:$0xff]
    %v373 = vld [vmem:[#allocation2 + $0x740] sm:$0xff]
    %v374 = vld [vmem:[#allocation2 + $0x748] sm:$0xff]
    %v375 = vld [vmem:[#allocation2 + $0x750] sm:$0xff]
    %v376 = vld [vmem:[#allocation2 + $0x758] sm:$0xff]
    %v377 = vld [vmem:[#allocation2 + $0x760] sm:$0xff]
    %v378 = vld [vmem:[#allocation2 + $0x768] sm:$0xff]
    %v379 = vld [vmem:[#allocation2 + $0x770] sm:$0xff]
    %v380 = vld [vmem:[#allocation2 + $0x778] sm:$0xff]
    %v381 = vld [vmem:[#allocation2 + $0x780] sm:$0xff]
    %v382 = vld [vmem:[#allocation2 + $0x788] sm:$0xff]
    %v383 = vld [vmem:[#allocation2 + $0x790] sm:$0xff]
    %v384 = vld [vmem:[#allocation2 + $0x798] sm:$0xff]
    %v385 = vld [vmem:[#allocation2 + $0x7a0] sm:$0xff]
    %v386 = vld [vmem:[#allocation2 + $0x7a8] sm:$0xff]
    %v387 = vld [vmem:[#allocation2 + $0x7b0] sm:$0xff]
    %v388 = vld [vmem:[#allocation2 + $0x7b8] sm:$0xff]
    %v389 = vld [vmem:[#allocation2 + $0x7c0] sm:$0xff]
    %v390 = vld [vmem:[#allocation2 + $0x7c8] sm:$0xff]
    %v391 = vld [vmem:[#allocation2 + $0x7d0] sm:$0xff]
    %v392 = vld [vmem:[#allocation2 + $0x7d8] sm:$0xff]
    %v393 = vld [vmem:[#allocation2 + $0x7e0] sm:$0xff]
    %v394 = vld [vmem:[#allocation2 + $0x7e8] sm:$0xff]
    %v395 = vld [vmem:[#allocation2 + $0x7f0] sm:$0xff]
    %v396 = vld [vmem:[#allocation2 + $0x7f8] sm:$0xff]
    %v653 = vunpack.c.l.b16 %v141
    %v654 = vunpack.c.h.b16 %v141
    %v655 = vunpack.c.l.b16 %v142
    %v656 = vunpack.c.h.b16 %v142
    %v657 = vunpack.c.l.b16 %v143
    %v658 = vunpack.c.h.b16 %v143
    %v659 = vunpack.c.l.b16 %v144
    %v660 = vunpack.c.h.b16 %v144
    %v661 = vunpack.c.l.b16 %v145
    %v662 = vunpack.c.h.b16 %v145
    %v663 = vunpack.c.l.b16 %v146
    %v664 = vunpack.c.h.b16 %v146
    %v665 = vunpack.c.l.b16 %v147
    %v666 = vunpack.c.h.b16 %v147
    %v667 = vunpack.c.l.b16 %v148
    %v668 = vunpack.c.h.b16 %v148
    %v669 = vunpack.c.l.b16 %v149
    %v670 = vunpack.c.h.b16 %v149
    %v671 = vunpack.c.l.b16 %v150
    %v672 = vunpack.c.h.b16 %v150
    %v673 = vunpack.c.l.b16 %v151
    %v674 = vunpack.c.h.b16 %v151
    %v675 = vunpack.c.l.b16 %v152
    %v676 = vunpack.c.h.b16 %v152
    %v677 = vunpack.c.l.b16 %v153
    %v678 = vunpack.c.h.b16 %v153
    %v679 = vunpack.c.l.b16 %v154
    %v680 = vunpack.c.h.b16 %v154
    %v681 = vunpack.c.l.b16 %v155
    %v682 = vunpack.c.h.b16 %v155
    %v683 = vunpack.c.l.b16 %v156
    %v684 = vunpack.c.h.b16 %v156
    %v685 = vunpack.c.l.b16 %v157
    %v686 = vunpack.c.h.b16 %v157
    %v687 = vunpack.c.l.b16 %v158
    %v688 = vunpack.c.h.b16 %v158
    %v689 = vunpack.c.l.b16 %v159
    %v690 = vunpack.c.h.b16 %v159
    %v691 = vunpack.c.l.b16 %v160
    %v692 = vunpack.c.h.b16 %v160
    %v693 = vunpack.c.l.b16 %v161
    %v694 = vunpack.c.h.b16 %v161
    %v695 = vunpack.c.l.b16 %v162
    %v696 = vunpack.c.h.b16 %v162
    %v697 = vunpack.c.l.b16 %v163
    %v698 = vunpack.c.h.b16 %v163
    %v699 = vunpack.c.l.b16 %v164
    %v700 = vunpack.c.h.b16 %v164
    %v701 = vunpack.c.l.b16 %v165
    %v702 = vunpack.c.h.b16 %v165
    %v703 = vunpack.c.l.b16 %v166
    %v704 = vunpack.c.h.b16 %v166
    %v705 = vunpack.c.l.b16 %v167
    %v706 = vunpack.c.h.b16 %v167
    %v707 = vunpack.c.l.b16 %v168
    %v708 = vunpack.c.h.b16 %v168
    %v709 = vunpack.c.l.b16 %v169
    %v710 = vunpack.c.h.b16 %v169
    %v711 = vunpack.c.l.b16 %v170
    %v712 = vunpack.c.h.b16 %v170
    %v713 = vunpack.c.l.b16 %v171
    %v714 = vunpack.c.h.b16 %v171
    %v715 = vunpack.c.l.b16 %v172
    %v716 = vunpack.c.h.b16 %v172
    %v717 = vunpack.c.l.b16 %v173
    %v718 = vunpack.c.h.b16 %v173
    %v719 = vunpack.c.l.b16 %v174
    %v720 = vunpack.c.h.b16 %v174
    %v721 = vunpack.c.l.b16 %v175
    %v722 = vunpack.c.h.b16 %v175
    %v723 = vunpack.c.l.b16 %v176
    %v724 = vunpack.c.h.b16 %v176
    %v725 = vunpack.c.l.b16 %v177
    %v726 = vunpack.c.h.b16 %v177
    %v727 = vunpack.c.l.b16 %v178
    %v728 = vunpack.c.h.b16 %v178
    %v729 = vunpack.c.l.b16 %v179
    %v730 = vunpack.c.h.b16 %v179
    %v731 = vunpack.c.l.b16 %v180
    %v732 = vunpack.c.h.b16 %v180
    %v733 = vunpack.c.l.b16 %v181
    %v734 = vunpack.c.h.b16 %v181
    %v735 = vunpack.c.l.b16 %v182
    %v736 = vunpack.c.h.b16 %v182
    %v737 = vunpack.c.l.b16 %v183
    %v738 = vunpack.c.h.b16 %v183
    %v739 = vunpack.c.l.b16 %v184
    %v740 = vunpack.c.h.b16 %v184
    %v741 = vunpack.c.l.b16 %v185
    %v742 = vunpack.c.h.b16 %v185
    %v743 = vunpack.c.l.b16 %v186
    %v744 = vunpack.c.h.b16 %v186
    %v745 = vunpack.c.l.b16 %v187
    %v746 = vunpack.c.h.b16 %v187
    %v747 = vunpack.c.l.b16 %v188
    %v748 = vunpack.c.h.b16 %v188
    %v749 = vunpack.c.l.b16 %v189
    %v750 = vunpack.c.h.b16 %v189
    %v751 = vunpack.c.l.b16 %v190
    %v752 = vunpack.c.h.b16 %v190
    %v753 = vunpack.c.l.b16 %v191
    %v754 = vunpack.c.h.b16 %v191
    %v755 = vunpack.c.l.b16 %v192
    %v756 = vunpack.c.h.b16 %v192
    %v757 = vunpack.c.l.b16 %v193
    %v758 = vunpack.c.h.b16 %v193
    %v759 = vunpack.c.l.b16 %v194
    %v760 = vunpack.c.h.b16 %v194
    %v761 = vunpack.c.l.b16 %v195
    %v762 = vunpack.c.h.b16 %v195
    %v763 = vunpack.c.l.b16 %v196
    %v764 = vunpack.c.h.b16 %v196
    %v765 = vunpack.c.l.b16 %v197
    %v766 = vunpack.c.h.b16 %v197
    %v767 = vunpack.c.l.b16 %v198
    %v768 = vunpack.c.h.b16 %v198
    %v769 = vunpack.c.l.b16 %v199
    %v770 = vunpack.c.h.b16 %v199
    %v771 = vunpack.c.l.b16 %v200
    %v772 = vunpack.c.h.b16 %v200
    %v773 = vunpack.c.l.b16 %v201
    %v774 = vunpack.c.h.b16 %v201
    %v775 = vunpack.c.l.b16 %v202
    %v776 = vunpack.c.h.b16 %v202
    %v777 = vunpack.c.l.b16 %v203
    %v778 = vunpack.c.h.b16 %v203
    %v779 = vunpack.c.l.b16 %v204
    %v780 = vunpack.c.h.b16 %v204
    %v781 = vunpack.c.l.b16 %v205
    %v782 = vunpack.c.h.b16 %v205
    %v783 = vunpack.c.l.b16 %v206
    %v784 = vunpack.c.h.b16 %v206
    %v785 = vunpack.c.l.b16 %v207
    %v786 = vunpack.c.h.b16 %v207
    %v787 = vunpack.c.l.b16 %v208
    %v788 = vunpack.c.h.b16 %v208
    %v789 = vunpack.c.l.b16 %v209
    %v790 = vunpack.c.h.b16 %v209
    %v791 = vunpack.c.l.b16 %v210
    %v792 = vunpack.c.h.b16 %v210
    %v793 = vunpack.c.l.b16 %v211
    %v794 = vunpack.c.h.b16 %v211
    %v795 = vunpack.c.l.b16 %v212
    %v796 = vunpack.c.h.b16 %v212
    %v797 = vunpack.c.l.b16 %v213
    %v798 = vunpack.c.h.b16 %v213
    %v799 = vunpack.c.l.b16 %v214
    %v800 = vunpack.c.h.b16 %v214
    %v801 = vunpack.c.l.b16 %v215
    %v802 = vunpack.c.h.b16 %v215
    %v803 = vunpack.c.l.b16 %v216
    %v804 = vunpack.c.h.b16 %v216
    %v805 = vunpack.c.l.b16 %v217
    %v806 = vunpack.c.h.b16 %v217
    %v807 = vunpack.c.l.b16 %v218
    %v808 = vunpack.c.h.b16 %v218
    %v809 = vunpack.c.l.b16 %v219
    %v810 = vunpack.c.h.b16 %v219
    %v811 = vunpack.c.l.b16 %v220
    %v812 = vunpack.c.h.b16 %v220
    %v813 = vunpack.c.l.b16 %v221
    %v814 = vunpack.c.h.b16 %v221
    %v815 = vunpack.c.l.b16 %v222
    %v816 = vunpack.c.h.b16 %v222
    %v817 = vunpack.c.l.b16 %v223
    %v818 = vunpack.c.h.b16 %v223
    %v819 = vunpack.c.l.b16 %v224
    %v820 = vunpack.c.h.b16 %v224
    %v821 = vunpack.c.l.b16 %v225
    %v822 = vunpack.c.h.b16 %v225
    %v823 = vunpack.c.l.b16 %v226
    %v824 = vunpack.c.h.b16 %v226
    %v825 = vunpack.c.l.b16 %v227
    %v826 = vunpack.c.h.b16 %v227
    %v827 = vunpack.c.l.b16 %v228
    %v828 = vunpack.c.h.b16 %v228
    %v829 = vunpack.c.l.b16 %v229
    %v830 = vunpack.c.h.b16 %v229
    %v831 = vunpack.c.l.b16 %v230
    %v832 = vunpack.c.h.b16 %v230
    %v833 = vunpack.c.l.b16 %v231
    %v834 = vunpack.c.h.b16 %v231
    %v835 = vunpack.c.l.b16 %v232
    %v836 = vunpack.c.h.b16 %v232
    %v837 = vunpack.c.l.b16 %v233
    %v838 = vunpack.c.h.b16 %v233
    %v839 = vunpack.c.l.b16 %v234
    %v840 = vunpack.c.h.b16 %v234
    %v841 = vunpack.c.l.b16 %v235
    %v842 = vunpack.c.h.b16 %v235
    %v843 = vunpack.c.l.b16 %v236
    %v844 = vunpack.c.h.b16 %v236
    %v845 = vunpack.c.l.b16 %v237
    %v846 = vunpack.c.h.b16 %v237
    %v847 = vunpack.c.l.b16 %v238
    %v848 = vunpack.c.h.b16 %v238
    %v849 = vunpack.c.l.b16 %v239
    %v850 = vunpack.c.h.b16 %v239
    %v851 = vunpack.c.l.b16 %v240
    %v852 = vunpack.c.h.b16 %v240
    %v853 = vunpack.c.l.b16 %v241
    %v854 = vunpack.c.h.b16 %v241
    %v855 = vunpack.c.l.b16 %v242
    %v856 = vunpack.c.h.b16 %v242
    %v857 = vunpack.c.l.b16 %v243
    %v858 = vunpack.c.h.b16 %v243
    %v859 = vunpack.c.l.b16 %v244
    %v860 = vunpack.c.h.b16 %v244
    %v861 = vunpack.c.l.b16 %v245
    %v862 = vunpack.c.h.b16 %v245
    %v863 = vunpack.c.l.b16 %v246
    %v864 = vunpack.c.h.b16 %v246
    %v865 = vunpack.c.l.b16 %v247
    %v866 = vunpack.c.h.b16 %v247
    %v867 = vunpack.c.l.b16 %v248
    %v868 = vunpack.c.h.b16 %v248
    %v869 = vunpack.c.l.b16 %v249
    %v870 = vunpack.c.h.b16 %v249
    %v871 = vunpack.c.l.b16 %v250
    %v872 = vunpack.c.h.b16 %v250
    %v873 = vunpack.c.l.b16 %v251
    %v874 = vunpack.c.h.b16 %v251
    %v875 = vunpack.c.l.b16 %v252
    %v876 = vunpack.c.h.b16 %v252
    %v877 = vunpack.c.l.b16 %v253
    %v878 = vunpack.c.h.b16 %v253
    %v879 = vunpack.c.l.b16 %v254
    %v880 = vunpack.c.h.b16 %v254
    %v881 = vunpack.c.l.b16 %v255
    %v882 = vunpack.c.h.b16 %v255
    %v883 = vunpack.c.l.b16 %v256
    %v884 = vunpack.c.h.b16 %v256
    %v885 = vunpack.c.l.b16 %v257
    %v886 = vunpack.c.h.b16 %v257
    %v887 = vunpack.c.l.b16 %v258
    %v888 = vunpack.c.h.b16 %v258
    %v889 = vunpack.c.l.b16 %v259
    %v890 = vunpack.c.h.b16 %v259
    %v891 = vunpack.c.l.b16 %v260
    %v892 = vunpack.c.h.b16 %v260
    %v893 = vunpack.c.l.b16 %v261
    %v894 = vunpack.c.h.b16 %v261
    %v895 = vunpack.c.l.b16 %v262
    %v896 = vunpack.c.h.b16 %v262
    %v897 = vunpack.c.l.b16 %v263
    %v898 = vunpack.c.h.b16 %v263
    %v899 = vunpack.c.l.b16 %v264
    %v900 = vunpack.c.h.b16 %v264
    %v901 = vunpack.c.l.b16 %v265
    %v902 = vunpack.c.h.b16 %v265
    %v903 = vunpack.c.l.b16 %v266
    %v904 = vunpack.c.h.b16 %v266
    %v905 = vunpack.c.l.b16 %v267
    %v906 = vunpack.c.h.b16 %v267
    %v907 = vunpack.c.l.b16 %v268
    %v908 = vunpack.c.h.b16 %v268
    %v909 = vunpack.c.l.b16 %v269
    %v910 = vunpack.c.h.b16 %v269
    %v911 = vunpack.c.l.b16 %v270
    %v912 = vunpack.c.h.b16 %v270
    %v913 = vunpack.c.l.b16 %v271
    %v914 = vunpack.c.h.b16 %v271
    %v915 = vunpack.c.l.b16 %v272
    %v916 = vunpack.c.h.b16 %v272
    %v917 = vunpack.c.l.b16 %v273
    %v918 = vunpack.c.h.b16 %v273
    %v919 = vunpack.c.l.b16 %v274
    %v920 = vunpack.c.h.b16 %v274
    %v921 = vunpack.c.l.b16 %v275
    %v922 = vunpack.c.h.b16 %v275
    %v923 = vunpack.c.l.b16 %v276
    %v924 = vunpack.c.h.b16 %v276
    %v925 = vunpack.c.l.b16 %v277
    %v926 = vunpack.c.h.b16 %v277
    %v927 = vunpack.c.l.b16 %v278
    %v928 = vunpack.c.h.b16 %v278
    %v929 = vunpack.c.l.b16 %v279
    %v930 = vunpack.c.h.b16 %v279
    %v931 = vunpack.c.l.b16 %v280
    %v932 = vunpack.c.h.b16 %v280
    %v933 = vunpack.c.l.b16 %v281
    %v934 = vunpack.c.h.b16 %v281
    %v935 = vunpack.c.l.b16 %v282
    %v936 = vunpack.c.h.b16 %v282
    %v937 = vunpack.c.l.b16 %v283
    %v938 = vunpack.c.h.b16 %v283
    %v939 = vunpack.c.l.b16 %v284
    %v940 = vunpack.c.h.b16 %v284
    %v941 = vunpack.c.l.b16 %v285
    %v942 = vunpack.c.h.b16 %v285
    %v943 = vunpack.c.l.b16 %v286
    %v944 = vunpack.c.h.b16 %v286
    %v945 = vunpack.c.l.b16 %v287
    %v946 = vunpack.c.h.b16 %v287
    %v947 = vunpack.c.l.b16 %v288
    %v948 = vunpack.c.h.b16 %v288
    %v949 = vunpack.c.l.b16 %v289
    %v950 = vunpack.c.h.b16 %v289
    %v951 = vunpack.c.l.b16 %v290
    %v952 = vunpack.c.h.b16 %v290
    %v953 = vunpack.c.l.b16 %v291
    %v954 = vunpack.c.h.b16 %v291
    %v955 = vunpack.c.l.b16 %v292
    %v956 = vunpack.c.h.b16 %v292
    %v957 = vunpack.c.l.b16 %v293
    %v958 = vunpack.c.h.b16 %v293
    %v959 = vunpack.c.l.b16 %v294
    %v960 = vunpack.c.h.b16 %v294
    %v961 = vunpack.c.l.b16 %v295
    %v962 = vunpack.c.h.b16 %v295
    %v963 = vunpack.c.l.b16 %v296
    %v964 = vunpack.c.h.b16 %v296
    %v965 = vunpack.c.l.b16 %v297
    %v966 = vunpack.c.h.b16 %v297
    %v967 = vunpack.c.l.b16 %v298
    %v968 = vunpack.c.h.b16 %v298
    %v969 = vunpack.c.l.b16 %v299
    %v970 = vunpack.c.h.b16 %v299
    %v971 = vunpack.c.l.b16 %v300
    %v972 = vunpack.c.h.b16 %v300
    %v973 = vunpack.c.l.b16 %v301
    %v974 = vunpack.c.h.b16 %v301
    %v975 = vunpack.c.l.b16 %v302
    %v976 = vunpack.c.h.b16 %v302
    %v977 = vunpack.c.l.b16 %v303
    %v978 = vunpack.c.h.b16 %v303
    %v979 = vunpack.c.l.b16 %v304
    %v980 = vunpack.c.h.b16 %v304
    %v981 = vunpack.c.l.b16 %v305
    %v982 = vunpack.c.h.b16 %v305
    %v983 = vunpack.c.l.b16 %v306
    %v984 = vunpack.c.h.b16 %v306
    %v985 = vunpack.c.l.b16 %v307
    %v986 = vunpack.c.h.b16 %v307
    %v987 = vunpack.c.l.b16 %v308
    %v988 = vunpack.c.h.b16 %v308
    %v989 = vunpack.c.l.b16 %v309
    %v990 = vunpack.c.h.b16 %v309
    %v991 = vunpack.c.l.b16 %v310
    %v992 = vunpack.c.h.b16 %v310
    %v993 = vunpack.c.l.b16 %v311
    %v994 = vunpack.c.h.b16 %v311
    %v995 = vunpack.c.l.b16 %v312
    %v996 = vunpack.c.h.b16 %v312
    %v997 = vunpack.c.l.b16 %v313
    %v998 = vunpack.c.h.b16 %v313
    %v999 = vunpack.c.l.b16 %v314
    %v1000 = vunpack.c.h.b16 %v314
    %v1001 = vunpack.c.l.b16 %v315
    %v1002 = vunpack.c.h.b16 %v315
    %v1003 = vunpack.c.l.b16 %v316
    %v1004 = vunpack.c.h.b16 %v316
    %v1005 = vunpack.c.l.b16 %v317
    %v1006 = vunpack.c.h.b16 %v317
    %v1007 = vunpack.c.l.b16 %v318
    %v1008 = vunpack.c.h.b16 %v318
    %v1009 = vunpack.c.l.b16 %v319
    %v1010 = vunpack.c.h.b16 %v319
    %v1011 = vunpack.c.l.b16 %v320
    %v1012 = vunpack.c.h.b16 %v320
    %v1013 = vunpack.c.l.b16 %v321
    %v1014 = vunpack.c.h.b16 %v321
    %v1015 = vunpack.c.l.b16 %v322
    %v1016 = vunpack.c.h.b16 %v322
    %v1017 = vunpack.c.l.b16 %v323
    %v1018 = vunpack.c.h.b16 %v323
    %v1019 = vunpack.c.l.b16 %v324
    %v1020 = vunpack.c.h.b16 %v324
    %v1021 = vunpack.c.l.b16 %v325
    %v1022 = vunpack.c.h.b16 %v325
    %v1023 = vunpack.c.l.b16 %v326
    %v1024 = vunpack.c.h.b16 %v326
    %v1025 = vunpack.c.l.b16 %v327
    %v1026 = vunpack.c.h.b16 %v327
    %v1027 = vunpack.c.l.b16 %v328
    %v1028 = vunpack.c.h.b16 %v328
    %v1029 = vunpack.c.l.b16 %v329
    %v1030 = vunpack.c.h.b16 %v329
    %v1031 = vunpack.c.l.b16 %v330
    %v1032 = vunpack.c.h.b16 %v330
    %v1033 = vunpack.c.l.b16 %v331
    %v1034 = vunpack.c.h.b16 %v331
    %v1035 = vunpack.c.l.b16 %v332
    %v1036 = vunpack.c.h.b16 %v332
    %v1037 = vunpack.c.l.b16 %v333
    %v1038 = vunpack.c.h.b16 %v333
    %v1039 = vunpack.c.l.b16 %v334
    %v1040 = vunpack.c.h.b16 %v334
    %v1041 = vunpack.c.l.b16 %v335
    %v1042 = vunpack.c.h.b16 %v335
    %v1043 = vunpack.c.l.b16 %v336
    %v1044 = vunpack.c.h.b16 %v336
    %v1045 = vunpack.c.l.b16 %v337
    %v1046 = vunpack.c.h.b16 %v337
    %v1047 = vunpack.c.l.b16 %v338
    %v1048 = vunpack.c.h.b16 %v338
    %v1049 = vunpack.c.l.b16 %v339
    %v1050 = vunpack.c.h.b16 %v339
    %v1051 = vunpack.c.l.b16 %v340
    %v1052 = vunpack.c.h.b16 %v340
    %v1053 = vunpack.c.l.b16 %v341
    %v1054 = vunpack.c.h.b16 %v341
    %v1055 = vunpack.c.l.b16 %v342
    %v1056 = vunpack.c.h.b16 %v342
    %v1057 = vunpack.c.l.b16 %v343
    %v1058 = vunpack.c.h.b16 %v343
    %v1059 = vunpack.c.l.b16 %v344
    %v1060 = vunpack.c.h.b16 %v344
    %v1061 = vunpack.c.l.b16 %v345
    %v1062 = vunpack.c.h.b16 %v345
    %v1063 = vunpack.c.l.b16 %v346
    %v1064 = vunpack.c.h.b16 %v346
    %v1065 = vunpack.c.l.b16 %v347
    %v1066 = vunpack.c.h.b16 %v347
    %v1067 = vunpack.c.l.b16 %v348
    %v1068 = vunpack.c.h.b16 %v348
    %v1069 = vunpack.c.l.b16 %v349
    %v1070 = vunpack.c.h.b16 %v349
    %v1071 = vunpack.c.l.b16 %v350
    %v1072 = vunpack.c.h.b16 %v350
    %v1073 = vunpack.c.l.b16 %v351
    %v1074 = vunpack.c.h.b16 %v351
    %v1075 = vunpack.c.l.b16 %v352
    %v1076 = vunpack.c.h.b16 %v352
    %v1077 = vunpack.c.l.b16 %v353
    %v1078 = vunpack.c.h.b16 %v353
    %v1079 = vunpack.c.l.b16 %v354
    %v1080 = vunpack.c.h.b16 %v354
    %v1081 = vunpack.c.l.b16 %v355
    %v1082 = vunpack.c.h.b16 %v355
    %v1083 = vunpack.c.l.b16 %v356
    %v1084 = vunpack.c.h.b16 %v356
    %v1085 = vunpack.c.l.b16 %v357
    %v1086 = vunpack.c.h.b16 %v357
    %v1087 = vunpack.c.l.b16 %v358
    %v1088 = vunpack.c.h.b16 %v358
    %v1089 = vunpack.c.l.b16 %v359
    %v1090 = vunpack.c.h.b16 %v359
    %v1091 = vunpack.c.l.b16 %v360
    %v1092 = vunpack.c.h.b16 %v360
    %v1093 = vunpack.c.l.b16 %v361
    %v1094 = vunpack.c.h.b16 %v361
    %v1095 = vunpack.c.l.b16 %v362
    %v1096 = vunpack.c.h.b16 %v362
    %v1097 = vunpack.c.l.b16 %v363
    %v1098 = vunpack.c.h.b16 %v363
    %v1099 = vunpack.c.l.b16 %v364
    %v1100 = vunpack.c.h.b16 %v364
    %v1101 = vunpack.c.l.b16 %v365
    %v1102 = vunpack.c.h.b16 %v365
    %v1103 = vunpack.c.l.b16 %v366
    %v1104 = vunpack.c.h.b16 %v366
    %v1105 = vunpack.c.l.b16 %v367
    %v1106 = vunpack.c.h.b16 %v367
    %v1107 = vunpack.c.l.b16 %v368
    %v1108 = vunpack.c.h.b16 %v368
    %v1109 = vunpack.c.l.b16 %v369
    %v1110 = vunpack.c.h.b16 %v369
    %v1111 = vunpack.c.l.b16 %v370
    %v1112 = vunpack.c.h.b16 %v370
    %v1113 = vunpack.c.l.b16 %v371
    %v1114 = vunpack.c.h.b16 %v371
    %v1115 = vunpack.c.l.b16 %v372
    %v1116 = vunpack.c.h.b16 %v372
    %v1117 = vunpack.c.l.b16 %v373
    %v1118 = vunpack.c.h.b16 %v373
    %v1119 = vunpack.c.l.b16 %v374
    %v1120 = vunpack.c.h.b16 %v374
    %v1121 = vunpack.c.l.b16 %v375
    %v1122 = vunpack.c.h.b16 %v375
    %v1123 = vunpack.c.l.b16 %v376
    %v1124 = vunpack.c.h.b16 %v376
    %v1125 = vunpack.c.l.b16 %v377
    %v1126 = vunpack.c.h.b16 %v377
    %v1127 = vunpack.c.l.b16 %v378
    %v1128 = vunpack.c.h.b16 %v378
    %v1129 = vunpack.c.l.b16 %v379
    %v1130 = vunpack.c.h.b16 %v379
    %v1131 = vunpack.c.l.b16 %v380
    %v1132 = vunpack.c.h.b16 %v380
    %v1133 = vunpack.c.l.b16 %v381
    %v1134 = vunpack.c.h.b16 %v381
    %v1135 = vunpack.c.l.b16 %v382
    %v1136 = vunpack.c.h.b16 %v382
    %v1137 = vunpack.c.l.b16 %v383
    %v1138 = vunpack.c.h.b16 %v383
    %v1139 = vunpack.c.l.b16 %v384
    %v1140 = vunpack.c.h.b16 %v384
    %v1141 = vunpack.c.l.b16 %v385
    %v1142 = vunpack.c.h.b16 %v385
    %v1143 = vunpack.c.l.b16 %v386
    %v1144 = vunpack.c.h.b16 %v386
    %v1145 = vunpack.c.l.b16 %v387
    %v1146 = vunpack.c.h.b16 %v387
    %v1147 = vunpack.c.l.b16 %v388
    %v1148 = vunpack.c.h.b16 %v388
    %v1149 = vunpack.c.l.b16 %v389
    %v1150 = vunpack.c.h.b16 %v389
    %v1151 = vunpack.c.l.b16 %v390
    %v1152 = vunpack.c.h.b16 %v390
    %v1153 = vunpack.c.l.b16 %v391
    %v1154 = vunpack.c.h.b16 %v391
    %v1155 = vunpack.c.l.b16 %v392
    %v1156 = vunpack.c.h.b16 %v392
    %v1157 = vunpack.c.l.b16 %v393
    %v1158 = vunpack.c.h.b16 %v393
    %v1159 = vunpack.c.l.b16 %v394
    %v1160 = vunpack.c.h.b16 %v394
    %v1161 = vunpack.c.l.b16 %v395
    %v1162 = vunpack.c.h.b16 %v395
    %v1163 = vunpack.c.l.b16 %v396
    %v1164 = vunpack.c.h.b16 %v396
    %v1165 = vpack.c.b16 %v657, %v653
    %v1166 = vpack.c.b16 %v658, %v654
    %v1167 = vpack.c.b16 %v659, %v655
    %v1168 = vpack.c.b16 %v660, %v656
    %v1169 = vpack.c.b16 %v665, %v661
    %v1170 = vpack.c.b16 %v666, %v662
    %v1171 = vpack.c.b16 %v667, %v663
    %v1172 = vpack.c.b16 %v668, %v664
    %v1173 = vpack.c.b16 %v673, %v669
    %v1174 = vpack.c.b16 %v674, %v670
    %v1175 = vpack.c.b16 %v675, %v671
    %v1176 = vpack.c.b16 %v676, %v672
    %v1177 = vpack.c.b16 %v681, %v677
    %v1178 = vpack.c.b16 %v682, %v678
    %v1179 = vpack.c.b16 %v683, %v679
    %v1180 = vpack.c.b16 %v684, %v680
    %v1181 = vpack.c.b16 %v689, %v685
    %v1182 = vpack.c.b16 %v690, %v686
    %v1183 = vpack.c.b16 %v691, %v687
    %v1184 = vpack.c.b16 %v692, %v688
    %v1185 = vpack.c.b16 %v697, %v693
    %v1186 = vpack.c.b16 %v698, %v694
    %v1187 = vpack.c.b16 %v699, %v695
    %v1188 = vpack.c.b16 %v700, %v696
    %v1189 = vpack.c.b16 %v705, %v701
    %v1190 = vpack.c.b16 %v706, %v702
    %v1191 = vpack.c.b16 %v707, %v703
    %v1192 = vpack.c.b16 %v708, %v704
    %v1193 = vpack.c.b16 %v713, %v709
    %v1194 = vpack.c.b16 %v714, %v710
    %v1195 = vpack.c.b16 %v715, %v711
    %v1196 = vpack.c.b16 %v716, %v712
    %v1197 = vpack.c.b16 %v721, %v717
    %v1198 = vpack.c.b16 %v722, %v718
    %v1199 = vpack.c.b16 %v723, %v719
    %v1200 = vpack.c.b16 %v724, %v720
    %v1201 = vpack.c.b16 %v729, %v725
    %v1202 = vpack.c.b16 %v730, %v726
    %v1203 = vpack.c.b16 %v731, %v727
    %v1204 = vpack.c.b16 %v732, %v728
    %v1205 = vpack.c.b16 %v737, %v733
    %v1206 = vpack.c.b16 %v738, %v734
    %v1207 = vpack.c.b16 %v739, %v735
    %v1208 = vpack.c.b16 %v740, %v736
    %v1209 = vpack.c.b16 %v745, %v741
    %v1210 = vpack.c.b16 %v746, %v742
    %v1211 = vpack.c.b16 %v747, %v743
    %v1212 = vpack.c.b16 %v748, %v744
    %v1213 = vpack.c.b16 %v753, %v749
    %v1214 = vpack.c.b16 %v754, %v750
    %v1215 = vpack.c.b16 %v755, %v751
    %v1216 = vpack.c.b16 %v756, %v752
    %v1217 = vpack.c.b16 %v761, %v757
    %v1218 = vpack.c.b16 %v762, %v758
    %v1219 = vpack.c.b16 %v763, %v759
    %v1220 = vpack.c.b16 %v764, %v760
    %v1221 = vpack.c.b16 %v769, %v765
    %v1222 = vpack.c.b16 %v770, %v766
    %v1223 = vpack.c.b16 %v771, %v767
    %v1224 = vpack.c.b16 %v772, %v768
    %v1225 = vpack.c.b16 %v777, %v773
    %v1226 = vpack.c.b16 %v778, %v774
    %v1227 = vpack.c.b16 %v779, %v775
    %v1228 = vpack.c.b16 %v780, %v776
    %v1229 = vpack.c.b16 %v785, %v781
    %v1230 = vpack.c.b16 %v786, %v782
    %v1231 = vpack.c.b16 %v787, %v783
    %v1232 = vpack.c.b16 %v788, %v784
    %v1233 = vpack.c.b16 %v793, %v789
    %v1234 = vpack.c.b16 %v794, %v790
    %v1235 = vpack.c.b16 %v795, %v791
    %v1236 = vpack.c.b16 %v796, %v792
    %v1237 = vpack.c.b16 %v801, %v797
    %v1238 = vpack.c.b16 %v802, %v798
    %v1239 = vpack.c.b16 %v803, %v799
    %v1240 = vpack.c.b16 %v804, %v800
    %v1241 = vpack.c.b16 %v809, %v805
    %v1242 = vpack.c.b16 %v810, %v806
    %v1243 = vpack.c.b16 %v811, %v807
    %v1244 = vpack.c.b16 %v812, %v808
    %v1245 = vpack.c.b16 %v817, %v813
    %v1246 = vpack.c.b16 %v818, %v814
    %v1247 = vpack.c.b16 %v819, %v815
    %v1248 = vpack.c.b16 %v820, %v816
    %v1249 = vpack.c.b16 %v825, %v821
    %v1250 = vpack.c.b16 %v826, %v822
    %v1251 = vpack.c.b16 %v827, %v823
    %v1252 = vpack.c.b16 %v828, %v824
    %v1253 = vpack.c.b16 %v833, %v829
    %v1254 = vpack.c.b16 %v834, %v830
    %v1255 = vpack.c.b16 %v835, %v831
    %v1256 = vpack.c.b16 %v836, %v832
    %v1257 = vpack.c.b16 %v841, %v837
    %v1258 = vpack.c.b16 %v842, %v838
    %v1259 = vpack.c.b16 %v843, %v839
    %v1260 = vpack.c.b16 %v844, %v840
    %v1261 = vpack.c.b16 %v849, %v845
    %v1262 = vpack.c.b16 %v850, %v846
    %v1263 = vpack.c.b16 %v851, %v847
    %v1264 = vpack.c.b16 %v852, %v848
    %v1265 = vpack.c.b16 %v857, %v853
    %v1266 = vpack.c.b16 %v858, %v854
    %v1267 = vpack.c.b16 %v859, %v855
    %v1268 = vpack.c.b16 %v860, %v856
    %v1269 = vpack.c.b16 %v865, %v861
    %v1270 = vpack.c.b16 %v866, %v862
    %v1271 = vpack.c.b16 %v867, %v863
    %v1272 = vpack.c.b16 %v868, %v864
    %v1273 = vpack.c.b16 %v873, %v869
    %v1274 = vpack.c.b16 %v874, %v870
    %v1275 = vpack.c.b16 %v875, %v871
    %v1276 = vpack.c.b16 %v876, %v872
    %v1277 = vpack.c.b16 %v881, %v877
    %v1278 = vpack.c.b16 %v882, %v878
    %v1279 = vpack.c.b16 %v883, %v879
    %v1280 = vpack.c.b16 %v884, %v880
    %v1281 = vpack.c.b16 %v889, %v885
    %v1282 = vpack.c.b16 %v890, %v886
    %v1283 = vpack.c.b16 %v891, %v887
    %v1284 = vpack.c.b16 %v892, %v888
    %v1285 = vpack.c.b16 %v897, %v893
    %v1286 = vpack.c.b16 %v898, %v894
    %v1287 = vpack.c.b16 %v899, %v895
    %v1288 = vpack.c.b16 %v900, %v896
    %v1289 = vpack.c.b16 %v905, %v901
    %v1290 = vpack.c.b16 %v906, %v902
    %v1291 = vpack.c.b16 %v907, %v903
    %v1292 = vpack.c.b16 %v908, %v904
    %v1293 = vpack.c.b16 %v913, %v909
    %v1294 = vpack.c.b16 %v914, %v910
    %v1295 = vpack.c.b16 %v915, %v911
    %v1296 = vpack.c.b16 %v916, %v912
    %v1297 = vpack.c.b16 %v921, %v917
    %v1298 = vpack.c.b16 %v922, %v918
    %v1299 = vpack.c.b16 %v923, %v919
    %v1300 = vpack.c.b16 %v924, %v920
    %v1301 = vpack.c.b16 %v929, %v925
    %v1302 = vpack.c.b16 %v930, %v926
    %v1303 = vpack.c.b16 %v931, %v927
    %v1304 = vpack.c.b16 %v932, %v928
    %v1305 = vpack.c.b16 %v937, %v933
    %v1306 = vpack.c.b16 %v938, %v934
    %v1307 = vpack.c.b16 %v939, %v935
    %v1308 = vpack.c.b16 %v940, %v936
    %v1309 = vpack.c.b16 %v945, %v941
    %v1310 = vpack.c.b16 %v946, %v942
    %v1311 = vpack.c.b16 %v947, %v943
    %v1312 = vpack.c.b16 %v948, %v944
    %v1313 = vpack.c.b16 %v953, %v949
    %v1314 = vpack.c.b16 %v954, %v950
    %v1315 = vpack.c.b16 %v955, %v951
    %v1316 = vpack.c.b16 %v956, %v952
    %v1317 = vpack.c.b16 %v961, %v957
    %v1318 = vpack.c.b16 %v962, %v958
    %v1319 = vpack.c.b16 %v963, %v959
    %v1320 = vpack.c.b16 %v964, %v960
    %v1321 = vpack.c.b16 %v969, %v965
    %v1322 = vpack.c.b16 %v970, %v966
    %v1323 = vpack.c.b16 %v971, %v967
    %v1324 = vpack.c.b16 %v972, %v968
    %v1325 = vpack.c.b16 %v977, %v973
    %v1326 = vpack.c.b16 %v978, %v974
    %v1327 = vpack.c.b16 %v979, %v975
    %v1328 = vpack.c.b16 %v980, %v976
    %v1329 = vpack.c.b16 %v985, %v981
    %v1330 = vpack.c.b16 %v986, %v982
    %v1331 = vpack.c.b16 %v987, %v983
    %v1332 = vpack.c.b16 %v988, %v984
    %v1333 = vpack.c.b16 %v993, %v989
    %v1334 = vpack.c.b16 %v994, %v990
    %v1335 = vpack.c.b16 %v995, %v991
    %v1336 = vpack.c.b16 %v996, %v992
    %v1337 = vpack.c.b16 %v1001, %v997
    %v1338 = vpack.c.b16 %v1002, %v998
    %v1339 = vpack.c.b16 %v1003, %v999
    %v1340 = vpack.c.b16 %v1004, %v1000
    %v1341 = vpack.c.b16 %v1009, %v1005
    %v1342 = vpack.c.b16 %v1010, %v1006
    %v1343 = vpack.c.b16 %v1011, %v1007
    %v1344 = vpack.c.b16 %v1012, %v1008
    %v1345 = vpack.c.b16 %v1017, %v1013
    %v1346 = vpack.c.b16 %v1018, %v1014
    %v1347 = vpack.c.b16 %v1019, %v1015
    %v1348 = vpack.c.b16 %v1020, %v1016
    %v1349 = vpack.c.b16 %v1025, %v1021
    %v1350 = vpack.c.b16 %v1026, %v1022
    %v1351 = vpack.c.b16 %v1027, %v1023
    %v1352 = vpack.c.b16 %v1028, %v1024
    %v1353 = vpack.c.b16 %v1033, %v1029
    %v1354 = vpack.c.b16 %v1034, %v1030
    %v1355 = vpack.c.b16 %v1035, %v1031
    %v1356 = vpack.c.b16 %v1036, %v1032
    %v1357 = vpack.c.b16 %v1041, %v1037
    %v1358 = vpack.c.b16 %v1042, %v1038
    %v1359 = vpack.c.b16 %v1043, %v1039
    %v1360 = vpack.c.b16 %v1044, %v1040
    %v1361 = vpack.c.b16 %v1049, %v1045
    %v1362 = vpack.c.b16 %v1050, %v1046
    %v1363 = vpack.c.b16 %v1051, %v1047
    %v1364 = vpack.c.b16 %v1052, %v1048
    %v1365 = vpack.c.b16 %v1057, %v1053
    %v1366 = vpack.c.b16 %v1058, %v1054
    %v1367 = vpack.c.b16 %v1059, %v1055
    %v1368 = vpack.c.b16 %v1060, %v1056
    %v1369 = vpack.c.b16 %v1065, %v1061
    %v1370 = vpack.c.b16 %v1066, %v1062
    %v1371 = vpack.c.b16 %v1067, %v1063
    %v1372 = vpack.c.b16 %v1068, %v1064
    %v1373 = vpack.c.b16 %v1073, %v1069
    %v1374 = vpack.c.b16 %v1074, %v1070
    %v1375 = vpack.c.b16 %v1075, %v1071
    %v1376 = vpack.c.b16 %v1076, %v1072
    %v1377 = vpack.c.b16 %v1081, %v1077
    %v1378 = vpack.c.b16 %v1082, %v1078
    %v1379 = vpack.c.b16 %v1083, %v1079
    %v1380 = vpack.c.b16 %v1084, %v1080
    %v1381 = vpack.c.b16 %v1089, %v1085
    %v1382 = vpack.c.b16 %v1090, %v1086
    %v1383 = vpack.c.b16 %v1091, %v1087
    %v1384 = vpack.c.b16 %v1092, %v1088
    %v1385 = vpack.c.b16 %v1097, %v1093
    %v1386 = vpack.c.b16 %v1098, %v1094
    %v1387 = vpack.c.b16 %v1099, %v1095
    %v1388 = vpack.c.b16 %v1100, %v1096
    %v1389 = vpack.c.b16 %v1105, %v1101
    %v1390 = vpack.c.b16 %v1106, %v1102
    %v1391 = vpack.c.b16 %v1107, %v1103
    %v1392 = vpack.c.b16 %v1108, %v1104
    %v1393 = vpack.c.b16 %v1113, %v1109
    %v1394 = vpack.c.b16 %v1114, %v1110
    %v1395 = vpack.c.b16 %v1115, %v1111
    %v1396 = vpack.c.b16 %v1116, %v1112
    %v1397 = vpack.c.b16 %v1121, %v1117
    %v1398 = vpack.c.b16 %v1122, %v1118
    %v1399 = vpack.c.b16 %v1123, %v1119
    %v1400 = vpack.c.b16 %v1124, %v1120
    %v1401 = vpack.c.b16 %v1129, %v1125
    %v1402 = vpack.c.b16 %v1130, %v1126
    %v1403 = vpack.c.b16 %v1131, %v1127
    %v1404 = vpack.c.b16 %v1132, %v1128
    %v1405 = vpack.c.b16 %v1137, %v1133
    %v1406 = vpack.c.b16 %v1138, %v1134
    %v1407 = vpack.c.b16 %v1139, %v1135
    %v1408 = vpack.c.b16 %v1140, %v1136
    %v1409 = vpack.c.b16 %v1145, %v1141
    %v1410 = vpack.c.b16 %v1146, %v1142
    %v1411 = vpack.c.b16 %v1147, %v1143
    %v1412 = vpack.c.b16 %v1148, %v1144
    %v1413 = vpack.c.b16 %v1153, %v1149
    %v1414 = vpack.c.b16 %v1154, %v1150
    %v1415 = vpack.c.b16 %v1155, %v1151
    %v1416 = vpack.c.b16 %v1156, %v1152
    %v1417 = vpack.c.b16 %v1161, %v1157
    %v1418 = vpack.c.b16 %v1162, %v1158
    %v1419 = vpack.c.b16 %v1163, %v1159
    %v1420 = vpack.c.b16 %v1164, %v1160
    %1677 = vmatprep.subr.bf16.mxu0 %v1166
    %1678 = vmatpush1.bf16.msra.mxu0 %v1165
    %1679 = vmatprep.subr.bf16.mxu0 %v1170
    %1680 = vmatpush1.bf16.msra.mxu0 %v1169
    %1681 = vmatprep.subr.bf16.mxu0 %v1174
    %1682 = vmatpush1.bf16.msra.mxu0 %v1173
    %1683 = vmatprep.subr.bf16.mxu0 %v1178
    %1684 = vmatpush1.bf16.msra.mxu0 %v1177
    %1685 = vmatprep.subr.bf16.mxu0 %v1182
    %1686 = vmatpush1.bf16.msra.mxu0 %v1181
    %1687 = vmatprep.subr.bf16.mxu0 %v1186
    %1688 = vmatpush1.bf16.msra.mxu0 %v1185
    %1689 = vmatprep.subr.bf16.mxu0 %v1190
    %1690 = vmatpush1.bf16.msra.mxu0 %v1189
    %1691 = vmatprep.subr.bf16.mxu0 %v1194
    %1692 = vmatpush1.bf16.msra.mxu0 %v1193
    %1693 = vmatprep.subr.bf16.mxu0 %v1198
    %1694 = vmatpush1.bf16.msra.mxu0 %v1197
    %1695 = vmatprep.subr.bf16.mxu0 %v1202
    %1696 = vmatpush1.bf16.msra.mxu0 %v1201
    %1697 = vmatprep.subr.bf16.mxu0 %v1206
    %1698 = vmatpush1.bf16.msra.mxu0 %v1205
    %1699 = vmatprep.subr.bf16.mxu0 %v1210
    %1700 = vmatpush1.bf16.msra.mxu0 %v1209
    %1701 = vmatprep.subr.bf16.mxu0 %v1214
    %1702 = vmatpush1.bf16.msra.mxu0 %v1213
    %1703 = vmatprep.subr.bf16.mxu0 %v1218
    %1704 = vmatpush1.bf16.msra.mxu0 %v1217
    %1705 = vmatprep.subr.bf16.mxu0 %v1222
    %1706 = vmatpush1.bf16.msra.mxu0 %v1221
    %1707 = vmatprep.subr.bf16.mxu0 %v1226
    %1708 = vmatpush1.bf16.msra.mxu0 %v1225
    %1709 = vmatprep.mubr.bf16.mxu0 %v134
    %1710 = vmatmul.mubr.bf16.gmra.mrb[0].mxu0 %v133
    %v1711 = vpop.f32.mrb[0].mxu0
    %v1712 = vadd.f32 0.0, %v1711
    %v1713 = vpop.f32.mrb[0].mxu0
    %v1714 = vadd.f32 0.0, %v1713
    %v1715 = vpop.f32.mrb[0].mxu0
    %v1716 = vpop.f32.mrb[0].mxu0
    %1717 = vdwg.mxu0
    %1718 = vmatprep.subr.bf16.mxu0 %v1230
    %1719 = vmatpush1.bf16.msra.mxu0 %v1229
    %1720 = vmatprep.subr.bf16.mxu0 %v1234
    %1721 = vmatpush1.bf16.msra.mxu0 %v1233
    %1722 = vmatprep.subr.bf16.mxu0 %v1238
    %1723 = vmatpush1.bf16.msra.mxu0 %v1237
    %1724 = vmatprep.subr.bf16.mxu0 %v1242
    %1725 = vmatpush1.bf16.msra.mxu0 %v1241
    %1726 = vmatprep.subr.bf16.mxu0 %v1246
    %1727 = vmatpush1.bf16.msra.mxu0 %v1245
    %1728 = vmatprep.subr.bf16.mxu0 %v1250
    %1729 = vmatpush1.bf16.msra.mxu0 %v1249
    %1730 = vmatprep.subr.bf16.mxu0 %v1254
    %1731 = vmatpush1.bf16.msra.mxu0 %v1253
    %1732 = vmatprep.subr.bf16.mxu0 %v1258
    %1733 = vmatpush1.bf16.msra.mxu0 %v1257
    %1734 = vmatprep.subr.bf16.mxu0 %v1262
    %1735 = vmatpush1.bf16.msra.mxu0 %v1261
    %1736 = vmatprep.subr.bf16.mxu0 %v1266
    %1737 = vmatpush1.bf16.msra.mxu0 %v1265
    %1738 = vmatprep.subr.bf16.mxu0 %v1270
    %1739 = vmatpush1.bf16.msra.mxu0 %v1269
    %1740 = vmatprep.subr.bf16.mxu0 %v1274
    %1741 = vmatpush1.bf16.msra.mxu0 %v1273
    %1742 = vmatprep.subr.bf16.mxu0 %v1278
    %1743 = vmatpush1.bf16.msra.mxu0 %v1277
    %1744 = vmatprep.subr.bf16.mxu0 %v1282
    %1745 = vmatpush1.bf16.msra.mxu0 %v1281
    %1746 = vmatprep.subr.bf16.mxu0 %v1286
    %1747 = vmatpush1.bf16.msra.mxu0 %v1285
    %1748 = vmatprep.subr.bf16.mxu0 %v1290
    %1749 = vmatpush1.bf16.msra.mxu0 %v1289
    %1750 = vmatprep.mubr.bf16.mxu0 %v136
    %1751 = vmatmul.mubr.bf16.gmra.mrb[0].mxu0 %v135
    %v1752 = vpop.f32.mrb[0].mxu0
    %v1753 = vadd.f32 %v1712, %v1752
    %v1754 = vpop.f32.mrb[0].mxu0
    %v1755 = vadd.f32 %v1714, %v1754
    %v1756 = vpop.f32.mrb[0].mxu0
    %v1757 = vpop.f32.mrb[0].mxu0
    %1758 = vdwg.mxu0
    %1759 = vmatprep.subr.bf16.mxu0 %v1294
    %1760 = vmatpush1.bf16.msra.mxu0 %v1293
    %1761 = vmatprep.subr.bf16.mxu0 %v1298
    %1762 = vmatpush1.bf16.msra.mxu0 %v1297
    %1763 = vmatprep.subr.bf16.mxu0 %v1302
    %1764 = vmatpush1.bf16.msra.mxu0 %v1301
    %1765 = vmatprep.subr.bf16.mxu0 %v1306
    %1766 = vmatpush1.bf16.msra.mxu0 %v1305
    %1767 = vmatprep.subr.bf16.mxu0 %v1310
    %1768 = vmatpush1.bf16.msra.mxu0 %v1309
    %1769 = vmatprep.subr.bf16.mxu0 %v1314
    %1770 = vmatpush1.bf16.msra.mxu0 %v1313
    %1771 = vmatprep.subr.bf16.mxu0 %v1318
    %1772 = vmatpush1.bf16.msra.mxu0 %v1317
    %1773 = vmatprep.subr.bf16.mxu0 %v1322
    %1774 = vmatpush1.bf16.msra.mxu0 %v1321
    %1775 = vmatprep.subr.bf16.mxu0 %v1326
    %1776 = vmatpush1.bf16.msra.mxu0 %v1325
    %1777 = vmatprep.subr.bf16.mxu0 %v1330
    %1778 = vmatpush1.bf16.msra.mxu0 %v1329
    %1779 = vmatprep.subr.bf16.mxu0 %v1334
    %1780 = vmatpush1.bf16.msra.mxu0 %v1333
    %1781 = vmatprep.subr.bf16.mxu0 %v1338
    %1782 = vmatpush1.bf16.msra.mxu0 %v1337
    %1783 = vmatprep.subr.bf16.mxu0 %v1342
    %1784 = vmatpush1.bf16.msra.mxu0 %v1341
    %1785 = vmatprep.subr.bf16.mxu0 %v1346
    %1786 = vmatpush1.bf16.msra.mxu0 %v1345
    %1787 = vmatprep.subr.bf16.mxu0 %v1350
    %1788 = vmatpush1.bf16.msra.mxu0 %v1349
    %1789 = vmatprep.subr.bf16.mxu0 %v1354
    %1790 = vmatpush1.bf16.msra.mxu0 %v1353
    %1791 = vmatprep.mubr.bf16.mxu0 %v138
    %1792 = vmatmul.mubr.bf16.gmra.mrb[0].mxu0 %v137
    %v1793 = vpop.f32.mrb[0].mxu0
    %v1794 = vadd.f32 %v1753, %v1793
    %v1795 = vpop.f32.mrb[0].mxu0
    %v1796 = vadd.f32 %v1755, %v1795
    %v1797 = vpop.f32.mrb[0].mxu0
    %v1798 = vpop.f32.mrb[0].mxu0
    %1799 = vdwg.mxu0
    %1800 = vmatprep.subr.bf16.mxu0 %v1358
    %1801 = vmatpush1.bf16.msra.mxu0 %v1357
    %1802 = vmatprep.subr.bf16.mxu0 %v1362
    %1803 = vmatpush1.bf16.msra.mxu0 %v1361
    %1804 = vmatprep.subr.bf16.mxu0 %v1366
    %1805 = vmatpush1.bf16.msra.mxu0 %v1365
    %1806 = vmatprep.subr.bf16.mxu0 %v1370
    %1807 = vmatpush1.bf16.msra.mxu0 %v1369
    %1808 = vmatprep.subr.bf16.mxu0 %v1374
    %1809 = vmatpush1.bf16.msra.mxu0 %v1373
    %1810 = vmatprep.subr.bf16.mxu0 %v1378
    %1811 = vmatpush1.bf16.msra.mxu0 %v1377
    %1812 = vmatprep.subr.bf16.mxu0 %v1382
    %1813 = vmatpush1.bf16.msra.mxu0 %v1381
    %1814 = vmatprep.subr.bf16.mxu0 %v1386
    %1815 = vmatpush1.bf16.msra.mxu0 %v1385
    %1816 = vmatprep.subr.bf16.mxu0 %v1390
    %1817 = vmatpush1.bf16.msra.mxu0 %v1389
    %1818 = vmatprep.subr.bf16.mxu0 %v1394
    %1819 = vmatpush1.bf16.msra.mxu0 %v1393
    %1820 = vmatprep.subr.bf16.mxu0 %v1398
    %1821 = vmatpush1.bf16.msra.mxu0 %v1397
    %1822 = vmatprep.subr.bf16.mxu0 %v1402
    %1823 = vmatpush1.bf16.msra.mxu0 %v1401
    %1824 = vmatprep.subr.bf16.mxu0 %v1406
    %1825 = vmatpush1.bf16.msra.mxu0 %v1405
    %1826 = vmatprep.subr.bf16.mxu0 %v1410
    %1827 = vmatpush1.bf16.msra.mxu0 %v1409
    %1828 = vmatprep.subr.bf16.mxu0 %v1414
    %1829 = vmatpush1.bf16.msra.mxu0 %v1413
    %1830 = vmatprep.subr.bf16.mxu0 %v1418
    %1831 = vmatpush1.bf16.msra.mxu0 %v1417
    %1832 = vmatprep.mubr.bf16.mxu0 %v140
    %1833 = vmatmul.mubr.bf16.gmra.mrb[0].mxu0 %v139
    %v1834 = vpop.f32.mrb[0].mxu0
    %v1835 = vadd.f32 %v1794, %v1834
    %v1836 = vpop.f32.mrb[0].mxu0
    %v1837 = vadd.f32 %v1796, %v1836
    %v1838 = vpop.f32.mrb[0].mxu0
    %v1839 = vpop.f32.mrb[0].mxu0
    %1840 = vdwg.mxu0
    %1841 = vmatprep.subr.bf16.mxu0 %v1168
    %1842 = vmatpush1.bf16.msra.mxu0 %v1167
    %1843 = vmatprep.subr.bf16.mxu0 %v1172
    %1844 = vmatpush1.bf16.msra.mxu0 %v1171
    %1845 = vmatprep.subr.bf16.mxu0 %v1176
    %1846 = vmatpush1.bf16.msra.mxu0 %v1175
    %1847 = vmatprep.subr.bf16.mxu0 %v1180
    %1848 = vmatpush1.bf16.msra.mxu0 %v1179
    %1849 = vmatprep.subr.bf16.mxu0 %v1184
    %1850 = vmatpush1.bf16.msra.mxu0 %v1183
    %1851 = vmatprep.subr.bf16.mxu0 %v1188
    %1852 = vmatpush1.bf16.msra.mxu0 %v1187
    %1853 = vmatprep.subr.bf16.mxu0 %v1192
    %1854 = vmatpush1.bf16.msra.mxu0 %v1191
    %1855 = vmatprep.subr.bf16.mxu0 %v1196
    %1856 = vmatpush1.bf16.msra.mxu0 %v1195
    %1857 = vmatprep.subr.bf16.mxu0 %v1200
    %1858 = vmatpush1.bf16.msra.mxu0 %v1199
    %1859 = vmatprep.subr.bf16.mxu0 %v1204
    %1860 = vmatpush1.bf16.msra.mxu0 %v1203
    %1861 = vmatprep.subr.bf16.mxu0 %v1208
    %1862 = vmatpush1.bf16.msra.mxu0 %v1207
    %1863 = vmatprep.subr.bf16.mxu0 %v1212
    %1864 = vmatpush1.bf16.msra.mxu0 %v1211
    %1865 = vmatprep.subr.bf16.mxu0 %v1216
    %1866 = vmatpush1.bf16.msra.mxu0 %v1215
    %1867 = vmatprep.subr.bf16.mxu0 %v1220
    %1868 = vmatpush1.bf16.msra.mxu0 %v1219
    %1869 = vmatprep.subr.bf16.mxu0 %v1224
    %1870 = vmatpush1.bf16.msra.mxu0 %v1223
    %1871 = vmatprep.subr.bf16.mxu0 %v1228
    %1872 = vmatpush1.bf16.msra.mxu0 %v1227
    %1873 = vmatprep.mubr.bf16.mxu0 %v134
    %1874 = vmatmul.mubr.bf16.gmra.mrb[0].mxu0 %v133
    %v1875 = vpop.f32.mrb[0].mxu0
    %v1876 = vadd.f32 0.0, %v1875
    %v1877 = vpop.f32.mrb[0].mxu0
    %v1878 = vadd.f32 0.0, %v1877
    %v1879 = vpop.f32.mrb[0].mxu0
    %v1880 = vpop.f32.mrb[0].mxu0
    %1881 = vdwg.mxu0
    %1882 = vmatprep.subr.bf16.mxu0 %v1232
    %1883 = vmatpush1.bf16.msra.mxu0 %v1231
    %1884 = vmatprep.subr.bf16.mxu0 %v1236
    %1885 = vmatpush1.bf16.msra.mxu0 %v1235
    %1886 = vmatprep.subr.bf16.mxu0 %v1240
    %1887 = vmatpush1.bf16.msra.mxu0 %v1239
    %1888 = vmatprep.subr.bf16.mxu0 %v1244
    %1889 = vmatpush1.bf16.msra.mxu0 %v1243
    %1890 = vmatprep.subr.bf16.mxu0 %v1248
    %1891 = vmatpush1.bf16.msra.mxu0 %v1247
    %1892 = vmatprep.subr.bf16.mxu0 %v1252
    %1893 = vmatpush1.bf16.msra.mxu0 %v1251
    %1894 = vmatprep.subr.bf16.mxu0 %v1256
    %1895 = vmatpush1.bf16.msra.mxu0 %v1255
    %1896 = vmatprep.subr.bf16.mxu0 %v1260
    %1897 = vmatpush1.bf16.msra.mxu0 %v1259
    %1898 = vmatprep.subr.bf16.mxu0 %v1264
    %1899 = vmatpush1.bf16.msra.mxu0 %v1263
    %1900 = vmatprep.subr.bf16.mxu0 %v1268
    %1901 = vmatpush1.bf16.msra.mxu0 %v1267
    %1902 = vmatprep.subr.bf16.mxu0 %v1272
    %1903 = vmatpush1.bf16.msra.mxu0 %v1271
    %1904 = vmatprep.subr.bf16.mxu0 %v1276
    %1905 = vmatpush1.bf16.msra.mxu0 %v1275
    %1906 = vmatprep.subr.bf16.mxu0 %v1280
    %1907 = vmatpush1.bf16.msra.mxu0 %v1279
    %1908 = vmatprep.subr.bf16.mxu0 %v1284
    %1909 = vmatpush1.bf16.msra.mxu0 %v1283
    %1910 = vmatprep.subr.bf16.mxu0 %v1288
    %1911 = vmatpush1.bf16.msra.mxu0 %v1287
    %1912 = vmatprep.subr.bf16.mxu0 %v1292
    %1913 = vmatpush1.bf16.msra.mxu0 %v1291
    %1914 = vmatprep.mubr.bf16.mxu0 %v136
    %1915 = vmatmul.mubr.bf16.gmra.mrb[0].mxu0 %v135
    %v1916 = vpop.f32.mrb[0].mxu0
    %v1917 = vadd.f32 %v1876, %v1916
    %v1918 = vpop.f32.mrb[0].mxu0
    %v1919 = vadd.f32 %v1878, %v1918
    %v1920 = vpop.f32.mrb[0].mxu0
    %v1921 = vpop.f32.mrb[0].mxu0
    %1922 = vdwg.mxu0
    %1923 = vmatprep.subr.bf16.mxu0 %v1296
    %1924 = vmatpush1.bf16.msra.mxu0 %v1295
    %1925 = vmatprep.subr.bf16.mxu0 %v1300
    %1926 = vmatpush1.bf16.msra.mxu0 %v1299
    %1927 = vmatprep.subr.bf16.mxu0 %v1304
    %1928 = vmatpush1.bf16.msra.mxu0 %v1303
    %1929 = vmatprep.subr.bf16.mxu0 %v1308
    %1930 = vmatpush1.bf16.msra.mxu0 %v1307
    %1931 = vmatprep.subr.bf16.mxu0 %v1312
    %1932 = vmatpush1.bf16.msra.mxu0 %v1311
    %1933 = vmatprep.subr.bf16.mxu0 %v1316
    %1934 = vmatpush1.bf16.msra.mxu0 %v1315
    %1935 = vmatprep.subr.bf16.mxu0 %v1320
    %1936 = vmatpush1.bf16.msra.mxu0 %v1319
    %1937 = vmatprep.subr.bf16.mxu0 %v1324
    %1938 = vmatpush1.bf16.msra.mxu0 %v1323
    %1939 = vmatprep.subr.bf16.mxu0 %v1328
    %1940 = vmatpush1.bf16.msra.mxu0 %v1327
    %1941 = vmatprep.subr.bf16.mxu0 %v1332
    %1942 = vmatpush1.bf16.msra.mxu0 %v1331
    %1943 = vmatprep.subr.bf16.mxu0 %v1336
    %1944 = vmatpush1.bf16.msra.mxu0 %v1335
    %1945 = vmatprep.subr.bf16.mxu0 %v1340
    %1946 = vmatpush1.bf16.msra.mxu0 %v1339
    %1947 = vmatprep.subr.bf16.mxu0 %v1344
    %1948 = vmatpush1.bf16.msra.mxu0 %v1343
    %1949 = vmatprep.subr.bf16.mxu0 %v1348
    %1950 = vmatpush1.bf16.msra.mxu0 %v1347
    %1951 = vmatprep.subr.bf16.mxu0 %v1352
    %1952 = vmatpush1.bf16.msra.mxu0 %v1351
    %1953 = vmatprep.subr.bf16.mxu0 %v1356
    %1954 = vmatpush1.bf16.msra.mxu0 %v1355
    %1955 = vmatprep.mubr.bf16.mxu0 %v138
    %1956 = vmatmul.mubr.bf16.gmra.mrb[0].mxu0 %v137
    %v1957 = vpop.f32.mrb[0].mxu0
    %v1958 = vadd.f32 %v1917, %v1957
    %v1959 = vpop.f32.mrb[0].mxu0
    %v1960 = vadd.f32 %v1919, %v1959
    %v1961 = vpop.f32.mrb[0].mxu0
    %v1962 = vpop.f32.mrb[0].mxu0
    %1963 = vdwg.mxu0
    %1964 = vmatprep.subr.bf16.mxu0 %v1360
    %1965 = vmatpush1.bf16.msra.mxu0 %v1359
    %1966 = vmatprep.subr.bf16.mxu0 %v1364
    %1967 = vmatpush1.bf16.msra.mxu0 %v1363
    %1968 = vmatprep.subr.bf16.mxu0 %v1368
    %1969 = vmatpush1.bf16.msra.mxu0 %v1367
    %1970 = vmatprep.subr.bf16.mxu0 %v1372
    %1971 = vmatpush1.bf16.msra.mxu0 %v1371
    %1972 = vmatprep.subr.bf16.mxu0 %v1376
    %1973 = vmatpush1.bf16.msra.mxu0 %v1375
    %1974 = vmatprep.subr.bf16.mxu0 %v1380
    %1975 = vmatpush1.bf16.msra.mxu0 %v1379
    %1976 = vmatprep.subr.bf16.mxu0 %v1384
    %1977 = vmatpush1.bf16.msra.mxu0 %v1383
    %1978 = vmatprep.subr.bf16.mxu0 %v1388
    %1979 = vmatpush1.bf16.msra.mxu0 %v1387
    %1980 = vmatprep.subr.bf16.mxu0 %v1392
    %1981 = vmatpush1.bf16.msra.mxu0 %v1391
    %1982 = vmatprep.subr.bf16.mxu0 %v1396
    %1983 = vmatpush1.bf16.msra.mxu0 %v1395
    %1984 = vmatprep.subr.bf16.mxu0 %v1400
    %1985 = vmatpush1.bf16.msra.mxu0 %v1399
    %1986 = vmatprep.subr.bf16.mxu0 %v1404
    %1987 = vmatpush1.bf16.msra.mxu0 %v1403
    %1988 = vmatprep.subr.bf16.mxu0 %v1408
    %1989 = vmatpush1.bf16.msra.mxu0 %v1407
    %1990 = vmatprep.subr.bf16.mxu0 %v1412
    %1991 = vmatpush1.bf16.msra.mxu0 %v1411
    %1992 = vmatprep.subr.bf16.mxu0 %v1416
    %1993 = vmatpush1.bf16.msra.mxu0 %v1415
    %1994 = vmatprep.subr.bf16.mxu0 %v1420
    %1995 = vmatpush1.bf16.msra.mxu0 %v1419
    %1996 = vmatprep.mubr.bf16.mxu0 %v140
    %1997 = vmatmul.mubr.bf16.gmra.mrb[0].mxu0 %v139
    %v1998 = vpop.f32.mrb[0].mxu0
    %v1999 = vadd.f32 %v1958, %v1998
    %v2000 = vpop.f32.mrb[0].mxu0
    %v2001 = vadd.f32 %v1960, %v2000
    %v2002 = vpop.f32.mrb[0].mxu0
    %v2003 = vpop.f32.mrb[0].mxu0
    %2004 = vdwg.mxu0
    %v2005 = vmax.f32 %v1835, 0.0
    %v2006 = vmax.f32 %v1837, 0.0
    %v2007 = vmax.f32 %v1999, 0.0
    %v2008 = vmax.f32 %v2001, 0.0
    %vm2009 = vcmask 1041408
    %v2010 = vsel %vm2009, %v2005, 0.0
    %v2011 = vrot.slane %v2010, 4
    %v2012 = vadd.f32 %v2010, %v2011
    %v2013 = vrot.slane %v2012, 2
    %v2014 = vadd.f32 %v2012, %v2013
    %v2015 = vrot.slane %v2014, 1
    %v2016 = vadd.f32 %v2014, %v2015
    %v2017 = vsel %vm2009, %v2006, 0.0
    %v2018 = vrot.slane %v2017, 4
    %v2019 = vadd.f32 %v2017, %v2018
    %v2020 = vrot.slane %v2019, 2
    %v2021 = vadd.f32 %v2019, %v2020
    %v2022 = vrot.slane %v2021, 1
    %v2023 = vadd.f32 %v2021, %v2022
    %v2024 = vsel %vm2009, %v2007, 0.0
    %v2025 = vrot.slane %v2024, 4
    %v2026 = vadd.f32 %v2024, %v2025
    %v2027 = vrot.slane %v2026, 2
    %v2028 = vadd.f32 %v2026, %v2027
    %v2029 = vrot.slane %v2028, 1
    %v2030 = vadd.f32 %v2028, %v2029
    %v2031 = vsel %vm2009, %v2008, 0.0
    %v2032 = vrot.slane %v2031, 4
    %v2033 = vadd.f32 %v2031, %v2032
    %v2034 = vrot.slane %v2033, 2
    %v2035 = vadd.f32 %v2033, %v2034
    %v2036 = vrot.slane %v2035, 1
    %v2037 = vadd.f32 %v2035, %v2036
    %v2038 = vmul.f32 %v2005, %v2005
    %v2039 = vmul.f32 %v2006, %v2006
    %v2040 = vmul.f32 %v2007, %v2007
    %v2041 = vmul.f32 %v2008, %v2008
    %v2042 = vsel %vm2009, %v2038, 0.0
    %v2043 = vrot.slane %v2042, 4
    %v2044 = vadd.f32 %v2042, %v2043
    %v2045 = vrot.slane %v2044, 2
    %v2046 = vadd.f32 %v2044, %v2045
    %v2047 = vrot.slane %v2046, 1
    %v2048 = vadd.f32 %v2046, %v2047
    %v2049 = vsel %vm2009, %v2039, 0.0
    %v2050 = vrot.slane %v2049, 4
    %v2051 = vadd.f32 %v2049, %v2050
    %v2052 = vrot.slane %v2051, 2
    %v2053 = vadd.f32 %v2051, %v2052
    %v2054 = vrot.slane %v2053, 1
    %v2055 = vadd.f32 %v2053, %v2054
    %v2056 = vsel %vm2009, %v2040, 0.0
    %v2057 = vrot.slane %v2056, 4
    %v2058 = vadd.f32 %v2056, %v2057
    %v2059 = vrot.slane %v2058, 2
    %v2060 = vadd.f32 %v2058, %v2059
    %v2061 = vrot.slane %v2060, 1
    %v2062 = vadd.f32 %v2060, %v2061
    %v2063 = vsel %vm2009, %v2041, 0.0
    %v2064 = vrot.slane %v2063, 4
    %v2065 = vadd.f32 %v2063, %v2064
    %v2066 = vrot.slane %v2065, 2
    %v2067 = vadd.f32 %v2065, %v2066
    %v2068 = vrot.slane %v2067, 1
    %v2069 = vadd.f32 %v2067, %v2068
    %vm2070 = vcmask 1040384
    %v2071 = vsel %vm2070, %v2016, %v2048
    %v2072 = vsel %vm2070, %v2023, %v2055
    %v2073 = vsel %vm2070, %v2030, %v2062
    %v2074 = vsel %vm2070, %v2037, %v2069
    %v2075 = vld [vmem:[%s4] sm:$0xf]
    %v2076 = vld [vmem:[%s4 + $0x4] sm:$0xf]
    %v2077 = vld [vmem:[%s4 + $0x8] sm:$0xf]
    %v2078 = vld [vmem:[%s4 + $0xc] sm:$0xf]
    %v2079 = vld [vmem:[%s4 + $0x10] sm:$0xf]
    %v2080 = vld [vmem:[%s4 + $0x14] sm:$0xf]
    %v2081 = vld [vmem:[%s4 + $0x18] sm:$0xf]
    %v2082 = vld [vmem:[%s4 + $0x1c] sm:$0xf]
    %v2083 = vld [vmem:[%s4 + $0x20] sm:$0xf]
    %v2084 = vld [vmem:[%s4 + $0x24] sm:$0xf]
    %v2085 = vld [vmem:[%s4 + $0x28] sm:$0xf]
    %v2086 = vld [vmem:[%s4 + $0x2c] sm:$0xf]
    %v2087 = vld [vmem:[%s4 + $0x30] sm:$0xf]
    %v2088 = vld [vmem:[%s4 + $0x34] sm:$0xf]
    %v2089 = vld [vmem:[%s4 + $0x38] sm:$0xf]
    %v2090 = vld [vmem:[%s4 + $0x3c] sm:$0xf]
    %v2091 = vld [vmem:[%s4 + $0x40] sm:$0xf]
    %v2092 = vld [vmem:[%s4 + $0x44] sm:$0xf]
    %v2093 = vld [vmem:[%s4 + $0x48] sm:$0xf]
    %v2094 = vld [vmem:[%s4 + $0x4c] sm:$0xf]
    %v2095 = vld [vmem:[%s4 + $0x50] sm:$0xf]
    %v2096 = vld [vmem:[%s4 + $0x54] sm:$0xf]
    %v2097 = vld [vmem:[%s4 + $0x58] sm:$0xf]
    %v2098 = vld [vmem:[%s4 + $0x5c] sm:$0xf]
    %v2099 = vld [vmem:[%s4 + $0x60] sm:$0xf]
    %v2100 = vld [vmem:[%s4 + $0x64] sm:$0xf]
    %v2101 = vld [vmem:[%s4 + $0x68] sm:$0xf]
    %v2102 = vld [vmem:[%s4 + $0x6c] sm:$0xf]
    %v2103 = vld [vmem:[%s4 + $0x70] sm:$0xf]
    %v2104 = vld [vmem:[%s4 + $0x74] sm:$0xf]
    %v2105 = vld [vmem:[%s4 + $0x78] sm:$0xf]
    %v2106 = vld [vmem:[%s4 + $0x7c] sm:$0xf]
    %v2107 = vld [vmem:[%s4 + $0x80] sm:$0xf]
    %v2108 = vld [vmem:[%s4 + $0x84] sm:$0xf]
    %v2109 = vld [vmem:[%s4 + $0x88] sm:$0xf]
    %v2110 = vld [vmem:[%s4 + $0x8c] sm:$0xf]
    %v2111 = vld [vmem:[%s4 + $0x90] sm:$0xf]
    %v2112 = vld [vmem:[%s4 + $0x94] sm:$0xf]
    %v2113 = vld [vmem:[%s4 + $0x98] sm:$0xf]
    %v2114 = vld [vmem:[%s4 + $0x9c] sm:$0xf]
    %v2115 = vld [vmem:[%s4 + $0xa0] sm:$0xf]
    %v2116 = vld [vmem:[%s4 + $0xa4] sm:$0xf]
    %v2117 = vld [vmem:[%s4 + $0xa8] sm:$0xf]
    %v2118 = vld [vmem:[%s4 + $0xac] sm:$0xf]
    %v2119 = vld [vmem:[%s4 + $0xb0] sm:$0xf]
    %v2120 = vld [vmem:[%s4 + $0xb4] sm:$0xf]
    %v2121 = vld [vmem:[%s4 + $0xb8] sm:$0xf]
    %v2122 = vld [vmem:[%s4 + $0xbc] sm:$0xf]
    %v2123 = vld [vmem:[%s4 + $0xc0] sm:$0xf]
    %v2124 = vld [vmem:[%s4 + $0xc4] sm:$0xf]
    %v2125 = vld [vmem:[%s4 + $0xc8] sm:$0xf]
    %v2126 = vld [vmem:[%s4 + $0xcc] sm:$0xf]
    %v2127 = vld [vmem:[%s4 + $0xd0] sm:$0xf]
    %v2128 = vld [vmem:[%s4 + $0xd4] sm:$0xf]
    %v2129 = vld [vmem:[%s4 + $0xd8] sm:$0xf]
    %v2130 = vld [vmem:[%s4 + $0xdc] sm:$0xf]
    %v2131 = vld [vmem:[%s4 + $0xe0] sm:$0xf]
    %v2132 = vld [vmem:[%s4 + $0xe4] sm:$0xf]
    %v2133 = vld [vmem:[%s4 + $0xe8] sm:$0xf]
    %v2134 = vld [vmem:[%s4 + $0xec] sm:$0xf]
    %v2135 = vld [vmem:[%s4 + $0xf0] sm:$0xf]
    %v2136 = vld [vmem:[%s4 + $0xf4] sm:$0xf]
    %v2137 = vld [vmem:[%s4 + $0xf8] sm:$0xf]
    %v2138 = vld [vmem:[%s4 + $0xfc] sm:$0xf]
    %v2139 = vunpack.c.l.bf16 %v2075
    %v2140 = vunpack.c.l.bf16 %v2076
    %v2141 = vunpack.c.l.bf16 %v2077
    %v2142 = vunpack.c.l.bf16 %v2078
    %v2143 = vunpack.c.l.bf16 %v2079
    %v2144 = vunpack.c.l.bf16 %v2080
    %v2145 = vunpack.c.l.bf16 %v2081
    %v2146 = vunpack.c.l.bf16 %v2082
    %v2147 = vunpack.c.l.bf16 %v2083
    %v2148 = vunpack.c.l.bf16 %v2084
    %v2149 = vunpack.c.l.bf16 %v2085
    %v2150 = vunpack.c.l.bf16 %v2086
    %v2151 = vunpack.c.l.bf16 %v2087
    %v2152 = vunpack.c.l.bf16 %v2088
    %v2153 = vunpack.c.l.bf16 %v2089
    %v2154 = vunpack.c.l.bf16 %v2090
    %v2155 = vunpack.c.l.bf16 %v2091
    %v2156 = vunpack.c.l.bf16 %v2092
    %v2157 = vunpack.c.l.bf16 %v2093
    %v2158 = vunpack.c.l.bf16 %v2094
    %v2159 = vunpack.c.l.bf16 %v2095
    %v2160 = vunpack.c.l.bf16 %v2096
    %v2161 = vunpack.c.l.bf16 %v2097
    %v2162 = vunpack.c.l.bf16 %v2098
    %v2163 = vunpack.c.l.bf16 %v2099
    %v2164 = vunpack.c.l.bf16 %v2100
    %v2165 = vunpack.c.l.bf16 %v2101
    %v2166 = vunpack.c.l.bf16 %v2102
    %v2167 = vunpack.c.l.bf16 %v2103
    %v2168 = vunpack.c.l.bf16 %v2104
    %v2169 = vunpack.c.l.bf16 %v2105
    %v2170 = vunpack.c.l.bf16 %v2106
    %v2171 = vunpack.c.l.bf16 %v2107
    %v2172 = vunpack.c.l.bf16 %v2108
    %v2173 = vunpack.c.l.bf16 %v2109
    %v2174 = vunpack.c.l.bf16 %v2110
    %v2175 = vunpack.c.l.bf16 %v2111
    %v2176 = vunpack.c.l.bf16 %v2112
    %v2177 = vunpack.c.l.bf16 %v2113
    %v2178 = vunpack.c.l.bf16 %v2114
    %v2179 = vunpack.c.l.bf16 %v2115
    %v2180 = vunpack.c.l.bf16 %v2116
    %v2181 = vunpack.c.l.bf16 %v2117
    %v2182 = vunpack.c.l.bf16 %v2118
    %v2183 = vunpack.c.l.bf16 %v2119
    %v2184 = vunpack.c.l.bf16 %v2120
    %v2185 = vunpack.c.l.bf16 %v2121
    %v2186 = vunpack.c.l.bf16 %v2122
    %v2187 = vunpack.c.l.bf16 %v2123
    %v2188 = vunpack.c.l.bf16 %v2124
    %v2189 = vunpack.c.l.bf16 %v2125
    %v2190 = vunpack.c.l.bf16 %v2126
    %v2191 = vunpack.c.l.bf16 %v2127
    %v2192 = vunpack.c.l.bf16 %v2128
    %v2193 = vunpack.c.l.bf16 %v2129
    %v2194 = vunpack.c.l.bf16 %v2130
    %v2195 = vunpack.c.l.bf16 %v2131
    %v2196 = vunpack.c.l.bf16 %v2132
    %v2197 = vunpack.c.l.bf16 %v2133
    %v2198 = vunpack.c.l.bf16 %v2134
    %v2199 = vunpack.c.l.bf16 %v2135
    %v2200 = vunpack.c.l.bf16 %v2136
    %v2201 = vunpack.c.l.bf16 %v2137
    %v2202 = vunpack.c.l.bf16 %v2138
    %2203 = vmatprep.subr.mxu0 0.0
    %2204 = vmatpush1.msra.mxu0 %v2139
    %2205 = vmatprep.subr.mxu0 0.0
    %2206 = vmatpush1.msra.mxu0 %v2140
    %2207 = vmatprep.subr.mxu0 0.0
    %2208 = vmatpush1.msra.mxu0 %v2141
    %2209 = vmatprep.subr.mxu0 0.0
    %2210 = vmatpush1.msra.mxu0 %v2142
    %2211 = vmatprep.subr.mxu0 0.0
    %2212 = vmatpush1.msra.mxu0 %v2143
    %2213 = vmatprep.subr.mxu0 0.0
    %2214 = vmatpush1.msra.mxu0 %v2144
    %2215 = vmatprep.subr.mxu0 0.0
    %2216 = vmatpush1.msra.mxu0 %v2145
    %2217 = vmatprep.subr.mxu0 0.0
    %2218 = vmatpush1.msra.mxu0 %v2146
    %2219 = vmatprep.subr.mxu0 0.0
    %2220 = vmatpush1.msra.mxu0 %v2147
    %2221 = vmatprep.subr.mxu0 0.0
    %2222 = vmatpush1.msra.mxu0 %v2148
    %2223 = vmatprep.subr.mxu0 0.0
    %2224 = vmatpush1.msra.mxu0 %v2149
    %2225 = vmatprep.subr.mxu0 0.0
    %2226 = vmatpush1.msra.mxu0 %v2150
    %2227 = vmatprep.subr.mxu0 0.0
    %2228 = vmatpush1.msra.mxu0 %v2151
    %2229 = vmatprep.subr.mxu0 0.0
    %2230 = vmatpush1.msra.mxu0 %v2152
    %2231 = vmatprep.subr.mxu0 0.0
    %2232 = vmatpush1.msra.mxu0 %v2153
    %2233 = vmatprep.subr.mxu0 0.0
    %2234 = vmatpush1.msra.mxu0 %v2154
    %2235 = vmatprep.subr.mxu0 0.0
    %2236 = vmatpush1.msra.mxu0 %v2155
    %2237 = vmatprep.subr.mxu0 0.0
    %2238 = vmatpush1.msra.mxu0 %v2156
    %2239 = vmatprep.subr.mxu0 0.0
    %2240 = vmatpush1.msra.mxu0 %v2157
    %2241 = vmatprep.subr.mxu0 0.0
    %2242 = vmatpush1.msra.mxu0 %v2158
    %2243 = vmatprep.subr.mxu0 0.0
    %2244 = vmatpush1.msra.mxu0 %v2159
    %2245 = vmatprep.subr.mxu0 0.0
    %2246 = vmatpush1.msra.mxu0 %v2160
    %2247 = vmatprep.subr.mxu0 0.0
    %2248 = vmatpush1.msra.mxu0 %v2161
    %2249 = vmatprep.subr.mxu0 0.0
    %2250 = vmatpush1.msra.mxu0 %v2162
    %2251 = vmatprep.subr.mxu0 0.0
    %2252 = vmatpush1.msra.mxu0 %v2163
    %2253 = vmatprep.subr.mxu0 0.0
    %2254 = vmatpush1.msra.mxu0 %v2164
    %2255 = vmatprep.subr.mxu0 0.0
    %2256 = vmatpush1.msra.mxu0 %v2165
    %2257 = vmatprep.subr.mxu0 0.0
    %2258 = vmatpush1.msra.mxu0 %v2166
    %2259 = vmatprep.subr.mxu0 0.0
    %2260 = vmatpush1.msra.mxu0 %v2167
    %2261 = vmatprep.subr.mxu0 0.0
    %2262 = vmatpush1.msra.mxu0 %v2168
    %2263 = vmatprep.subr.mxu0 0.0
    %2264 = vmatpush1.msra.mxu0 %v2169
    %2265 = vmatprep.subr.mxu0 0.0
    %2266 = vmatpush1.msra.mxu0 %v2170
    %2267 = vmatprep.mubr.f32.mxu0 %v2072
    %2268 = vmatmul.mubr.f32.gmra.mrb[0].mxu0 %v2071
    %v2269 = vpop.f32.mrb[0].mxu0
    %v2270 = vadd.f32 0.0, %v2269
    %v2271 = vpop.f32.mrb[0].mxu0
    %2272 = vdwg.mxu0
    %2273 = vmatprep.subr.mxu0 0.0
    %2274 = vmatpush1.msra.mxu0 %v2171
    %2275 = vmatprep.subr.mxu0 0.0
    %2276 = vmatpush1.msra.mxu0 %v2172
    %2277 = vmatprep.subr.mxu0 0.0
    %2278 = vmatpush1.msra.mxu0 %v2173
    %2279 = vmatprep.subr.mxu0 0.0
    %2280 = vmatpush1.msra.mxu0 %v2174
    %2281 = vmatprep.subr.mxu0 0.0
    %2282 = vmatpush1.msra.mxu0 %v2175
    %2283 = vmatprep.subr.mxu0 0.0
    %2284 = vmatpush1.msra.mxu0 %v2176
    %2285 = vmatprep.subr.mxu0 0.0
    %2286 = vmatpush1.msra.mxu0 %v2177
    %2287 = vmatprep.subr.mxu0 0.0
    %2288 = vmatpush1.msra.mxu0 %v2178
    %2289 = vmatprep.subr.mxu0 0.0
    %2290 = vmatpush1.msra.mxu0 %v2179
    %2291 = vmatprep.subr.mxu0 0.0
    %2292 = vmatpush1.msra.mxu0 %v2180
    %2293 = vmatprep.subr.mxu0 0.0
    %2294 = vmatpush1.msra.mxu0 %v2181
    %2295 = vmatprep.subr.mxu0 0.0
    %2296 = vmatpush1.msra.mxu0 %v2182
    %2297 = vmatprep.subr.mxu0 0.0
    %2298 = vmatpush1.msra.mxu0 %v2183
    %2299 = vmatprep.subr.mxu0 0.0
    %2300 = vmatpush1.msra.mxu0 %v2184
    %2301 = vmatprep.subr.mxu0 0.0
    %2302 = vmatpush1.msra.mxu0 %v2185
    %2303 = vmatprep.subr.mxu0 0.0
    %2304 = vmatpush1.msra.mxu0 %v2186
    %2305 = vmatprep.subr.mxu0 0.0
    %2306 = vmatpush1.msra.mxu0 %v2187
    %2307 = vmatprep.subr.mxu0 0.0
    %2308 = vmatpush1.msra.mxu0 %v2188
    %2309 = vmatprep.subr.mxu0 0.0
    %2310 = vmatpush1.msra.mxu0 %v2189
    %2311 = vmatprep.subr.mxu0 0.0
    %2312 = vmatpush1.msra.mxu0 %v2190
    %2313 = vmatprep.subr.mxu0 0.0
    %2314 = vmatpush1.msra.mxu0 %v2191
    %2315 = vmatprep.subr.mxu0 0.0
    %2316 = vmatpush1.msra.mxu0 %v2192
    %2317 = vmatprep.subr.mxu0 0.0
    %2318 = vmatpush1.msra.mxu0 %v2193
    %2319 = vmatprep.subr.mxu0 0.0
    %2320 = vmatpush1.msra.mxu0 %v2194
    %2321 = vmatprep.subr.mxu0 0.0
    %2322 = vmatpush1.msra.mxu0 %v2195
    %2323 = vmatprep.subr.mxu0 0.0
    %2324 = vmatpush1.msra.mxu0 %v2196
    %2325 = vmatprep.subr.mxu0 0.0
    %2326 = vmatpush1.msra.mxu0 %v2197
    %2327 = vmatprep.subr.mxu0 0.0
    %2328 = vmatpush1.msra.mxu0 %v2198
    %2329 = vmatprep.subr.mxu0 0.0
    %2330 = vmatpush1.msra.mxu0 %v2199
    %2331 = vmatprep.subr.mxu0 0.0
    %2332 = vmatpush1.msra.mxu0 %v2200
    %2333 = vmatprep.subr.mxu0 0.0
    %2334 = vmatpush1.msra.mxu0 %v2201
    %2335 = vmatprep.subr.mxu0 0.0
    %2336 = vmatpush1.msra.mxu0 %v2202
    %2337 = vmatprep.mubr.f32.mxu0 %v2074
    %2338 = vmatmul.mubr.f32.gmra.mrb[0].mxu0 %v2073
    %v2339 = vpop.f32.mrb[0].mxu0
    %v2340 = vadd.f32 %v2270, %v2339
    %v2341 = vpop.f32.mrb[0].mxu0
    %2342 = vdwg.mxu0
    %v2343 = vmul.f32 %v2340, 0.0078125
    %v2344 = vmul.f32 %v2343, %v2343
    %v2346 = vrot.slane %v2344, 7
    %v2348 = vsub.f32 %v2343, %v2346
    %v2349 = vmax.f32 %v2348, 0.0
    %v2350 = vld [vmem:[%s2] sm:$0x1]
    %v2351 = vadd.f32 %v2349, 1e-05
    %v2352 = vrsqrt.pop %v2351
    %v2355 = vunpack.c.l.s4 1966171168
    %v2356 = vunpack.c.0.s8 %v2355
    %v2357 = vlaneseq
    %v2358 = vshrl.u32 %v2357, 7
    %v2359 = vsub.s32 %v2356, %v2358
    %v2360 = vrot.slane %v2352, %v2359
    %v2361 = vcombine.high %v2360, %v2360
    %v2363 = vunpack.c.l.s4 1966171168
    %v2364 = vunpack.c.0.s8 %v2363
    %v2365 = vlaneseq
    %v2366 = vshrl.u32 %v2365, 7
    %v2367 = vsub.s32 %v2364, %v2366
    %v2368 = vrot.slane %v2361, %v2367
    %v2370 = vmul.f32 %v2350, %v2368
    %v2371 = vld [vmem:[%s3] sm:$0x1]
    %v2372 = vmul.f32 %v2343, %v2370
    %v2373 = vsub.f32 %v2371, %v2372
    %v2375 = vlaneseq
    %v2376 = vshrl.u32 %v2375, 7
    %v2377 = vsub.s32 0, %v2376
    %v2378 = vrot.slane %v2373, %v2377
    %v2380 = vsel %vm2070, %v2370, %v2378
    %v2381 = vld [vmem:[%s5] sm:$0xff]
    %v2382 = vld [vmem:[%s5 + $0x8] sm:$0xff]
    %v2383 = vunpack.c.l.bf16 %v2381
    %v2384 = vunpack.c.h.bf16 %v2381
    %v2385 = vunpack.c.l.bf16 %v2382
    %v2386 = vunpack.c.h.bf16 %v2382
    %vm2387 = vcmask 64512
    %v2389 = vsel %vm2387, %v2380, 0
    %2391 = vmatprep.subr.mxu0 %v2384
    %2392 = vmatpush1.msra.mxu0 %v2383
    %2393 = vmatprep.subr.mxu0 0.0
    %2394 = vmatpush1.msra.mxu0 0.0
    %2395 = vmatprep.subr.mxu0 0.0
    %2396 = vmatpush1.msra.mxu0 0.0
    %2397 = vmatprep.subr.mxu0 0.0
    %2398 = vmatpush1.msra.mxu0 0.0
    %2399 = vmatprep.subr.mxu0 0.0
    %2400 = vmatpush1.msra.mxu0 0.0
    %2401 = vmatprep.subr.mxu0 0.0
    %2402 = vmatpush1.msra.mxu0 0.0
    %2403 = vmatprep.subr.mxu0 0.0
    %2404 = vmatpush1.msra.mxu0 0.0
    %2405 = vmatprep.subr.mxu0 0.0
    %2406 = vmatpush1.msra.mxu0 0.0
    %2407 = vmatprep.subr.mxu0 0.0
    %2408 = vmatpush1.msra.mxu0 0.0
    %2409 = vmatprep.subr.mxu0 0.0
    %2410 = vmatpush1.msra.mxu0 0.0
    %2411 = vmatprep.subr.mxu0 0.0
    %2412 = vmatpush1.msra.mxu0 0.0
    %2413 = vmatprep.subr.mxu0 0.0
    %2414 = vmatpush1.msra.mxu0 0.0
    %2415 = vmatprep.subr.mxu0 0.0
    %2416 = vmatpush1.msra.mxu0 0.0
    %2417 = vmatprep.subr.mxu0 0.0
    %2418 = vmatpush1.msra.mxu0 0.0
    %2419 = vmatprep.subr.mxu0 0.0
    %2420 = vmatpush1.msra.mxu0 0.0
    %2421 = vmatprep.subr.mxu0 0.0
    %2422 = vmatpush1.msra.mxu0 0.0
    %2423 = vmatprep.subr.mxu0 0.0
    %2424 = vmatpush1.msra.mxu0 0.0
    %2425 = vmatprep.subr.mxu0 0.0
    %2426 = vmatpush1.msra.mxu0 0.0
    %2427 = vmatprep.subr.mxu0 0.0
    %2428 = vmatpush1.msra.mxu0 0.0
    %2429 = vmatprep.subr.mxu0 0.0
    %2430 = vmatpush1.msra.mxu0 0.0
    %2431 = vmatprep.subr.mxu0 0.0
    %2432 = vmatpush1.msra.mxu0 0.0
    %2433 = vmatprep.subr.mxu0 0.0
    %2434 = vmatpush1.msra.mxu0 0.0
    %2435 = vmatprep.subr.mxu0 0.0
    %2436 = vmatpush1.msra.mxu0 0.0
    %2437 = vmatprep.subr.mxu0 0.0
    %2438 = vmatpush1.msra.mxu0 0.0
    %2439 = vmatprep.subr.mxu0 0.0
    %2440 = vmatpush1.msra.mxu0 0.0
    %2441 = vmatprep.subr.mxu0 0.0
    %2442 = vmatpush1.msra.mxu0 0.0
    %2443 = vmatprep.subr.mxu0 0.0
    %2444 = vmatpush1.msra.mxu0 0.0
    %2445 = vmatprep.subr.mxu0 0.0
    %2446 = vmatpush1.msra.mxu0 0.0
    %2447 = vmatprep.subr.mxu0 0.0
    %2448 = vmatpush1.msra.mxu0 0.0
    %2449 = vmatprep.subr.mxu0 0.0
    %2450 = vmatpush1.msra.mxu0 0.0
    %2451 = vmatprep.subr.mxu0 0.0
    %2452 = vmatpush1.msra.mxu0 0.0
    %2453 = vmatprep.subr.mxu0 0.0
    %2454 = vmatpush1.msra.mxu0 0.0
    %2455 = vmatprep.mubr.f32.mxu0 0.0
    %2456 = vmatmul.mubr.f32.gmra.mrb[0].mxu0 %v2389
    %v2457 = vpop.f32.mrb[0].mxu0
    %v2458 = vadd.f32 0.0, %v2457
    %v2459 = vpop.f32.mrb[0].mxu0
    %v2460 = vadd.f32 0.0, %v2459
    %2461 = vdwg.mxu0
    %2462 = vmatprep.subr.mxu0 %v2386
    %2463 = vmatpush1.msra.mxu0 %v2385
    %2464 = vmatprep.subr.mxu0 0.0
    %2465 = vmatpush1.msra.mxu0 0.0
    %2466 = vmatprep.subr.mxu0 0.0
    %2467 = vmatpush1.msra.mxu0 0.0
    %2468 = vmatprep.subr.mxu0 0.0
    %2469 = vmatpush1.msra.mxu0 0.0
    %2470 = vmatprep.subr.mxu0 0.0
    %2471 = vmatpush1.msra.mxu0 0.0
    %2472 = vmatprep.subr.mxu0 0.0
    %2473 = vmatpush1.msra.mxu0 0.0
    %2474 = vmatprep.subr.mxu0 0.0
    %2475 = vmatpush1.msra.mxu0 0.0
    %2476 = vmatprep.subr.mxu0 0.0
    %2477 = vmatpush1.msra.mxu0 0.0
    %2478 = vmatprep.subr.mxu0 0.0
    %2479 = vmatpush1.msra.mxu0 0.0
    %2480 = vmatprep.subr.mxu0 0.0
    %2481 = vmatpush1.msra.mxu0 0.0
    %2482 = vmatprep.subr.mxu0 0.0
    %2483 = vmatpush1.msra.mxu0 0.0
    %2484 = vmatprep.subr.mxu0 0.0
    %2485 = vmatpush1.msra.mxu0 0.0
    %2486 = vmatprep.subr.mxu0 0.0
    %2487 = vmatpush1.msra.mxu0 0.0
    %2488 = vmatprep.subr.mxu0 0.0
    %2489 = vmatpush1.msra.mxu0 0.0
    %2490 = vmatprep.subr.mxu0 0.0
    %2491 = vmatpush1.msra.mxu0 0.0
    %2492 = vmatprep.subr.mxu0 0.0
    %2493 = vmatpush1.msra.mxu0 0.0
    %2494 = vmatprep.subr.mxu0 0.0
    %2495 = vmatpush1.msra.mxu0 0.0
    %2496 = vmatprep.subr.mxu0 0.0
    %2497 = vmatpush1.msra.mxu0 0.0
    %2498 = vmatprep.subr.mxu0 0.0
    %2499 = vmatpush1.msra.mxu0 0.0
    %2500 = vmatprep.subr.mxu0 0.0
    %2501 = vmatpush1.msra.mxu0 0.0
    %2502 = vmatprep.subr.mxu0 0.0
    %2503 = vmatpush1.msra.mxu0 0.0
    %2504 = vmatprep.subr.mxu0 0.0
    %2505 = vmatpush1.msra.mxu0 0.0
    %2506 = vmatprep.subr.mxu0 0.0
    %2507 = vmatpush1.msra.mxu0 0.0
    %2508 = vmatprep.subr.mxu0 0.0
    %2509 = vmatpush1.msra.mxu0 0.0
    %2510 = vmatprep.subr.mxu0 0.0
    %2511 = vmatpush1.msra.mxu0 0.0
    %2512 = vmatprep.subr.mxu0 0.0
    %2513 = vmatpush1.msra.mxu0 0.0
    %2514 = vmatprep.subr.mxu0 0.0
    %2515 = vmatpush1.msra.mxu0 0.0
    %2516 = vmatprep.subr.mxu0 0.0
    %2517 = vmatpush1.msra.mxu0 0.0
    %2518 = vmatprep.subr.mxu0 0.0
    %2519 = vmatpush1.msra.mxu0 0.0
    %2520 = vmatprep.subr.mxu0 0.0
    %2521 = vmatpush1.msra.mxu0 0.0
    %2522 = vmatprep.subr.mxu0 0.0
    %2523 = vmatpush1.msra.mxu0 0.0
    %2524 = vmatprep.subr.mxu0 0.0
    %2525 = vmatpush1.msra.mxu0 0.0
    %2526 = vmatprep.mubr.f32.mxu0 0.0
    %2527 = vmatmul.mubr.f32.gmra.mrb[0].mxu0 %v2389
    %v2528 = vpop.f32.mrb[0].mxu0
    %v2529 = vadd.f32 0.0, %v2528
    %v2530 = vpop.f32.mrb[0].mxu0
    %v2531 = vadd.f32 0.0, %v2530
    %2532 = vdwg.mxu0
    %v2533 = vlaneseq
    %v2534 = vshrl.u32 %v2533, 7
    %v2535 = vsub.s32 0, %v2534
    %v2536 = vrot.slane %v2458, %v2535
    %v2537 = vlaneseq
    %v2538 = vshrl.u32 %v2537, 7
    %v2539 = vsub.s32 0, %v2538
    %v2540 = vrot.slane %v2460, %v2539
    %v2541 = vlaneseq
    %v2542 = vshrl.u32 %v2541, 7
    %v2543 = vsub.s32 0, %v2542
    %v2544 = vrot.slane %v2529, %v2543
    %v2545 = vlaneseq
    %v2546 = vshrl.u32 %v2545, 7
    %v2547 = vsub.s32 0, %v2546
    %v2548 = vrot.slane %v2531, %v2547
    %v2549 = vmul.f32 %v2005, %v2536
    %v2550 = vmul.f32 %v2006, %v2540
    %v2551 = vmul.f32 %v2007, %v2544
    %v2552 = vmul.f32 %v2008, %v2548
    %v2553 = vlaneseq
    %v2554 = vshrl.u32 %v2553, 7
    %v2555 = vsub.s32 1, %v2554
    %v2556 = vrot.slane %v2458, %v2555
    %v2557 = vlaneseq
    %v2558 = vshrl.u32 %v2557, 7
    %v2559 = vsub.s32 1, %v2558
    %v2560 = vrot.slane %v2460, %v2559
    %v2561 = vlaneseq
    %v2562 = vshrl.u32 %v2561, 7
    %v2563 = vsub.s32 1, %v2562
    %v2564 = vrot.slane %v2529, %v2563
    %v2565 = vlaneseq
    %v2566 = vshrl.u32 %v2565, 7
    %v2567 = vsub.s32 1, %v2566
    %v2568 = vrot.slane %v2531, %v2567
    %v2569 = vadd.f32 %v2549, %v2556
    %v2570 = vadd.f32 %v2550, %v2560
    %v2571 = vadd.f32 %v2551, %v2564
    %v2572 = vadd.f32 %v2552, %v2568
    %v2573 = vpack.c.bf16 %v2569, %v2569
    %v2574 = vpack.c.bf16 %v2570, %v2570
    %v2575 = vpack.c.bf16 %v2571, %v2571
    %v2576 = vpack.c.bf16 %v2572, %v2572
    %v2577 = vld [vmem:[%s6] sm:$0xff]
    %v2578 = vld [vmem:[%s6 + $0x8] sm:$0xff]
    %v2579 = vld [vmem:[%s6 + $0x10] sm:$0xff]
    %v2580 = vld [vmem:[%s6 + $0x18] sm:$0xff]
    %v2581 = vld [vmem:[%s6 + $0x20] sm:$0xff]
    %v2582 = vld [vmem:[%s6 + $0x28] sm:$0xff]
    %v2583 = vld [vmem:[%s6 + $0x30] sm:$0xff]
    %v2584 = vld [vmem:[%s6 + $0x38] sm:$0xff]
    %v2585 = vld [vmem:[%s6 + $0x40] sm:$0xff]
    %v2586 = vld [vmem:[%s6 + $0x48] sm:$0xff]
    %v2587 = vld [vmem:[%s6 + $0x50] sm:$0xff]
    %v2588 = vld [vmem:[%s6 + $0x58] sm:$0xff]
    %v2589 = vld [vmem:[%s6 + $0x60] sm:$0xff]
    %v2590 = vld [vmem:[%s6 + $0x68] sm:$0xff]
    %v2591 = vld [vmem:[%s6 + $0x70] sm:$0xff]
    %v2592 = vld [vmem:[%s6 + $0x78] sm:$0xff]
    %v2593 = vld [vmem:[%s6 + $0x80] sm:$0xff]
    %v2594 = vld [vmem:[%s6 + $0x88] sm:$0xff]
    %v2595 = vld [vmem:[%s6 + $0x90] sm:$0xff]
    %v2596 = vld [vmem:[%s6 + $0x98] sm:$0xff]
    %v2597 = vld [vmem:[%s6 + $0xa0] sm:$0xff]
    %v2598 = vld [vmem:[%s6 + $0xa8] sm:$0xff]
    %v2599 = vld [vmem:[%s6 + $0xb0] sm:$0xff]
    %v2600 = vld [vmem:[%s6 + $0xb8] sm:$0xff]
    %v2601 = vld [vmem:[%s6 + $0xc0] sm:$0xff]
    %v2602 = vld [vmem:[%s6 + $0xc8] sm:$0xff]
    %v2603 = vld [vmem:[%s6 + $0xd0] sm:$0xff]
    %v2604 = vld [vmem:[%s6 + $0xd8] sm:$0xff]
    %v2605 = vld [vmem:[%s6 + $0xe0] sm:$0xff]
    %v2606 = vld [vmem:[%s6 + $0xe8] sm:$0xff]
    %v2607 = vld [vmem:[%s6 + $0xf0] sm:$0xff]
    %v2608 = vld [vmem:[%s6 + $0xf8] sm:$0xff]
    %v2609 = vld [vmem:[%s6 + $0x100] sm:$0xff]
    %v2610 = vld [vmem:[%s6 + $0x108] sm:$0xff]
    %v2611 = vld [vmem:[%s6 + $0x110] sm:$0xff]
    %v2612 = vld [vmem:[%s6 + $0x118] sm:$0xff]
    %v2613 = vld [vmem:[%s6 + $0x120] sm:$0xff]
    %v2614 = vld [vmem:[%s6 + $0x128] sm:$0xff]
    %v2615 = vld [vmem:[%s6 + $0x130] sm:$0xff]
    %v2616 = vld [vmem:[%s6 + $0x138] sm:$0xff]
    %v2617 = vld [vmem:[%s6 + $0x140] sm:$0xff]
    %v2618 = vld [vmem:[%s6 + $0x148] sm:$0xff]
    %v2619 = vld [vmem:[%s6 + $0x150] sm:$0xff]
    %v2620 = vld [vmem:[%s6 + $0x158] sm:$0xff]
    %v2621 = vld [vmem:[%s6 + $0x160] sm:$0xff]
    %v2622 = vld [vmem:[%s6 + $0x168] sm:$0xff]
    %v2623 = vld [vmem:[%s6 + $0x170] sm:$0xff]
    %v2624 = vld [vmem:[%s6 + $0x178] sm:$0xff]
    %v2625 = vld [vmem:[%s6 + $0x180] sm:$0xff]
    %v2626 = vld [vmem:[%s6 + $0x188] sm:$0xff]
    %v2627 = vld [vmem:[%s6 + $0x190] sm:$0xff]
    %v2628 = vld [vmem:[%s6 + $0x198] sm:$0xff]
    %v2629 = vld [vmem:[%s6 + $0x1a0] sm:$0xff]
    %v2630 = vld [vmem:[%s6 + $0x1a8] sm:$0xff]
    %v2631 = vld [vmem:[%s6 + $0x1b0] sm:$0xff]
    %v2632 = vld [vmem:[%s6 + $0x1b8] sm:$0xff]
    %v2633 = vld [vmem:[%s6 + $0x1c0] sm:$0xff]
    %v2634 = vld [vmem:[%s6 + $0x1c8] sm:$0xff]
    %v2635 = vld [vmem:[%s6 + $0x1d0] sm:$0xff]
    %v2636 = vld [vmem:[%s6 + $0x1d8] sm:$0xff]
    %v2637 = vld [vmem:[%s6 + $0x1e0] sm:$0xff]
    %v2638 = vld [vmem:[%s6 + $0x1e8] sm:$0xff]
    %v2639 = vld [vmem:[%s6 + $0x1f0] sm:$0xff]
    %v2640 = vld [vmem:[%s6 + $0x1f8] sm:$0xff]
    %v2641 = vld [vmem:[%s7] sm:$0x3]
    %v2643 = vlaneseq
    %v2644 = vshrl.u32 %v2643, 7
    %v2645 = vsub.s32 0, %v2644
    %v2646 = vrot.slane %v2641, %v2645
    %v2647 = vlaneseq
    %v2648 = vshrl.u32 %v2647, 7
    %v2649 = vsub.s32 1, %v2648
    %v2650 = vrot.slane %v2641, %v2649
    %v2717 = vunpack.c.l.b16 %v2577
    %v2718 = vunpack.c.h.b16 %v2577
    %v2719 = vunpack.c.l.b16 %v2578
    %v2720 = vunpack.c.h.b16 %v2578
    %v2721 = vunpack.c.l.b16 %v2579
    %v2722 = vunpack.c.h.b16 %v2579
    %v2723 = vunpack.c.l.b16 %v2580
    %v2724 = vunpack.c.h.b16 %v2580
    %v2725 = vunpack.c.l.b16 %v2581
    %v2726 = vunpack.c.h.b16 %v2581
    %v2727 = vunpack.c.l.b16 %v2582
    %v2728 = vunpack.c.h.b16 %v2582
    %v2729 = vunpack.c.l.b16 %v2583
    %v2730 = vunpack.c.h.b16 %v2583
    %v2731 = vunpack.c.l.b16 %v2584
    %v2732 = vunpack.c.h.b16 %v2584
    %v2733 = vunpack.c.l.b16 %v2585
    %v2734 = vunpack.c.h.b16 %v2585
    %v2735 = vunpack.c.l.b16 %v2586
    %v2736 = vunpack.c.h.b16 %v2586
    %v2737 = vunpack.c.l.b16 %v2587
    %v2738 = vunpack.c.h.b16 %v2587
    %v2739 = vunpack.c.l.b16 %v2588
    %v2740 = vunpack.c.h.b16 %v2588
    %v2741 = vunpack.c.l.b16 %v2589
    %v2742 = vunpack.c.h.b16 %v2589
    %v2743 = vunpack.c.l.b16 %v2590
    %v2744 = vunpack.c.h.b16 %v2590
    %v2745 = vunpack.c.l.b16 %v2591
    %v2746 = vunpack.c.h.b16 %v2591
    %v2747 = vunpack.c.l.b16 %v2592
    %v2748 = vunpack.c.h.b16 %v2592
    %v2749 = vunpack.c.l.b16 %v2593
    %v2750 = vunpack.c.h.b16 %v2593
    %v2751 = vunpack.c.l.b16 %v2594
    %v2752 = vunpack.c.h.b16 %v2594
    %v2753 = vunpack.c.l.b16 %v2595
    %v2754 = vunpack.c.h.b16 %v2595
    %v2755 = vunpack.c.l.b16 %v2596
    %v2756 = vunpack.c.h.b16 %v2596
    %v2757 = vunpack.c.l.b16 %v2597
    %v2758 = vunpack.c.h.b16 %v2597
    %v2759 = vunpack.c.l.b16 %v2598
    %v2760 = vunpack.c.h.b16 %v2598
    %v2761 = vunpack.c.l.b16 %v2599
    %v2762 = vunpack.c.h.b16 %v2599
    %v2763 = vunpack.c.l.b16 %v2600
    %v2764 = vunpack.c.h.b16 %v2600
    %v2765 = vunpack.c.l.b16 %v2601
    %v2766 = vunpack.c.h.b16 %v2601
    %v2767 = vunpack.c.l.b16 %v2602
    %v2768 = vunpack.c.h.b16 %v2602
    %v2769 = vunpack.c.l.b16 %v2603
    %v2770 = vunpack.c.h.b16 %v2603
    %v2771 = vunpack.c.l.b16 %v2604
    %v2772 = vunpack.c.h.b16 %v2604
    %v2773 = vunpack.c.l.b16 %v2605
    %v2774 = vunpack.c.h.b16 %v2605
    %v2775 = vunpack.c.l.b16 %v2606
    %v2776 = vunpack.c.h.b16 %v2606
    %v2777 = vunpack.c.l.b16 %v2607
    %v2778 = vunpack.c.h.b16 %v2607
    %v2779 = vunpack.c.l.b16 %v2608
    %v2780 = vunpack.c.h.b16 %v2608
    %v2781 = vunpack.c.l.b16 %v2609
    %v2782 = vunpack.c.h.b16 %v2609
    %v2783 = vunpack.c.l.b16 %v2610
    %v2784 = vunpack.c.h.b16 %v2610
    %v2785 = vunpack.c.l.b16 %v2611
    %v2786 = vunpack.c.h.b16 %v2611
    %v2787 = vunpack.c.l.b16 %v2612
    %v2788 = vunpack.c.h.b16 %v2612
    %v2789 = vunpack.c.l.b16 %v2613
    %v2790 = vunpack.c.h.b16 %v2613
    %v2791 = vunpack.c.l.b16 %v2614
    %v2792 = vunpack.c.h.b16 %v2614
    %v2793 = vunpack.c.l.b16 %v2615
    %v2794 = vunpack.c.h.b16 %v2615
    %v2795 = vunpack.c.l.b16 %v2616
    %v2796 = vunpack.c.h.b16 %v2616
    %v2797 = vunpack.c.l.b16 %v2617
    %v2798 = vunpack.c.h.b16 %v2617
    %v2799 = vunpack.c.l.b16 %v2618
    %v2800 = vunpack.c.h.b16 %v2618
    %v2801 = vunpack.c.l.b16 %v2619
    %v2802 = vunpack.c.h.b16 %v2619
    %v2803 = vunpack.c.l.b16 %v2620
    %v2804 = vunpack.c.h.b16 %v2620
    %v2805 = vunpack.c.l.b16 %v2621
    %v2806 = vunpack.c.h.b16 %v2621
    %v2807 = vunpack.c.l.b16 %v2622
    %v2808 = vunpack.c.h.b16 %v2622
    %v2809 = vunpack.c.l.b16 %v2623
    %v2810 = vunpack.c.h.b16 %v2623
    %v2811 = vunpack.c.l.b16 %v2624
    %v2812 = vunpack.c.h.b16 %v2624
    %v2813 = vunpack.c.l.b16 %v2625
    %v2814 = vunpack.c.h.b16 %v2625
    %v2815 = vunpack.c.l.b16 %v2626
    %v2816 = vunpack.c.h.b16 %v2626
    %v2817 = vunpack.c.l.b16 %v2627
    %v2818 = vunpack.c.h.b16 %v2627
    %v2819 = vunpack.c.l.b16 %v2628
    %v2820 = vunpack.c.h.b16 %v2628
    %v2821 = vunpack.c.l.b16 %v2629
    %v2822 = vunpack.c.h.b16 %v2629
    %v2823 = vunpack.c.l.b16 %v2630
    %v2824 = vunpack.c.h.b16 %v2630
    %v2825 = vunpack.c.l.b16 %v2631
    %v2826 = vunpack.c.h.b16 %v2631
    %v2827 = vunpack.c.l.b16 %v2632
    %v2828 = vunpack.c.h.b16 %v2632
    %v2829 = vunpack.c.l.b16 %v2633
    %v2830 = vunpack.c.h.b16 %v2633
    %v2831 = vunpack.c.l.b16 %v2634
    %v2832 = vunpack.c.h.b16 %v2634
    %v2833 = vunpack.c.l.b16 %v2635
    %v2834 = vunpack.c.h.b16 %v2635
    %v2835 = vunpack.c.l.b16 %v2636
    %v2836 = vunpack.c.h.b16 %v2636
    %v2837 = vunpack.c.l.b16 %v2637
    %v2838 = vunpack.c.h.b16 %v2637
    %v2839 = vunpack.c.l.b16 %v2638
    %v2840 = vunpack.c.h.b16 %v2638
    %v2841 = vunpack.c.l.b16 %v2639
    %v2842 = vunpack.c.h.b16 %v2639
    %v2843 = vunpack.c.l.b16 %v2640
    %v2844 = vunpack.c.h.b16 %v2640
    %v2845 = vpack.c.b16 %v2719, %v2717
    %v2846 = vpack.c.b16 %v2720, %v2718
    %v2847 = vpack.c.b16 %v2723, %v2721
    %v2848 = vpack.c.b16 %v2724, %v2722
    %v2849 = vpack.c.b16 %v2727, %v2725
    %v2850 = vpack.c.b16 %v2728, %v2726
    %v2851 = vpack.c.b16 %v2731, %v2729
    %v2852 = vpack.c.b16 %v2732, %v2730
    %v2853 = vpack.c.b16 %v2735, %v2733
    %v2854 = vpack.c.b16 %v2736, %v2734
    %v2855 = vpack.c.b16 %v2739, %v2737
    %v2856 = vpack.c.b16 %v2740, %v2738
    %v2857 = vpack.c.b16 %v2743, %v2741
    %v2858 = vpack.c.b16 %v2744, %v2742
    %v2859 = vpack.c.b16 %v2747, %v2745
    %v2860 = vpack.c.b16 %v2748, %v2746
    %v2861 = vpack.c.b16 %v2751, %v2749
    %v2862 = vpack.c.b16 %v2752, %v2750
    %v2863 = vpack.c.b16 %v2755, %v2753
    %v2864 = vpack.c.b16 %v2756, %v2754
    %v2865 = vpack.c.b16 %v2759, %v2757
    %v2866 = vpack.c.b16 %v2760, %v2758
    %v2867 = vpack.c.b16 %v2763, %v2761
    %v2868 = vpack.c.b16 %v2764, %v2762
    %v2869 = vpack.c.b16 %v2767, %v2765
    %v2870 = vpack.c.b16 %v2768, %v2766
    %v2871 = vpack.c.b16 %v2771, %v2769
    %v2872 = vpack.c.b16 %v2772, %v2770
    %v2873 = vpack.c.b16 %v2775, %v2773
    %v2874 = vpack.c.b16 %v2776, %v2774
    %v2875 = vpack.c.b16 %v2779, %v2777
    %v2876 = vpack.c.b16 %v2780, %v2778
    %v2877 = vpack.c.b16 %v2783, %v2781
    %v2878 = vpack.c.b16 %v2784, %v2782
    %v2879 = vpack.c.b16 %v2787, %v2785
    %v2880 = vpack.c.b16 %v2788, %v2786
    %v2881 = vpack.c.b16 %v2791, %v2789
    %v2882 = vpack.c.b16 %v2792, %v2790
    %v2883 = vpack.c.b16 %v2795, %v2793
    %v2884 = vpack.c.b16 %v2796, %v2794
    %v2885 = vpack.c.b16 %v2799, %v2797
    %v2886 = vpack.c.b16 %v2800, %v2798
    %v2887 = vpack.c.b16 %v2803, %v2801
    %v2888 = vpack.c.b16 %v2804, %v2802
    %v2889 = vpack.c.b16 %v2807, %v2805
    %v2890 = vpack.c.b16 %v2808, %v2806
    %v2891 = vpack.c.b16 %v2811, %v2809
    %v2892 = vpack.c.b16 %v2812, %v2810
    %v2893 = vpack.c.b16 %v2815, %v2813
    %v2894 = vpack.c.b16 %v2816, %v2814
    %v2895 = vpack.c.b16 %v2819, %v2817
    %v2896 = vpack.c.b16 %v2820, %v2818
    %v2897 = vpack.c.b16 %v2823, %v2821
    %v2898 = vpack.c.b16 %v2824, %v2822
    %v2899 = vpack.c.b16 %v2827, %v2825
    %v2900 = vpack.c.b16 %v2828, %v2826
    %v2901 = vpack.c.b16 %v2831, %v2829
    %v2902 = vpack.c.b16 %v2832, %v2830
    %v2903 = vpack.c.b16 %v2835, %v2833
    %v2904 = vpack.c.b16 %v2836, %v2834
    %v2905 = vpack.c.b16 %v2839, %v2837
    %v2906 = vpack.c.b16 %v2840, %v2838
    %v2907 = vpack.c.b16 %v2843, %v2841
    %v2908 = vpack.c.b16 %v2844, %v2842
    %2973 = vmatprep.subr.bf16.mxu0 %v2846
    %2974 = vmatpush1.bf16.msra.mxu0 %v2845
    %2975 = vmatprep.subr.bf16.mxu0 %v2848
    %2976 = vmatpush1.bf16.msra.mxu0 %v2847
    %2977 = vmatprep.subr.bf16.mxu0 %v2850
    %2978 = vmatpush1.bf16.msra.mxu0 %v2849
    %2979 = vmatprep.subr.bf16.mxu0 %v2852
    %2980 = vmatpush1.bf16.msra.mxu0 %v2851
    %2981 = vmatprep.subr.bf16.mxu0 %v2854
    %2982 = vmatpush1.bf16.msra.mxu0 %v2853
    %2983 = vmatprep.subr.bf16.mxu0 %v2856
    %2984 = vmatpush1.bf16.msra.mxu0 %v2855
    %2985 = vmatprep.subr.bf16.mxu0 %v2858
    %2986 = vmatpush1.bf16.msra.mxu0 %v2857
    %2987 = vmatprep.subr.bf16.mxu0 %v2860
    %2988 = vmatpush1.bf16.msra.mxu0 %v2859
    %2989 = vmatprep.subr.bf16.mxu0 %v2862
    %2990 = vmatpush1.bf16.msra.mxu0 %v2861
    %2991 = vmatprep.subr.bf16.mxu0 %v2864
    %2992 = vmatpush1.bf16.msra.mxu0 %v2863
    %2993 = vmatprep.subr.bf16.mxu0 %v2866
    %2994 = vmatpush1.bf16.msra.mxu0 %v2865
    %2995 = vmatprep.subr.bf16.mxu0 %v2868
    %2996 = vmatpush1.bf16.msra.mxu0 %v2867
    %2997 = vmatprep.subr.bf16.mxu0 %v2870
    %2998 = vmatpush1.bf16.msra.mxu0 %v2869
    %2999 = vmatprep.subr.bf16.mxu0 %v2872
    %3000 = vmatpush1.bf16.msra.mxu0 %v2871
    %3001 = vmatprep.subr.bf16.mxu0 %v2874
    %3002 = vmatpush1.bf16.msra.mxu0 %v2873
    %3003 = vmatprep.subr.bf16.mxu0 %v2876
    %3004 = vmatpush1.bf16.msra.mxu0 %v2875
    %3005 = vmatprep.mubr.bf16.mxu0 %v2574
    %3006 = vmatmul.mubr.bf16.gmra.mrb[0].mxu0 %v2573
    %v3007 = vpop.f32.mrb[0].mxu0
    %v3008 = vadd.f32 %v2646, %v3007
    %v3009 = vpop.f32.mrb[0].mxu0
    %v3010 = vadd.f32 %v2650, %v3009
    %v3011 = vpop.f32.mrb[0].mxu0
    %v3012 = vpop.f32.mrb[0].mxu0
    %3013 = vdwg.mxu0
    %3014 = vmatprep.subr.bf16.mxu0 %v2878
    %3015 = vmatpush1.bf16.msra.mxu0 %v2877
    %3016 = vmatprep.subr.bf16.mxu0 %v2880
    %3017 = vmatpush1.bf16.msra.mxu0 %v2879
    %3018 = vmatprep.subr.bf16.mxu0 %v2882
    %3019 = vmatpush1.bf16.msra.mxu0 %v2881
    %3020 = vmatprep.subr.bf16.mxu0 %v2884
    %3021 = vmatpush1.bf16.msra.mxu0 %v2883
    %3022 = vmatprep.subr.bf16.mxu0 %v2886
    %3023 = vmatpush1.bf16.msra.mxu0 %v2885
    %3024 = vmatprep.subr.bf16.mxu0 %v2888
    %3025 = vmatpush1.bf16.msra.mxu0 %v2887
    %3026 = vmatprep.subr.bf16.mxu0 %v2890
    %3027 = vmatpush1.bf16.msra.mxu0 %v2889
    %3028 = vmatprep.subr.bf16.mxu0 %v2892
    %3029 = vmatpush1.bf16.msra.mxu0 %v2891
    %3030 = vmatprep.subr.bf16.mxu0 %v2894
    %3031 = vmatpush1.bf16.msra.mxu0 %v2893
    %3032 = vmatprep.subr.bf16.mxu0 %v2896
    %3033 = vmatpush1.bf16.msra.mxu0 %v2895
    %3034 = vmatprep.subr.bf16.mxu0 %v2898
    %3035 = vmatpush1.bf16.msra.mxu0 %v2897
    %3036 = vmatprep.subr.bf16.mxu0 %v2900
    %3037 = vmatpush1.bf16.msra.mxu0 %v2899
    %3038 = vmatprep.subr.bf16.mxu0 %v2902
    %3039 = vmatpush1.bf16.msra.mxu0 %v2901
    %3040 = vmatprep.subr.bf16.mxu0 %v2904
    %3041 = vmatpush1.bf16.msra.mxu0 %v2903
    %3042 = vmatprep.subr.bf16.mxu0 %v2906
    %3043 = vmatpush1.bf16.msra.mxu0 %v2905
    %3044 = vmatprep.subr.bf16.mxu0 %v2908
    %3045 = vmatpush1.bf16.msra.mxu0 %v2907
    %3046 = vmatprep.mubr.bf16.mxu0 %v2576
    %3047 = vmatmul.mubr.bf16.gmra.mrb[0].mxu0 %v2575
    %v3048 = vpop.f32.mrb[0].mxu0
    %v3049 = vadd.f32 %v3008, %v3048
    %v3050 = vpop.f32.mrb[0].mxu0
    %v3051 = vadd.f32 %v3010, %v3050
    %v3052 = vpop.f32.mrb[0].mxu0
    %v3053 = vpop.f32.mrb[0].mxu0
    %3054 = vdwg.mxu0
    %v3055 = vmax.f32 %v3049, 0.0
    %v3056 = vmax.f32 %v3051, 0.0
    %v3057 = vsel %vm2009, %v3055, 0.0
    %v3058 = vrot.slane %v3057, 4
    %v3059 = vadd.f32 %v3057, %v3058
    %v3060 = vrot.slane %v3059, 2
    %v3061 = vadd.f32 %v3059, %v3060
    %v3062 = vrot.slane %v3061, 1
    %v3063 = vadd.f32 %v3061, %v3062
    %v3064 = vsel %vm2009, %v3056, 0.0
    %v3065 = vrot.slane %v3064, 4
    %v3066 = vadd.f32 %v3064, %v3065
    %v3067 = vrot.slane %v3066, 2
    %v3068 = vadd.f32 %v3066, %v3067
    %v3069 = vrot.slane %v3068, 1
    %v3070 = vadd.f32 %v3068, %v3069
    %v3071 = vmul.f32 %v3055, %v3055
    %v3072 = vmul.f32 %v3056, %v3056
    %v3073 = vsel %vm2009, %v3071, 0.0
    %v3074 = vrot.slane %v3073, 4
    %v3075 = vadd.f32 %v3073, %v3074
    %v3076 = vrot.slane %v3075, 2
    %v3077 = vadd.f32 %v3075, %v3076
    %v3078 = vrot.slane %v3077, 1
    %v3079 = vadd.f32 %v3077, %v3078
    %v3080 = vsel %vm2009, %v3072, 0.0
    %v3081 = vrot.slane %v3080, 4
    %v3082 = vadd.f32 %v3080, %v3081
    %v3083 = vrot.slane %v3082, 2
    %v3084 = vadd.f32 %v3082, %v3083
    %v3085 = vrot.slane %v3084, 1
    %v3086 = vadd.f32 %v3084, %v3085
    %v3087 = vsel %vm2070, %v3063, %v3079
    %v3088 = vsel %vm2070, %v3070, %v3086
    %v3089 = vld [vmem:[%s10] sm:$0xf]
    %v3090 = vld [vmem:[%s10 + $0x4] sm:$0xf]
    %v3091 = vld [vmem:[%s10 + $0x8] sm:$0xf]
    %v3092 = vld [vmem:[%s10 + $0xc] sm:$0xf]
    %v3093 = vld [vmem:[%s10 + $0x10] sm:$0xf]
    %v3094 = vld [vmem:[%s10 + $0x14] sm:$0xf]
    %v3095 = vld [vmem:[%s10 + $0x18] sm:$0xf]
    %v3096 = vld [vmem:[%s10 + $0x1c] sm:$0xf]
    %v3097 = vld [vmem:[%s10 + $0x20] sm:$0xf]
    %v3098 = vld [vmem:[%s10 + $0x24] sm:$0xf]
    %v3099 = vld [vmem:[%s10 + $0x28] sm:$0xf]
    %v3100 = vld [vmem:[%s10 + $0x2c] sm:$0xf]
    %v3101 = vld [vmem:[%s10 + $0x30] sm:$0xf]
    %v3102 = vld [vmem:[%s10 + $0x34] sm:$0xf]
    %v3103 = vld [vmem:[%s10 + $0x38] sm:$0xf]
    %v3104 = vld [vmem:[%s10 + $0x3c] sm:$0xf]
    %v3105 = vld [vmem:[%s10 + $0x40] sm:$0xf]
    %v3106 = vld [vmem:[%s10 + $0x44] sm:$0xf]
    %v3107 = vld [vmem:[%s10 + $0x48] sm:$0xf]
    %v3108 = vld [vmem:[%s10 + $0x4c] sm:$0xf]
    %v3109 = vld [vmem:[%s10 + $0x50] sm:$0xf]
    %v3110 = vld [vmem:[%s10 + $0x54] sm:$0xf]
    %v3111 = vld [vmem:[%s10 + $0x58] sm:$0xf]
    %v3112 = vld [vmem:[%s10 + $0x5c] sm:$0xf]
    %v3113 = vld [vmem:[%s10 + $0x60] sm:$0xf]
    %v3114 = vld [vmem:[%s10 + $0x64] sm:$0xf]
    %v3115 = vld [vmem:[%s10 + $0x68] sm:$0xf]
    %v3116 = vld [vmem:[%s10 + $0x6c] sm:$0xf]
    %v3117 = vld [vmem:[%s10 + $0x70] sm:$0xf]
    %v3118 = vld [vmem:[%s10 + $0x74] sm:$0xf]
    %v3119 = vld [vmem:[%s10 + $0x78] sm:$0xf]
    %v3120 = vld [vmem:[%s10 + $0x7c] sm:$0xf]
    %v3121 = vunpack.c.l.bf16 %v3089
    %v3122 = vunpack.c.l.bf16 %v3090
    %v3123 = vunpack.c.l.bf16 %v3091
    %v3124 = vunpack.c.l.bf16 %v3092
    %v3125 = vunpack.c.l.bf16 %v3093
    %v3126 = vunpack.c.l.bf16 %v3094
    %v3127 = vunpack.c.l.bf16 %v3095
    %v3128 = vunpack.c.l.bf16 %v3096
    %v3129 = vunpack.c.l.bf16 %v3097
    %v3130 = vunpack.c.l.bf16 %v3098
    %v3131 = vunpack.c.l.bf16 %v3099
    %v3132 = vunpack.c.l.bf16 %v3100
    %v3133 = vunpack.c.l.bf16 %v3101
    %v3134 = vunpack.c.l.bf16 %v3102
    %v3135 = vunpack.c.l.bf16 %v3103
    %v3136 = vunpack.c.l.bf16 %v3104
    %v3137 = vunpack.c.l.bf16 %v3105
    %v3138 = vunpack.c.l.bf16 %v3106
    %v3139 = vunpack.c.l.bf16 %v3107
    %v3140 = vunpack.c.l.bf16 %v3108
    %v3141 = vunpack.c.l.bf16 %v3109
    %v3142 = vunpack.c.l.bf16 %v3110
    %v3143 = vunpack.c.l.bf16 %v3111
    %v3144 = vunpack.c.l.bf16 %v3112
    %v3145 = vunpack.c.l.bf16 %v3113
    %v3146 = vunpack.c.l.bf16 %v3114
    %v3147 = vunpack.c.l.bf16 %v3115
    %v3148 = vunpack.c.l.bf16 %v3116
    %v3149 = vunpack.c.l.bf16 %v3117
    %v3150 = vunpack.c.l.bf16 %v3118
    %v3151 = vunpack.c.l.bf16 %v3119
    %v3152 = vunpack.c.l.bf16 %v3120
    %3153 = vmatprep.subr.mxu0 0.0
    %3154 = vmatpush1.msra.mxu0 %v3121
    %3155 = vmatprep.subr.mxu0 0.0
    %3156 = vmatpush1.msra.mxu0 %v3122
    %3157 = vmatprep.subr.mxu0 0.0
    %3158 = vmatpush1.msra.mxu0 %v3123
    %3159 = vmatprep.subr.mxu0 0.0
    %3160 = vmatpush1.msra.mxu0 %v3124
    %3161 = vmatprep.subr.mxu0 0.0
    %3162 = vmatpush1.msra.mxu0 %v3125
    %3163 = vmatprep.subr.mxu0 0.0
    %3164 = vmatpush1.msra.mxu0 %v3126
    %3165 = vmatprep.subr.mxu0 0.0
    %3166 = vmatpush1.msra.mxu0 %v3127
    %3167 = vmatprep.subr.mxu0 0.0
    %3168 = vmatpush1.msra.mxu0 %v3128
    %3169 = vmatprep.subr.mxu0 0.0
    %3170 = vmatpush1.msra.mxu0 %v3129
    %3171 = vmatprep.subr.mxu0 0.0
    %3172 = vmatpush1.msra.mxu0 %v3130
    %3173 = vmatprep.subr.mxu0 0.0
    %3174 = vmatpush1.msra.mxu0 %v3131
    %3175 = vmatprep.subr.mxu0 0.0
    %3176 = vmatpush1.msra.mxu0 %v3132
    %3177 = vmatprep.subr.mxu0 0.0
    %3178 = vmatpush1.msra.mxu0 %v3133
    %3179 = vmatprep.subr.mxu0 0.0
    %3180 = vmatpush1.msra.mxu0 %v3134
    %3181 = vmatprep.subr.mxu0 0.0
    %3182 = vmatpush1.msra.mxu0 %v3135
    %3183 = vmatprep.subr.mxu0 0.0
    %3184 = vmatpush1.msra.mxu0 %v3136
    %3185 = vmatprep.subr.mxu0 0.0
    %3186 = vmatpush1.msra.mxu0 %v3137
    %3187 = vmatprep.subr.mxu0 0.0
    %3188 = vmatpush1.msra.mxu0 %v3138
    %3189 = vmatprep.subr.mxu0 0.0
    %3190 = vmatpush1.msra.mxu0 %v3139
    %3191 = vmatprep.subr.mxu0 0.0
    %3192 = vmatpush1.msra.mxu0 %v3140
    %3193 = vmatprep.subr.mxu0 0.0
    %3194 = vmatpush1.msra.mxu0 %v3141
    %3195 = vmatprep.subr.mxu0 0.0
    %3196 = vmatpush1.msra.mxu0 %v3142
    %3197 = vmatprep.subr.mxu0 0.0
    %3198 = vmatpush1.msra.mxu0 %v3143
    %3199 = vmatprep.subr.mxu0 0.0
    %3200 = vmatpush1.msra.mxu0 %v3144
    %3201 = vmatprep.subr.mxu0 0.0
    %3202 = vmatpush1.msra.mxu0 %v3145
    %3203 = vmatprep.subr.mxu0 0.0
    %3204 = vmatpush1.msra.mxu0 %v3146
    %3205 = vmatprep.subr.mxu0 0.0
    %3206 = vmatpush1.msra.mxu0 %v3147
    %3207 = vmatprep.subr.mxu0 0.0
    %3208 = vmatpush1.msra.mxu0 %v3148
    %3209 = vmatprep.subr.mxu0 0.0
    %3210 = vmatpush1.msra.mxu0 %v3149
    %3211 = vmatprep.subr.mxu0 0.0
    %3212 = vmatpush1.msra.mxu0 %v3150
    %3213 = vmatprep.subr.mxu0 0.0
    %3214 = vmatpush1.msra.mxu0 %v3151
    %3215 = vmatprep.subr.mxu0 0.0
    %3216 = vmatpush1.msra.mxu0 %v3152
    %3217 = vmatprep.mubr.f32.mxu0 %v3088
    %3218 = vmatmul.mubr.f32.gmra.mrb[0].mxu0 %v3087
    %v3219 = vpop.f32.mrb[0].mxu0
    %v3220 = vadd.f32 0.0, %v3219
    %v3221 = vpop.f32.mrb[0].mxu0
    %3222 = vdwg.mxu0
    %v3223 = vmul.f32 %v3220, 0.03125
    %v3224 = vmul.f32 %v3223, %v3223
    %v3226 = vrot.slane %v3224, 7
    %v3228 = vsub.f32 %v3223, %v3226
    %v3229 = vmax.f32 %v3228, 0.0
    %v3230 = vld [vmem:[%s8] sm:$0x1]
    %v3231 = vadd.f32 %v3229, 1e-05
    %v3232 = vrsqrt.pop %v3231
    %v3235 = vunpack.c.l.s4 1966171168
    %v3236 = vunpack.c.0.s8 %v3235
    %v3237 = vlaneseq
    %v3238 = vshrl.u32 %v3237, 7
    %v3239 = vsub.s32 %v3236, %v3238
    %v3240 = vrot.slane %v3232, %v3239
    %v3241 = vcombine.high %v3240, %v3240
    %v3243 = vunpack.c.l.s4 1966171168
    %v3244 = vunpack.c.0.s8 %v3243
    %v3245 = vlaneseq
    %v3246 = vshrl.u32 %v3245, 7
    %v3247 = vsub.s32 %v3244, %v3246
    %v3248 = vrot.slane %v3241, %v3247
    %v3250 = vmul.f32 %v3230, %v3248
    %v3251 = vld [vmem:[%s9] sm:$0x1]
    %v3252 = vmul.f32 %v3223, %v3250
    %v3253 = vsub.f32 %v3251, %v3252
    %v3255 = vlaneseq
    %v3256 = vshrl.u32 %v3255, 7
    %v3257 = vsub.s32 0, %v3256
    %v3258 = vrot.slane %v3253, %v3257
    %v3260 = vsel %vm2070, %v3250, %v3258
    %v3261 = vld [vmem:[%s11] sm:$0xff]
    %v3262 = vld [vmem:[%s11 + $0x8] sm:$0xff]
    %v3263 = vunpack.c.l.bf16 %v3261
    %v3264 = vunpack.c.h.bf16 %v3261
    %v3265 = vunpack.c.l.bf16 %v3262
    %v3266 = vunpack.c.h.bf16 %v3262
    %vm3267 = vcmask 130048
    %v3269 = vsel %vm3267, %v3260, 0
    %3271 = vmatprep.subr.mxu0 %v3264
    %3272 = vmatpush1.msra.mxu0 %v3263
    %3273 = vmatprep.subr.mxu0 %v3266
    %3274 = vmatpush1.msra.mxu0 %v3265
    %3275 = vmatprep.subr.mxu0 0.0
    %3276 = vmatpush1.msra.mxu0 0.0
    %3277 = vmatprep.subr.mxu0 0.0
    %3278 = vmatpush1.msra.mxu0 0.0
    %3279 = vmatprep.subr.mxu0 0.0
    %3280 = vmatpush1.msra.mxu0 0.0
    %3281 = vmatprep.subr.mxu0 0.0
    %3282 = vmatpush1.msra.mxu0 0.0
    %3283 = vmatprep.subr.mxu0 0.0
    %3284 = vmatpush1.msra.mxu0 0.0
    %3285 = vmatprep.subr.mxu0 0.0
    %3286 = vmatpush1.msra.mxu0 0.0
    %3287 = vmatprep.subr.mxu0 0.0
    %3288 = vmatpush1.msra.mxu0 0.0
    %3289 = vmatprep.subr.mxu0 0.0
    %3290 = vmatpush1.msra.mxu0 0.0
    %3291 = vmatprep.subr.mxu0 0.0
    %3292 = vmatpush1.msra.mxu0 0.0
    %3293 = vmatprep.subr.mxu0 0.0
    %3294 = vmatpush1.msra.mxu0 0.0
    %3295 = vmatprep.subr.mxu0 0.0
    %3296 = vmatpush1.msra.mxu0 0.0
    %3297 = vmatprep.subr.mxu0 0.0
    %3298 = vmatpush1.msra.mxu0 0.0
    %3299 = vmatprep.subr.mxu0 0.0
    %3300 = vmatpush1.msra.mxu0 0.0
    %3301 = vmatprep.subr.mxu0 0.0
    %3302 = vmatpush1.msra.mxu0 0.0
    %3303 = vmatprep.subr.mxu0 0.0
    %3304 = vmatpush1.msra.mxu0 0.0
    %3305 = vmatprep.subr.mxu0 0.0
    %3306 = vmatpush1.msra.mxu0 0.0
    %3307 = vmatprep.subr.mxu0 0.0
    %3308 = vmatpush1.msra.mxu0 0.0
    %3309 = vmatprep.subr.mxu0 0.0
    %3310 = vmatpush1.msra.mxu0 0.0
    %3311 = vmatprep.subr.mxu0 0.0
    %3312 = vmatpush1.msra.mxu0 0.0
    %3313 = vmatprep.subr.mxu0 0.0
    %3314 = vmatpush1.msra.mxu0 0.0
    %3315 = vmatprep.subr.mxu0 0.0
    %3316 = vmatpush1.msra.mxu0 0.0
    %3317 = vmatprep.subr.mxu0 0.0
    %3318 = vmatpush1.msra.mxu0 0.0
    %3319 = vmatprep.subr.mxu0 0.0
    %3320 = vmatpush1.msra.mxu0 0.0
    %3321 = vmatprep.subr.mxu0 0.0
    %3322 = vmatpush1.msra.mxu0 0.0
    %3323 = vmatprep.subr.mxu0 0.0
    %3324 = vmatpush1.msra.mxu0 0.0
    %3325 = vmatprep.subr.mxu0 0.0
    %3326 = vmatpush1.msra.mxu0 0.0
    %3327 = vmatprep.subr.mxu0 0.0
    %3328 = vmatpush1.msra.mxu0 0.0
    %3329 = vmatprep.subr.mxu0 0.0
    %3330 = vmatpush1.msra.mxu0 0.0
    %3331 = vmatprep.subr.mxu0 0.0
    %3332 = vmatpush1.msra.mxu0 0.0
    %3333 = vmatprep.subr.mxu0 0.0
    %3334 = vmatpush1.msra.mxu0 0.0
    %3335 = vmatprep.mubr.f32.mxu0 0.0
    %3336 = vmatmul.mubr.f32.gmra.mrb[0].mxu0 %v3269
    %v3337 = vpop.f32.mrb[0].mxu0
    %v3338 = vadd.f32 0.0, %v3337
    %v3339 = vpop.f32.mrb[0].mxu0
    %v3340 = vadd.f32 0.0, %v3339
    %3341 = vdwg.mxu0
    %v3342 = vlaneseq
    %v3343 = vshrl.u32 %v3342, 7
    %v3344 = vsub.s32 0, %v3343
    %v3345 = vrot.slane %v3338, %v3344
    %v3346 = vlaneseq
    %v3347 = vshrl.u32 %v3346, 7
    %v3348 = vsub.s32 0, %v3347
    %v3349 = vrot.slane %v3340, %v3348
    %v3350 = vmul.f32 %v3055, %v3345
    %v3351 = vmul.f32 %v3056, %v3349
    %v3352 = vlaneseq
    %v3353 = vshrl.u32 %v3352, 7
    %v3354 = vsub.s32 1, %v3353
    %v3355 = vrot.slane %v3338, %v3354
    %v3356 = vlaneseq
    %v3357 = vshrl.u32 %v3356, 7
    %v3358 = vsub.s32 1, %v3357
    %v3359 = vrot.slane %v3340, %v3358
    %v3360 = vadd.f32 %v3350, %v3355
    %v3361 = vadd.f32 %v3351, %v3359
    %v3362 = vpack.c.bf16 %v3360, %v3360
    %v3363 = vpack.c.bf16 %v3361, %v3361
    %v3364 = vld [vmem:[%s12] sm:$0xf]
    %v3365 = vld [vmem:[%s12 + $0x4] sm:$0xf]
    %v3366 = vld [vmem:[%s12 + $0x8] sm:$0xf]
    %v3367 = vld [vmem:[%s12 + $0xc] sm:$0xf]
    %v3368 = vld [vmem:[%s12 + $0x10] sm:$0xf]
    %v3369 = vld [vmem:[%s12 + $0x14] sm:$0xf]
    %v3370 = vld [vmem:[%s12 + $0x18] sm:$0xf]
    %v3371 = vld [vmem:[%s12 + $0x1c] sm:$0xf]
    %v3372 = vld [vmem:[%s12 + $0x20] sm:$0xf]
    %v3373 = vld [vmem:[%s12 + $0x24] sm:$0xf]
    %v3374 = vld [vmem:[%s12 + $0x28] sm:$0xf]
    %v3375 = vld [vmem:[%s12 + $0x2c] sm:$0xf]
    %v3376 = vld [vmem:[%s12 + $0x30] sm:$0xf]
    %v3377 = vld [vmem:[%s12 + $0x34] sm:$0xf]
    %v3378 = vld [vmem:[%s12 + $0x38] sm:$0xf]
    %v3379 = vld [vmem:[%s12 + $0x3c] sm:$0xf]
    %v3380 = vld [vmem:[%s12 + $0x40] sm:$0xf]
    %v3381 = vld [vmem:[%s12 + $0x44] sm:$0xf]
    %v3382 = vld [vmem:[%s12 + $0x48] sm:$0xf]
    %v3383 = vld [vmem:[%s12 + $0x4c] sm:$0xf]
    %v3384 = vld [vmem:[%s12 + $0x50] sm:$0xf]
    %v3385 = vld [vmem:[%s12 + $0x54] sm:$0xf]
    %v3386 = vld [vmem:[%s12 + $0x58] sm:$0xf]
    %v3387 = vld [vmem:[%s12 + $0x5c] sm:$0xf]
    %v3388 = vld [vmem:[%s12 + $0x60] sm:$0xf]
    %v3389 = vld [vmem:[%s12 + $0x64] sm:$0xf]
    %v3390 = vld [vmem:[%s12 + $0x68] sm:$0xf]
    %v3391 = vld [vmem:[%s12 + $0x6c] sm:$0xf]
    %v3392 = vld [vmem:[%s12 + $0x70] sm:$0xf]
    %v3393 = vld [vmem:[%s12 + $0x74] sm:$0xf]
    %v3394 = vld [vmem:[%s12 + $0x78] sm:$0xf]
    %v3395 = vld [vmem:[%s12 + $0x7c] sm:$0xf]
    %v3428 = vunpack.c.l.b16 %v3364
    %v3429 = vunpack.c.l.b16 %v3365
    %v3430 = vunpack.c.l.b16 %v3366
    %v3431 = vunpack.c.l.b16 %v3367
    %v3432 = vunpack.c.l.b16 %v3368
    %v3433 = vunpack.c.l.b16 %v3369
    %v3434 = vunpack.c.l.b16 %v3370
    %v3435 = vunpack.c.l.b16 %v3371
    %v3436 = vunpack.c.l.b16 %v3372
    %v3437 = vunpack.c.l.b16 %v3373
    %v3438 = vunpack.c.l.b16 %v3374
    %v3439 = vunpack.c.l.b16 %v3375
    %v3440 = vunpack.c.l.b16 %v3376
    %v3441 = vunpack.c.l.b16 %v3377
    %v3442 = vunpack.c.l.b16 %v3378
    %v3443 = vunpack.c.l.b16 %v3379
    %v3444 = vunpack.c.l.b16 %v3380
    %v3445 = vunpack.c.l.b16 %v3381
    %v3446 = vunpack.c.l.b16 %v3382
    %v3447 = vunpack.c.l.b16 %v3383
    %v3448 = vunpack.c.l.b16 %v3384
    %v3449 = vunpack.c.l.b16 %v3385
    %v3450 = vunpack.c.l.b16 %v3386
    %v3451 = vunpack.c.l.b16 %v3387
    %v3452 = vunpack.c.l.b16 %v3388
    %v3453 = vunpack.c.l.b16 %v3389
    %v3454 = vunpack.c.l.b16 %v3390
    %v3455 = vunpack.c.l.b16 %v3391
    %v3456 = vunpack.c.l.b16 %v3392
    %v3457 = vunpack.c.l.b16 %v3393
    %v3458 = vunpack.c.l.b16 %v3394
    %v3459 = vunpack.c.l.b16 %v3395
    %v3460 = vpack.c.b16 %v3429, %v3428
    %v3461 = vpack.c.b16 %v3431, %v3430
    %v3462 = vpack.c.b16 %v3433, %v3432
    %v3463 = vpack.c.b16 %v3435, %v3434
    %v3464 = vpack.c.b16 %v3437, %v3436
    %v3465 = vpack.c.b16 %v3439, %v3438
    %v3466 = vpack.c.b16 %v3441, %v3440
    %v3467 = vpack.c.b16 %v3443, %v3442
    %v3468 = vpack.c.b16 %v3445, %v3444
    %v3469 = vpack.c.b16 %v3447, %v3446
    %v3470 = vpack.c.b16 %v3449, %v3448
    %v3471 = vpack.c.b16 %v3451, %v3450
    %v3472 = vpack.c.b16 %v3453, %v3452
    %v3473 = vpack.c.b16 %v3455, %v3454
    %v3474 = vpack.c.b16 %v3457, %v3456
    %v3475 = vpack.c.b16 %v3459, %v3458
    %3492 = vmatprep.subr.bf16.mxu0 0
    %3493 = vmatpush1.bf16.msra.mxu0 %v3460
    %3494 = vmatprep.subr.bf16.mxu0 0
    %3495 = vmatpush1.bf16.msra.mxu0 %v3461
    %3496 = vmatprep.subr.bf16.mxu0 0
    %3497 = vmatpush1.bf16.msra.mxu0 %v3462
    %3498 = vmatprep.subr.bf16.mxu0 0
    %3499 = vmatpush1.bf16.msra.mxu0 %v3463
    %3500 = vmatprep.subr.bf16.mxu0 0
    %3501 = vmatpush1.bf16.msra.mxu0 %v3464
    %3502 = vmatprep.subr.bf16.mxu0 0
    %3503 = vmatpush1.bf16.msra.mxu0 %v3465
    %3504 = vmatprep.subr.bf16.mxu0 0
    %3505 = vmatpush1.bf16.msra.mxu0 %v3466
    %3506 = vmatprep.subr.bf16.mxu0 0
    %3507 = vmatpush1.bf16.msra.mxu0 %v3467
    %3508 = vmatprep.subr.bf16.mxu0 0
    %3509 = vmatpush1.bf16.msra.mxu0 %v3468
    %3510 = vmatprep.subr.bf16.mxu0 0
    %3511 = vmatpush1.bf16.msra.mxu0 %v3469
    %3512 = vmatprep.subr.bf16.mxu0 0
    %3513 = vmatpush1.bf16.msra.mxu0 %v3470
    %3514 = vmatprep.subr.bf16.mxu0 0
    %3515 = vmatpush1.bf16.msra.mxu0 %v3471
    %3516 = vmatprep.subr.bf16.mxu0 0
    %3517 = vmatpush1.bf16.msra.mxu0 %v3472
    %3518 = vmatprep.subr.bf16.mxu0 0
    %3519 = vmatpush1.bf16.msra.mxu0 %v3473
    %3520 = vmatprep.subr.bf16.mxu0 0
    %3521 = vmatpush1.bf16.msra.mxu0 %v3474
    %3522 = vmatprep.subr.bf16.mxu0 0
    %3523 = vmatpush1.bf16.msra.mxu0 %v3475
    %3524 = vmatprep.mubr.bf16.mxu0 %v3363
    %3525 = vmatmul.mubr.bf16.gmra.mrb[0].mxu0 %v3362
    %v3526 = vpop.f32.mrb[0].mxu0
    %v3527 = vadd.f32 0.0, %v3526
    %v3528 = vpop.f32.mrb[0].mxu0
    %v3529 = vpop.f32.mrb[0].mxu0
    %v3530 = vpop.f32.mrb[0].mxu0
    %3531 = vdwg.mxu0
    %v3532 = vmax.f32 %v3527, 0.0
    %v3533 = vsel %vm2009, %v3532, 0.0
    %v3534 = vrot.slane %v3533, 4
    %v3535 = vadd.f32 %v3533, %v3534
    %v3536 = vrot.slane %v3535, 2
    %v3537 = vadd.f32 %v3535, %v3536
    %v3538 = vrot.slane %v3537, 1
    %v3539 = vadd.f32 %v3537, %v3538
    %v3540 = vmul.f32 %v3532, %v3532
    %v3541 = vsel %vm2009, %v3540, 0.0
    %v3542 = vrot.slane %v3541, 4
    %v3543 = vadd.f32 %v3541, %v3542
    %v3544 = vrot.slane %v3543, 2
    %v3545 = vadd.f32 %v3543, %v3544
    %v3546 = vrot.slane %v3545, 1
    %v3547 = vadd.f32 %v3545, %v3546
    %v3548 = vsel %vm2070, %v3539, %v3547
    %v3549 = vld [vmem:[%s15] sm:$0xf]
    %v3550 = vld [vmem:[%s15 + $0x4] sm:$0xf]
    %v3551 = vld [vmem:[%s15 + $0x8] sm:$0xf]
    %v3552 = vld [vmem:[%s15 + $0xc] sm:$0xf]
    %v3553 = vld [vmem:[%s15 + $0x10] sm:$0xf]
    %v3554 = vld [vmem:[%s15 + $0x14] sm:$0xf]
    %v3555 = vld [vmem:[%s15 + $0x18] sm:$0xf]
    %v3556 = vld [vmem:[%s15 + $0x1c] sm:$0xf]
    %v3557 = vld [vmem:[%s15 + $0x20] sm:$0xf]
    %v3558 = vld [vmem:[%s15 + $0x24] sm:$0xf]
    %v3559 = vld [vmem:[%s15 + $0x28] sm:$0xf]
    %v3560 = vld [vmem:[%s15 + $0x2c] sm:$0xf]
    %v3561 = vld [vmem:[%s15 + $0x30] sm:$0xf]
    %v3562 = vld [vmem:[%s15 + $0x34] sm:$0xf]
    %v3563 = vld [vmem:[%s15 + $0x38] sm:$0xf]
    %v3564 = vld [vmem:[%s15 + $0x3c] sm:$0xf]
    %v3565 = vunpack.c.l.bf16 %v3549
    %v3566 = vunpack.c.l.bf16 %v3550
    %v3567 = vunpack.c.l.bf16 %v3551
    %v3568 = vunpack.c.l.bf16 %v3552
    %v3569 = vunpack.c.l.bf16 %v3553
    %v3570 = vunpack.c.l.bf16 %v3554
    %v3571 = vunpack.c.l.bf16 %v3555
    %v3572 = vunpack.c.l.bf16 %v3556
    %v3573 = vunpack.c.l.bf16 %v3557
    %v3574 = vunpack.c.l.bf16 %v3558
    %v3575 = vunpack.c.l.bf16 %v3559
    %v3576 = vunpack.c.l.bf16 %v3560
    %v3577 = vunpack.c.l.bf16 %v3561
    %v3578 = vunpack.c.l.bf16 %v3562
    %v3579 = vunpack.c.l.bf16 %v3563
    %v3580 = vunpack.c.l.bf16 %v3564
    %3581 = vmatprep.subr.mxu0 0.0
    %3582 = vmatpush1.msra.mxu0 %v3565
    %3583 = vmatprep.subr.mxu0 0.0
    %3584 = vmatpush1.msra.mxu0 %v3566
    %3585 = vmatprep.subr.mxu0 0.0
    %3586 = vmatpush1.msra.mxu0 %v3567
    %3587 = vmatprep.subr.mxu0 0.0
    %3588 = vmatpush1.msra.mxu0 %v3568
    %3589 = vmatprep.subr.mxu0 0.0
    %3590 = vmatpush1.msra.mxu0 %v3569
    %3591 = vmatprep.subr.mxu0 0.0
    %3592 = vmatpush1.msra.mxu0 %v3570
    %3593 = vmatprep.subr.mxu0 0.0
    %3594 = vmatpush1.msra.mxu0 %v3571
    %3595 = vmatprep.subr.mxu0 0.0
    %3596 = vmatpush1.msra.mxu0 %v3572
    %3597 = vmatprep.subr.mxu0 0.0
    %3598 = vmatpush1.msra.mxu0 %v3573
    %3599 = vmatprep.subr.mxu0 0.0
    %3600 = vmatpush1.msra.mxu0 %v3574
    %3601 = vmatprep.subr.mxu0 0.0
    %3602 = vmatpush1.msra.mxu0 %v3575
    %3603 = vmatprep.subr.mxu0 0.0
    %3604 = vmatpush1.msra.mxu0 %v3576
    %3605 = vmatprep.subr.mxu0 0.0
    %3606 = vmatpush1.msra.mxu0 %v3577
    %3607 = vmatprep.subr.mxu0 0.0
    %3608 = vmatpush1.msra.mxu0 %v3578
    %3609 = vmatprep.subr.mxu0 0.0
    %3610 = vmatpush1.msra.mxu0 %v3579
    %3611 = vmatprep.subr.mxu0 0.0
    %3612 = vmatpush1.msra.mxu0 %v3580
    %3613 = vmatprep.subr.mxu0 0.0
    %3614 = vmatpush1.msra.mxu0 0.0
    %3615 = vmatprep.subr.mxu0 0.0
    %3616 = vmatpush1.msra.mxu0 0.0
    %3617 = vmatprep.subr.mxu0 0.0
    %3618 = vmatpush1.msra.mxu0 0.0
    %3619 = vmatprep.subr.mxu0 0.0
    %3620 = vmatpush1.msra.mxu0 0.0
    %3621 = vmatprep.subr.mxu0 0.0
    %3622 = vmatpush1.msra.mxu0 0.0
    %3623 = vmatprep.subr.mxu0 0.0
    %3624 = vmatpush1.msra.mxu0 0.0
    %3625 = vmatprep.subr.mxu0 0.0
    %3626 = vmatpush1.msra.mxu0 0.0
    %3627 = vmatprep.subr.mxu0 0.0
    %3628 = vmatpush1.msra.mxu0 0.0
    %3629 = vmatprep.subr.mxu0 0.0
    %3630 = vmatpush1.msra.mxu0 0.0
    %3631 = vmatprep.subr.mxu0 0.0
    %3632 = vmatpush1.msra.mxu0 0.0
    %3633 = vmatprep.subr.mxu0 0.0
    %3634 = vmatpush1.msra.mxu0 0.0
    %3635 = vmatprep.subr.mxu0 0.0
    %3636 = vmatpush1.msra.mxu0 0.0
    %3637 = vmatprep.subr.mxu0 0.0
    %3638 = vmatpush1.msra.mxu0 0.0
    %3639 = vmatprep.subr.mxu0 0.0
    %3640 = vmatpush1.msra.mxu0 0.0
    %3641 = vmatprep.subr.mxu0 0.0
    %3642 = vmatpush1.msra.mxu0 0.0
    %3643 = vmatprep.subr.mxu0 0.0
    %3644 = vmatpush1.msra.mxu0 0.0
    %3645 = vmatprep.mubr.f32.mxu0 0.0
    %3646 = vmatmul.mubr.f32.gmra.mrb[0].mxu0 %v3548
    %v3647 = vpop.f32.mrb[0].mxu0
    %v3648 = vadd.f32 0.0, %v3647
    %v3649 = vpop.f32.mrb[0].mxu0
    %3650 = vdwg.mxu0
    %v3651 = vmul.f32 %v3648, 0.125
    %v3652 = vmul.f32 %v3651, %v3651
    %v3654 = vrot.slane %v3652, 7
    %v3656 = vsub.f32 %v3651, %v3654
    %v3657 = vmax.f32 %v3656, 0.0
    %v3658 = vld [vmem:[%s13] sm:$0x1]
    %v3659 = vadd.f32 %v3657, 1e-05
    %v3660 = vrsqrt.pop %v3659
    %v3663 = vunpack.c.l.s4 1966171168
    %v3664 = vunpack.c.0.s8 %v3663
    %v3665 = vlaneseq
    %v3666 = vshrl.u32 %v3665, 7
    %v3667 = vsub.s32 %v3664, %v3666
    %v3668 = vrot.slane %v3660, %v3667
    %v3669 = vcombine.high %v3668, %v3668
    %v3671 = vunpack.c.l.s4 1966171168
    %v3672 = vunpack.c.0.s8 %v3671
    %v3673 = vlaneseq
    %v3674 = vshrl.u32 %v3673, 7
    %v3675 = vsub.s32 %v3672, %v3674
    %v3676 = vrot.slane %v3669, %v3675
    %v3678 = vmul.f32 %v3658, %v3676
    %v3679 = vld [vmem:[%s14] sm:$0x1]
    %v3680 = vmul.f32 %v3651, %v3678
    %v3681 = vsub.f32 %v3679, %v3680
    %v3683 = vlaneseq
    %v3684 = vshrl.u32 %v3683, 7
    %v3685 = vsub.s32 0, %v3684
    %v3686 = vrot.slane %v3681, %v3685
    %v3688 = vsel %vm2070, %v3678, %v3686
    %v3689 = vld [vmem:[%s16] sm:$0xf]
    %v3690 = vld [vmem:[%s16 + $0x4] sm:$0xf]
    %v3691 = vld [vmem:[%s16 + $0x8] sm:$0xf]
    %v3692 = vld [vmem:[%s16 + $0xc] sm:$0xf]
    %v3693 = vunpack.c.l.bf16 %v3689
    %v3694 = vunpack.c.l.bf16 %v3690
    %v3695 = vunpack.c.l.bf16 %v3691
    %v3696 = vunpack.c.l.bf16 %v3692
    %vm3697 = vcmask 261120
    %v3699 = vsel %vm3697, %v3688, 0
    %3701 = vmatprep.subr.mxu0 0.0
    %3702 = vmatpush1.msra.mxu0 %v3693
    %3703 = vmatprep.subr.mxu0 0.0
    %3704 = vmatpush1.msra.mxu0 %v3694
    %3705 = vmatprep.subr.mxu0 0.0
    %3706 = vmatpush1.msra.mxu0 %v3695
    %3707 = vmatprep.subr.mxu0 0.0
    %3708 = vmatpush1.msra.mxu0 %v3696
    %3709 = vmatprep.subr.mxu0 0.0
    %3710 = vmatpush1.msra.mxu0 0.0
    %3711 = vmatprep.subr.mxu0 0.0
    %3712 = vmatpush1.msra.mxu0 0.0
    %3713 = vmatprep.subr.mxu0 0.0
    %3714 = vmatpush1.msra.mxu0 0.0
    %3715 = vmatprep.subr.mxu0 0.0
    %3716 = vmatpush1.msra.mxu0 0.0
    %3717 = vmatprep.subr.mxu0 0.0
    %3718 = vmatpush1.msra.mxu0 0.0
    %3719 = vmatprep.subr.mxu0 0.0
    %3720 = vmatpush1.msra.mxu0 0.0
    %3721 = vmatprep.subr.mxu0 0.0
    %3722 = vmatpush1.msra.mxu0 0.0
    %3723 = vmatprep.subr.mxu0 0.0
    %3724 = vmatpush1.msra.mxu0 0.0
    %3725 = vmatprep.subr.mxu0 0.0
    %3726 = vmatpush1.msra.mxu0 0.0
    %3727 = vmatprep.subr.mxu0 0.0
    %3728 = vmatpush1.msra.mxu0 0.0
    %3729 = vmatprep.subr.mxu0 0.0
    %3730 = vmatpush1.msra.mxu0 0.0
    %3731 = vmatprep.subr.mxu0 0.0
    %3732 = vmatpush1.msra.mxu0 0.0
    %3733 = vmatprep.subr.mxu0 0.0
    %3734 = vmatpush1.msra.mxu0 0.0
    %3735 = vmatprep.subr.mxu0 0.0
    %3736 = vmatpush1.msra.mxu0 0.0
    %3737 = vmatprep.subr.mxu0 0.0
    %3738 = vmatpush1.msra.mxu0 0.0
    %3739 = vmatprep.subr.mxu0 0.0
    %3740 = vmatpush1.msra.mxu0 0.0
    %3741 = vmatprep.subr.mxu0 0.0
    %3742 = vmatpush1.msra.mxu0 0.0
    %3743 = vmatprep.subr.mxu0 0.0
    %3744 = vmatpush1.msra.mxu0 0.0
    %3745 = vmatprep.subr.mxu0 0.0
    %3746 = vmatpush1.msra.mxu0 0.0
    %3747 = vmatprep.subr.mxu0 0.0
    %3748 = vmatpush1.msra.mxu0 0.0
    %3749 = vmatprep.subr.mxu0 0.0
    %3750 = vmatpush1.msra.mxu0 0.0
    %3751 = vmatprep.subr.mxu0 0.0
    %3752 = vmatpush1.msra.mxu0 0.0
    %3753 = vmatprep.subr.mxu0 0.0
    %3754 = vmatpush1.msra.mxu0 0.0
    %3755 = vmatprep.subr.mxu0 0.0
    %3756 = vmatpush1.msra.mxu0 0.0
    %3757 = vmatprep.subr.mxu0 0.0
    %3758 = vmatpush1.msra.mxu0 0.0
    %3759 = vmatprep.subr.mxu0 0.0
    %3760 = vmatpush1.msra.mxu0 0.0
    %3761 = vmatprep.subr.mxu0 0.0
    %3762 = vmatpush1.msra.mxu0 0.0
    %3763 = vmatprep.subr.mxu0 0.0
    %3764 = vmatpush1.msra.mxu0 0.0
    %3765 = vmatprep.mubr.f32.mxu0 0.0
    %3766 = vmatmul.mubr.f32.gmra.mrb[0].mxu0 %v3699
    %v3767 = vpop.f32.mrb[0].mxu0
    %v3768 = vadd.f32 0.0, %v3767
    %v3769 = vpop.f32.mrb[0].mxu0
    %3770 = vdwg.mxu0
    %v3771 = vlaneseq
    %v3772 = vshrl.u32 %v3771, 7
    %v3773 = vsub.s32 0, %v3772
    %v3774 = vrot.slane %v3768, %v3773
    %v3775 = vmul.f32 %v3532, %v3774
    %v3776 = vlaneseq
    %v3777 = vshrl.u32 %v3776, 7
    %v3778 = vsub.s32 1, %v3777
    %v3779 = vrot.slane %v3768, %v3778
    %v3780 = vadd.f32 %v3775, %v3779
    %v3781 = vpack.c.bf16 %v3780, %v3780
    %v3782 = vld [vmem:[%s17] sm:$0xf]
    %v3783 = vld [vmem:[%s17 + $0x4] sm:$0xf]
    %v3784 = vld [vmem:[%s17 + $0x8] sm:$0xf]
    %v3785 = vld [vmem:[%s17 + $0xc] sm:$0xf]
    %v3786 = vld [vmem:[%s17 + $0x10] sm:$0xf]
    %v3787 = vld [vmem:[%s17 + $0x14] sm:$0xf]
    %v3788 = vld [vmem:[%s17 + $0x18] sm:$0xf]
    %v3789 = vld [vmem:[%s17 + $0x1c] sm:$0xf]
    %v3790 = vld [vmem:[%s17 + $0x20] sm:$0xf]
    %v3791 = vld [vmem:[%s17 + $0x24] sm:$0xf]
    %v3792 = vld [vmem:[%s17 + $0x28] sm:$0xf]
    %v3793 = vld [vmem:[%s17 + $0x2c] sm:$0xf]
    %v3794 = vld [vmem:[%s17 + $0x30] sm:$0xf]
    %v3795 = vld [vmem:[%s17 + $0x34] sm:$0xf]
    %v3796 = vld [vmem:[%s17 + $0x38] sm:$0xf]
    %v3797 = vld [vmem:[%s17 + $0x3c] sm:$0xf]
    %v3814 = vunpack.c.l.b16 %v3782
    %v3815 = vunpack.c.l.b16 %v3783
    %v3816 = vunpack.c.l.b16 %v3784
    %v3817 = vunpack.c.l.b16 %v3785
    %v3818 = vunpack.c.l.b16 %v3786
    %v3819 = vunpack.c.l.b16 %v3787
    %v3820 = vunpack.c.l.b16 %v3788
    %v3821 = vunpack.c.l.b16 %v3789
    %v3822 = vunpack.c.l.b16 %v3790
    %v3823 = vunpack.c.l.b16 %v3791
    %v3824 = vunpack.c.l.b16 %v3792
    %v3825 = vunpack.c.l.b16 %v3793
    %v3826 = vunpack.c.l.b16 %v3794
    %v3827 = vunpack.c.l.b16 %v3795
    %v3828 = vunpack.c.l.b16 %v3796
    %v3829 = vunpack.c.l.b16 %v3797
    %v3830 = vpack.c.b16 %v3815, %v3814
    %v3831 = vpack.c.b16 %v3817, %v3816
    %v3832 = vpack.c.b16 %v3819, %v3818
    %v3833 = vpack.c.b16 %v3821, %v3820
    %v3834 = vpack.c.b16 %v3823, %v3822
    %v3835 = vpack.c.b16 %v3825, %v3824
    %v3836 = vpack.c.b16 %v3827, %v3826
    %v3837 = vpack.c.b16 %v3829, %v3828
    %3846 = vmatprep.subr.bf16.mxu0 0
    %3847 = vmatpush1.bf16.msra.mxu0 %v3830
    %3848 = vmatprep.subr.bf16.mxu0 0
    %3849 = vmatpush1.bf16.msra.mxu0 %v3831
    %3850 = vmatprep.subr.bf16.mxu0 0
    %3851 = vmatpush1.bf16.msra.mxu0 %v3832
    %3852 = vmatprep.subr.bf16.mxu0 0
    %3853 = vmatpush1.bf16.msra.mxu0 %v3833
    %3854 = vmatprep.subr.bf16.mxu0 0
    %3855 = vmatpush1.bf16.msra.mxu0 %v3834
    %3856 = vmatprep.subr.bf16.mxu0 0
    %3857 = vmatpush1.bf16.msra.mxu0 %v3835
    %3858 = vmatprep.subr.bf16.mxu0 0
    %3859 = vmatpush1.bf16.msra.mxu0 %v3836
    %3860 = vmatprep.subr.bf16.mxu0 0
    %3861 = vmatpush1.bf16.msra.mxu0 %v3837
    %3862 = vmatprep.subr.bf16.mxu0 0
    %3863 = vmatpush1.bf16.msra.mxu0 0
    %3864 = vmatprep.subr.bf16.mxu0 0
    %3865 = vmatpush1.bf16.msra.mxu0 0
    %3866 = vmatprep.subr.bf16.mxu0 0
    %3867 = vmatpush1.bf16.msra.mxu0 0
    %3868 = vmatprep.subr.bf16.mxu0 0
    %3869 = vmatpush1.bf16.msra.mxu0 0
    %3870 = vmatprep.subr.bf16.mxu0 0
    %3871 = vmatpush1.bf16.msra.mxu0 0
    %3872 = vmatprep.subr.bf16.mxu0 0
    %3873 = vmatpush1.bf16.msra.mxu0 0
    %3874 = vmatprep.subr.bf16.mxu0 0
    %3875 = vmatpush1.bf16.msra.mxu0 0
    %3876 = vmatprep.subr.bf16.mxu0 0
    %3877 = vmatpush1.bf16.msra.mxu0 0
    %3878 = vmatprep.mubr.bf16.mxu0 0
    %3879 = vmatmul.mubr.bf16.gmra.mrb[0].mxu0 %v3781
    %v3880 = vpop.f32.mrb[0].mxu0
    %v3881 = vadd.f32 0.0, %v3880
    %v3882 = vpop.f32.mrb[0].mxu0
    %v3883 = vpop.f32.mrb[0].mxu0
    %v3884 = vpop.f32.mrb[0].mxu0
    %3885 = vdwg.mxu0
    %v3886 = vmax.f32 %v3881, 0.0
    %vm3887 = vcmask 517120
    %v3888 = vsel %vm3887, %v3886, 0.0
    %v3889 = vrot.slane %v3888, 4
    %v3890 = vadd.f32 %v3888, %v3889
    %v3891 = vrot.slane %v3890, 2
    %v3892 = vadd.f32 %v3890, %v3891
    %v3893 = vrot.slane %v3892, 1
    %v3894 = vadd.f32 %v3892, %v3893
    %v3895 = vmul.f32 %v3886, %v3886
    %v3896 = vsel %vm3887, %v3895, 0.0
    %v3897 = vrot.slane %v3896, 4
    %v3898 = vadd.f32 %v3896, %v3897
    %v3899 = vrot.slane %v3898, 2
    %v3900 = vadd.f32 %v3898, %v3899
    %v3901 = vrot.slane %v3900, 1
    %v3902 = vadd.f32 %v3900, %v3901
    %v3903 = vmul.f32 %v3894, 0.5
    %v3904 = vmul.f32 %v3902, 0.5
    %v3905 = vmul.f32 %v3903, %v3903
    %v3906 = vsub.f32 %v3904, %v3905
    %v3907 = vmax.f32 %v3906, 0.0
    %v3908 = vld [vmem:[%s18] sm:$0x1]
    %v3909 = vadd.f32 %v3907, 1e-05
    %v3910 = vrsqrt.pop %v3909
    %v3911 = vmul.f32 %v3908, %v3910
    %v3912 = vld [vmem:[%s19] sm:$0x1]
    %v3913 = vmul.f32 %v3903, %v3911
    %v3914 = vsub.f32 %v3912, %v3913
    %v3916 = vlaneseq
    %v3917 = vshrl.u32 %v3916, 7
    %v3918 = vsub.s32 0, %v3917
    %v3919 = vrot.slane %v3911, %v3918
    %v3921 = vmul.f32 %v3886, %v3919
    %v3923 = vlaneseq
    %v3924 = vshrl.u32 %v3923, 7
    %v3925 = vsub.s32 0, %v3924
    %v3926 = vrot.slane %v3914, %v3925
    %v3928 = vadd.f32 %v3921, %v3926
    %v3929 = vld [vmem:[%s20] sm:$0xff]
    %v3930 = vld [vmem:[%s20 + $0x8] sm:$0xff]
    %v3931 = vld [vmem:[%s20 + $0x10] sm:$0xff]
    %v3932 = vld [vmem:[%s20 + $0x18] sm:$0xff]
    %v3933 = vld [vmem:[%s20 + $0x20] sm:$0xff]
    %v3934 = vld [vmem:[%s20 + $0x28] sm:$0xff]
    %v3935 = vld [vmem:[%s20 + $0x30] sm:$0xff]
    %v3936 = vld [vmem:[%s20 + $0x38] sm:$0xff]
    %v3937 = vld [vmem:[%s21] sm:$0x1]
    %v3939 = vlaneseq
    %v3940 = vshrl.u32 %v3939, 7
    %v3941 = vsub.s32 0, %v3940
    %v3942 = vrot.slane %v3937, %v3941
    %vm3944 = vcmask 523264
    %v3946 = vsel %vm3944, %v3928, 0
    %3948 = vmatprep.subr.mxu0 0.0
    %3949 = vmatpush1.msra.mxu0 %v3929
    %3950 = vmatprep.subr.mxu0 0.0
    %3951 = vmatpush1.msra.mxu0 %v3930
    %3952 = vmatprep.subr.mxu0 0.0
    %3953 = vmatpush1.msra.mxu0 %v3931
    %3954 = vmatprep.subr.mxu0 0.0
    %3955 = vmatpush1.msra.mxu0 %v3932
    %3956 = vmatprep.subr.mxu0 0.0
    %3957 = vmatpush1.msra.mxu0 %v3933
    %3958 = vmatprep.subr.mxu0 0.0
    %3959 = vmatpush1.msra.mxu0 %v3934
    %3960 = vmatprep.subr.mxu0 0.0
    %3961 = vmatpush1.msra.mxu0 %v3935
    %3962 = vmatprep.subr.mxu0 0.0
    %3963 = vmatpush1.msra.mxu0 %v3936
    %3964 = vmatprep.subr.mxu0 0.0
    %3965 = vmatpush1.msra.mxu0 0.0
    %3966 = vmatprep.subr.mxu0 0.0
    %3967 = vmatpush1.msra.mxu0 0.0
    %3968 = vmatprep.subr.mxu0 0.0
    %3969 = vmatpush1.msra.mxu0 0.0
    %3970 = vmatprep.subr.mxu0 0.0
    %3971 = vmatpush1.msra.mxu0 0.0
    %3972 = vmatprep.subr.mxu0 0.0
    %3973 = vmatpush1.msra.mxu0 0.0
    %3974 = vmatprep.subr.mxu0 0.0
    %3975 = vmatpush1.msra.mxu0 0.0
    %3976 = vmatprep.subr.mxu0 0.0
    %3977 = vmatpush1.msra.mxu0 0.0
    %3978 = vmatprep.subr.mxu0 0.0
    %3979 = vmatpush1.msra.mxu0 0.0
    %3980 = vmatprep.subr.mxu0 0.0
    %3981 = vmatpush1.msra.mxu0 0.0
    %3982 = vmatprep.subr.mxu0 0.0
    %3983 = vmatpush1.msra.mxu0 0.0
    %3984 = vmatprep.subr.mxu0 0.0
    %3985 = vmatpush1.msra.mxu0 0.0
    %3986 = vmatprep.subr.mxu0 0.0
    %3987 = vmatpush1.msra.mxu0 0.0
    %3988 = vmatprep.subr.mxu0 0.0
    %3989 = vmatpush1.msra.mxu0 0.0
    %3990 = vmatprep.subr.mxu0 0.0
    %3991 = vmatpush1.msra.mxu0 0.0
    %3992 = vmatprep.subr.mxu0 0.0
    %3993 = vmatpush1.msra.mxu0 0.0
    %3994 = vmatprep.subr.mxu0 0.0
    %3995 = vmatpush1.msra.mxu0 0.0
    %3996 = vmatprep.subr.mxu0 0.0
    %3997 = vmatpush1.msra.mxu0 0.0
    %3998 = vmatprep.subr.mxu0 0.0
    %3999 = vmatpush1.msra.mxu0 0.0
    %4000 = vmatprep.subr.mxu0 0.0
    %4001 = vmatpush1.msra.mxu0 0.0
    %4002 = vmatprep.subr.mxu0 0.0
    %4003 = vmatpush1.msra.mxu0 0.0
    %4004 = vmatprep.subr.mxu0 0.0
    %4005 = vmatpush1.msra.mxu0 0.0
    %4006 = vmatprep.subr.mxu0 0.0
    %4007 = vmatpush1.msra.mxu0 0.0
    %4008 = vmatprep.subr.mxu0 0.0
    %4009 = vmatpush1.msra.mxu0 0.0
    %4010 = vmatprep.subr.mxu0 0.0
    %4011 = vmatpush1.msra.mxu0 0.0
    %4012 = vmatprep.mubr.f32.mxu0 0.0
    %4013 = vmatmul.mubr.f32.gmra.mrb[0].mxu0 %v3946
    %v4014 = vpop.f32.mrb[0].mxu0
    %v4015 = vadd.f32 %v3942, %v4014
    %v4016 = vpop.f32.mrb[0].mxu0
    %4017 = vdwg.mxu0
    %vm4018 = vcmask 33792
    %4019 = vst.msk [vmem:[#allocation5] sm:$0x3] %vm4018, %v4015
    // Predicated region
    $region94: #{classifier_forward.1} parent=1 // pred_check
      _
    $region95: #{classifier_forward.1} parent=1 // pred_check_branch
      %4021 = sbr.rel (0) target = $region97
    $region96: #{classifier_forward.1} parent=1 // pred_region
      %s4023 = ssub.s32 32, 32
      %4024 = vsyncadd [#allocation4], %s4023
      %s4026 = sshll.u32 [#allocation5], 4
      %s4027 = int_to_ptr.vmem [resolvable:$true] %s4026
      %4029 = dma.vmem_to_hbm [thread:$0]  %s4027, 32, %s22, [#allocation4]
    $region97: #{classifier_forward.1} parent=1 // pred_fallthru
      _
    // Predicated region
    $region98: #{classifier_forward.1} parent=1 // pred_check
      _
    $region99: #{classifier_forward.1} parent=1 // pred_check_branch
      %4031 = sbr.rel (0) target = $region101
    $region100: #{classifier_forward.1} parent=1 // pred_region
      %4032 = dma.done [#allocation4], 32
    $region101: #{classifier_forward.1} parent=1 // pred_fallthru
      _
    %4033 = vsyncpa [#allocation3], 1
    %4034 = vsyncpa [#allocation4], 1

</llo_original>
